<compile_context>
chip_gen: v5e
topology: v5e:2x2
jax: 0.10.0
libtpu: 0.0.40
codegen_flags: <defaults>
</compile_context>

<pallas_src>
import functools
import math

import jax
import jax.numpy as jnp
from jax.experimental import pallas as pl
from jax.experimental.pallas import tpu as pltpu


LN_EPS = 1e-5  # torch.nn.LayerNorm default

ENC_KEYS = (
    "wqkv", "bqkv", "wo", "bo", "ln1_g", "ln1_b",
    "ff_w1", "ff_b1", "ff_w2", "ff_b2", "ln2_g", "ln2_b",
)
DEC_KEYS = (
    "s_wqkv", "s_bqkv", "s_wo", "s_bo", "ln1_g", "ln1_b",
    "c_wq", "c_bq", "c_wkv", "c_bkv", "c_wo", "c_bo", "ln2_g", "ln2_b",
    "ff_w1", "ff_b1", "ff_w2", "ff_b2", "ln3_g", "ln3_b",
)
ENC_PARAMS_PER_LAYER = len(ENC_KEYS)   # 12
DEC_PARAMS_PER_LAYER = len(DEC_KEYS)   # 20


# ----------------------------- in-kernel helpers -----------------------------------


def _dot(x, w, b=None):
    # MXU matmul: bf16 inputs, f32 accumulation. `w` is already bf16; bias stays f32.
    y = jnp.dot(x.astype(jnp.bfloat16), w, preferred_element_type=jnp.float32)
    if b is not None:
        y = y + b
    return y


def _layernorm(h, g, b):
    mu = jnp.mean(h, axis=-1, keepdims=True)
    var = jnp.mean((h - mu) ** 2, axis=-1, keepdims=True)
    return (h - mu) * jax.lax.rsqrt(var + LN_EPS) * g + b


def _attention(q, k, v, *, n_heads, d_head):
    # q: (Tq, D), k/v: (Tk, D) f32.  q is already pre-scaled (scale folded into Wq at init).
    # Heads are split with static lane slices; per-head scores contract the head dim
    # directly (no explicit transpose of K).
    outs = []
    for h in range(n_heads):
        sl = slice(h * d_head, (h + 1) * d_head)
        qh = q[:, sl].astype(jnp.bfloat16)
        kh = k[:, sl].astype(jnp.bfloat16)
        vh = v[:, sl].astype(jnp.bfloat16)
        s = jax.lax.dot_general(
            qh, kh,
            dimension_numbers=(((1,), (1,)), ((), ())),
            preferred_element_type=jnp.float32,
        )
        s = s - jnp.max(s, axis=-1, keepdims=True)
        p = jnp.exp(s)
        p = p * pl.reciprocal(jnp.sum(p, axis=-1, keepdims=True), approx=True)
        outs.append(
            jnp.dot(p.astype(jnp.bfloat16), vh, preferred_element_type=jnp.float32)
        )
    return jnp.concatenate(outs, axis=-1)   # (Tq, D)


# ----------------------------- fused forward kernel --------------------------------


def _motion_prediction_kernel(*refs, d_model, n_heads, n_enc, n_dec):
    D = d_model
    d_head = d_model // n_heads

    out_ref = refs[-1]
    (inp_ref, query_ref, pe_src_ref, pe_tgt_ref,
     src_w_ref, src_b_ref, tgt_w_ref, tgt_b_ref) = refs[:8]
    rest = refs[8:-1]
    enc_refs = rest[: n_enc * ENC_PARAMS_PER_LAYER]
    dec_refs = rest[n_enc * ENC_PARAMS_PER_LAYER:
                    n_enc * ENC_PARAMS_PER_LAYER + n_dec * DEC_PARAMS_PER_LAYER]
    gen_w_ref, gen_b_ref = rest[-2:]

    # ---- embeddings + positional encodings (fused) ----
    x = _dot(inp_ref[0], src_w_ref[...], src_b_ref[...]) + pe_src_ref[0]
    y = _dot(query_ref[0], tgt_w_ref[...], tgt_b_ref[...]) + pe_tgt_ref[0]

    # ---- encoder ----
    for l in range(n_enc):
        (wqkv, bqkv, wo, bo, ln1_g, ln1_b,
         ff_w1, ff_b1, ff_w2, ff_b2, ln2_g, ln2_b) = \
            enc_refs[l * ENC_PARAMS_PER_LAYER:(l + 1) * ENC_PARAMS_PER_LAYER]

        qkv = _dot(x, wqkv[...], bqkv[...])                      # (T, 3D), Wq pre-scaled
        a = _attention(qkv[:, :D], qkv[:, D:2 * D], qkv[:, 2 * D:],
                       n_heads=n_heads, d_head=d_head)
        a = _dot(a, wo[...], bo[...])
        x = _layernorm(x + a, ln1_g[...], ln1_b[...])

        f = _dot(jnp.maximum(_dot(x, ff_w1[...], ff_b1[...]), 0.0),
                 ff_w2[...], ff_b2[...])
        x = _layernorm(x + f, ln2_g[...], ln2_b[...])
    memory = x

    # ---- decoder ----
    for l in range(n_dec):
        (s_wqkv, s_bqkv, s_wo, s_bo, ln1_g, ln1_b,
         c_wq, c_bq, c_wkv, c_bkv, c_wo, c_bo, ln2_g, ln2_b,
         ff_w1, ff_b1, ff_w2, ff_b2, ln3_g, ln3_b) = \
            dec_refs[l * DEC_PARAMS_PER_LAYER:(l + 1) * DEC_PARAMS_PER_LAYER]

        qkv = _dot(y, s_wqkv[...], s_bqkv[...])
        a = _attention(qkv[:, :D], qkv[:, D:2 * D], qkv[:, 2 * D:],
                       n_heads=n_heads, d_head=d_head)
        a = _dot(a, s_wo[...], s_bo[...])
        y = _layernorm(y + a, ln1_g[...], ln1_b[...])

        q = _dot(y, c_wq[...], c_bq[...])                        # Wq pre-scaled
        kv = _dot(memory, c_wkv[...], c_bkv[...])
        c = _attention(q, kv[:, :D], kv[:, D:],
                       n_heads=n_heads, d_head=d_head)
        c = _dot(c, c_wo[...], c_bo[...])
        y = _layernorm(y + c, ln2_g[...], ln2_b[...])

        f = _dot(jnp.maximum(_dot(y, ff_w1[...], ff_b1[...]), 0.0),
                 ff_w2[...], ff_b2[...])
        y = _layernorm(y + f, ln3_g[...], ln3_b[...])

    # ---- generator: lane-dense 128-wide padded output (wrapper slices to out_dim) ----
    out_ref[0] = _dot(y, gen_w_ref[...], gen_b_ref[...]).astype(out_ref.dtype)


# ----------------------------- wrapper ---------------------------------------------


def motion_prediction_forward(params, inp, query, time, future_time, mask=None):
    # TODO(synk): masked-attention path; only the mask=None reference call is implemented.
    assert mask is None

    d_model = params["d_model"]
    n_heads = params["n_heads"]
    out_dim = params["out_dim"]
    n_enc = len(params["enc_layers"])
    n_dec = len(params["dec_layers"])
    pe = params["pe_table"]

    B, T_src, _ = inp.shape
    T_tgt = query.shape[1]
    out_pad = params["gen_w"].shape[1]

    # Positional-encoding gather stays in the wrapper (tiny XLA gather).
    pe_src = pe[time]          # (B, T_src, D)
    pe_tgt = pe[future_time]   # (B, T_tgt, D)

    flat_inputs = [inp, query, pe_src, pe_tgt,
                   params["src_w"], params["src_b"],
                   params["tgt_w"], params["tgt_b"]]
    for lp in params["enc_layers"]:
        flat_inputs += [lp[k] for k in ENC_KEYS]
    for lp in params["dec_layers"]:
        flat_inputs += [lp[k] for k in DEC_KEYS]
    flat_inputs += [params["gen_w"], params["gen_b"]]

    batched_spec = lambda arr: pl.BlockSpec((1,) + arr.shape[1:], lambda b: (b, 0, 0))
    shared_spec = lambda arr: pl.BlockSpec(arr.shape, lambda b: (0, 0))

    in_specs = [batched_spec(a) for a in flat_inputs[:4]] + \
               [shared_spec(a) for a in flat_inputs[4:]]

    out = pl.pallas_call(
        functools.partial(
            _motion_prediction_kernel,
            d_model=d_model, n_heads=n_heads, n_enc=n_enc, n_dec=n_dec,
        ),
        out_shape=jax.ShapeDtypeStruct((B, T_tgt, out_pad), jnp.float32),
        grid=(B,),
        in_specs=in_specs,
        out_specs=pl.BlockSpec((1, T_tgt, out_pad), lambda b: (b, 0, 0)),
        compiler_params=pltpu.CompilerParams(dimension_semantics=("parallel",)),
    )(*flat_inputs)

    return out[:, :, :out_dim]


# ----------------------------- deterministic init ----------------------------------


def _sinusoidal_pe(max_len, d_model):
    pos = jnp.arange(max_len, dtype=jnp.float32)[:, None]
    div = jnp.exp(jnp.arange(0, d_model, 2, dtype=jnp.float32)
                  * (-math.log(10000.0) / d_model))
    pe = jnp.zeros((max_len, d_model), dtype=jnp.float32)
    pe = pe.at[:, 0::2].set(jnp.sin(pos * div))
    pe = pe.at[:, 1::2].set(jnp.cos(pos * div))
    return pe


def init_params(key, *, in_dim, d_model, d_ff, n_heads, out_dim,
                n_enc, n_dec, max_len, out_pad=128):
    d_head = d_model // n_heads
    q_scale = 1.0 / math.sqrt(d_head)

    def w(k, din, dout, scale=0.05):
        return scale * jax.random.normal(k, (din, dout), dtype=jnp.float32)

    def zb(dout):
        return jnp.zeros((1, dout), dtype=jnp.float32)

    def ln():
        return jnp.ones((1, d_model), jnp.float32), jnp.zeros((1, d_model), jnp.float32)

    def fused_qkv(k):
        # fold the 1/sqrt(d_head) attention scale into the Q columns (and Q bias).
        wqkv = w(k, d_model, 3 * d_model)
        wqkv = wqkv.at[:, :d_model].multiply(q_scale)
        bqkv = zb(3 * d_model)
        bqkv = bqkv.at[:, :d_model].multiply(q_scale)
        return wqkv.astype(jnp.bfloat16), bqkv

    keys = jax.random.split(key, 3 + n_enc + n_dec)
    params = {
        "d_model": d_model, "n_heads": n_heads, "out_dim": out_dim,
        "pe_table": _sinusoidal_pe(max_len, d_model),
    }
    params["src_w"] = w(keys[0], in_dim, d_model).astype(jnp.bfloat16)
    params["src_b"] = zb(d_model)
    params["tgt_w"] = w(keys[1], in_dim, d_model).astype(jnp.bfloat16)
    params["tgt_b"] = zb(d_model)

    # generator padded to 128 output lanes (lane-dense store; extra columns are zero)
    gw = jnp.zeros((d_model, out_pad), dtype=jnp.float32)
    gw = gw.at[:, :out_dim].set(w(keys[2], d_model, out_dim))
    params["gen_w"] = gw.astype(jnp.bfloat16)
    params["gen_b"] = zb(out_pad)

    params["enc_layers"] = []
    for i in range(n_enc):
        k0, k1, k2, k3 = jax.random.split(keys[3 + i], 4)
        lp = {}
        lp["wqkv"], lp["bqkv"] = fused_qkv(k0)
        lp["wo"] = w(k1, d_model, d_model).astype(jnp.bfloat16)
        lp["bo"] = zb(d_model)
        lp["ln1_g"], lp["ln1_b"] = ln()
        lp["ff_w1"] = w(k2, d_model, d_ff).astype(jnp.bfloat16)
        lp["ff_b1"] = zb(d_ff)
        lp["ff_w2"] = w(k3, d_ff, d_model).astype(jnp.bfloat16)
        lp["ff_b2"] = zb(d_model)
        lp["ln2_g"], lp["ln2_b"] = ln()
        params["enc_layers"].append(lp)

    params["dec_layers"] = []
    for i in range(n_dec):
        ks = jax.random.split(keys[3 + n_enc + i], 7)
        lp = {}
        lp["s_wqkv"], lp["s_bqkv"] = fused_qkv(ks[0])
        lp["s_wo"] = w(ks[1], d_model, d_model).astype(jnp.bfloat16)
        lp["s_bo"] = zb(d_model)
        lp["ln1_g"], lp["ln1_b"] = ln()
        lp["c_wq"] = (w(ks[2], d_model, d_model) * q_scale).astype(jnp.bfloat16)
        lp["c_bq"] = zb(d_model)
        lp["c_wkv"] = w(ks[3], d_model, 2 * d_model).astype(jnp.bfloat16)
        lp["c_bkv"] = zb(2 * d_model)
        lp["c_wo"] = w(ks[4], d_model, d_model).astype(jnp.bfloat16)
        lp["c_bo"] = zb(d_model)
        lp["ln2_g"], lp["ln2_b"] = ln()
        lp["ff_w1"] = w(ks[5], d_model, d_ff).astype(jnp.bfloat16)
        lp["ff_b1"] = zb(d_ff)
        lp["ff_w2"] = w(ks[6], d_ff, d_model).astype(jnp.bfloat16)
        lp["ff_b2"] = zb(d_model)
        lp["ln3_g"], lp["ln3_b"] = ln()
        params["dec_layers"].append(lp)

    return params


# ----------------------------- main -------------------------------------------------


if __name__ == "__main__":
    B, T_SRC, T_TGT = 2, 8, 8
    IN_DIM, D_MODEL, D_FF, N_HEADS, OUT_DIM = 2, 32, 64, 4, 2
    N_ENC, N_DEC, MAX_LEN = 1, 1, 64

    root = jax.random.PRNGKey(0)
    k_par, k_in, k_q = jax.random.split(root, 3)

    params = init_params(
        k_par, in_dim=IN_DIM, d_model=D_MODEL, d_ff=D_FF, n_heads=N_HEADS,
        out_dim=OUT_DIM, n_enc=N_ENC, n_dec=N_DEC, max_len=MAX_LEN,
    )

    inp = jax.random.normal(k_in, (B, T_SRC, IN_DIM), dtype=jnp.float32)     # past trajectory
    query = jax.random.normal(k_q, (B, T_TGT, IN_DIM), dtype=jnp.float32)    # decoder queries
    time = jnp.broadcast_to(jnp.arange(T_SRC, dtype=jnp.int32), (B, T_SRC))
    future_time = jnp.broadcast_to(
        jnp.arange(T_SRC, T_SRC + T_TGT, dtype=jnp.int32), (B, T_TGT)
    )

    fwd = jax.jit(functools.partial(motion_prediction_forward, params))
    predictions = fwd(inp, query, time, future_time)
    jax.block_until_ready(predictions)

    assert predictions.shape == (B, T_TGT, OUT_DIM)
    assert bool(jnp.all(jnp.isfinite(predictions)))
    print("KERNEL_OK")
</pallas_src>

<mosaic_0001>
module attributes {stable_mosaic.version = 11 : i64} {
  func.func @_motion_prediction_kernel(%arg0: i32, %arg1: memref<1x8x2xf32, #tpu.memory_space<vmem>>, %arg2: memref<1x8x2xf32, #tpu.memory_space<vmem>>, %arg3: memref<1x8x32xf32, #tpu.memory_space<vmem>>, %arg4: memref<1x8x32xf32, #tpu.memory_space<vmem>>, %arg5: memref<2x32xbf16, #tpu.memory_space<vmem>>, %arg6: memref<1x32xf32, #tpu.memory_space<vmem>>, %arg7: memref<2x32xbf16, #tpu.memory_space<vmem>>, %arg8: memref<1x32xf32, #tpu.memory_space<vmem>>, %arg9: memref<32x96xbf16, #tpu.memory_space<vmem>>, %arg10: memref<1x96xf32, #tpu.memory_space<vmem>>, %arg11: memref<32x32xbf16, #tpu.memory_space<vmem>>, %arg12: memref<1x32xf32, #tpu.memory_space<vmem>>, %arg13: memref<1x32xf32, #tpu.memory_space<vmem>>, %arg14: memref<1x32xf32, #tpu.memory_space<vmem>>, %arg15: memref<32x64xbf16, #tpu.memory_space<vmem>>, %arg16: memref<1x64xf32, #tpu.memory_space<vmem>>, %arg17: memref<64x32xbf16, #tpu.memory_space<vmem>>, %arg18: memref<1x32xf32, #tpu.memory_space<vmem>>, %arg19: memref<1x32xf32, #tpu.memory_space<vmem>>, %arg20: memref<1x32xf32, #tpu.memory_space<vmem>>, %arg21: memref<32x96xbf16, #tpu.memory_space<vmem>>, %arg22: memref<1x96xf32, #tpu.memory_space<vmem>>, %arg23: memref<32x32xbf16, #tpu.memory_space<vmem>>, %arg24: memref<1x32xf32, #tpu.memory_space<vmem>>, %arg25: memref<1x32xf32, #tpu.memory_space<vmem>>, %arg26: memref<1x32xf32, #tpu.memory_space<vmem>>, %arg27: memref<32x32xbf16, #tpu.memory_space<vmem>>, %arg28: memref<1x32xf32, #tpu.memory_space<vmem>>, %arg29: memref<32x64xbf16, #tpu.memory_space<vmem>>, %arg30: memref<1x64xf32, #tpu.memory_space<vmem>>, %arg31: memref<32x32xbf16, #tpu.memory_space<vmem>>, %arg32: memref<1x32xf32, #tpu.memory_space<vmem>>, %arg33: memref<1x32xf32, #tpu.memory_space<vmem>>, %arg34: memref<1x32xf32, #tpu.memory_space<vmem>>, %arg35: memref<32x64xbf16, #tpu.memory_space<vmem>>, %arg36: memref<1x64xf32, #tpu.memory_space<vmem>>, %arg37: memref<64x32xbf16, #tpu.memory_space<vmem>>, %arg38: memref<1x32xf32, #tpu.memory_space<vmem>>, %arg39: memref<1x32xf32, #tpu.memory_space<vmem>>, %arg40: memref<1x32xf32, #tpu.memory_space<vmem>>, %arg41: memref<32x128xbf16, #tpu.memory_space<vmem>>, %arg42: memref<1x128xf32, #tpu.memory_space<vmem>>, %arg43: memref<1x8x128xf32, #tpu.memory_space<vmem>>) attributes {dimension_semantics = [#tpu.dimension_semantics<parallel>], iteration_bounds = array<i64: 2>, scalar_prefetch = 0 : i64, scratch_operands = 0 : i64, tpu.core_type = #tpu.core_type<tc>, window_params = [{transform_indices = @transform_0, window_bounds = array<i64: 1, 8, 2>}, {transform_indices = @transform_1, window_bounds = array<i64: 1, 8, 2>}, {transform_indices = @transform_2, window_bounds = array<i64: 1, 8, 32>}, {transform_indices = @transform_3, window_bounds = array<i64: 1, 8, 32>}, {pipeline_mode = #tpu.pipeline_mode<synchronous>, transform_indices = @transform_4, window_bounds = array<i64: 2, 32>}, {pipeline_mode = #tpu.pipeline_mode<synchronous>, transform_indices = @transform_5, window_bounds = array<i64: 1, 32>}, {pipeline_mode = #tpu.pipeline_mode<synchronous>, transform_indices = @transform_6, window_bounds = array<i64: 2, 32>}, {pipeline_mode = #tpu.pipeline_mode<synchronous>, transform_indices = @transform_7, window_bounds = array<i64: 1, 32>}, {pipeline_mode = #tpu.pipeline_mode<synchronous>, transform_indices = @transform_8, window_bounds = array<i64: 32, 96>}, {pipeline_mode = #tpu.pipeline_mode<synchronous>, transform_indices = @transform_9, window_bounds = array<i64: 1, 96>}, {pipeline_mode = #tpu.pipeline_mode<synchronous>, transform_indices = @transform_10, window_bounds = array<i64: 32, 32>}, {pipeline_mode = #tpu.pipeline_mode<synchronous>, transform_indices = @transform_11, window_bounds = array<i64: 1, 32>}, {pipeline_mode = #tpu.pipeline_mode<synchronous>, transform_indices = @transform_12, window_bounds = array<i64: 1, 32>}, {pipeline_mode = #tpu.pipeline_mode<synchronous>, transform_indices = @transform_13, window_bounds = array<i64: 1, 32>}, {pipeline_mode = #tpu.pipeline_mode<synchronous>, transform_indices = @transform_14, window_bounds = array<i64: 32, 64>}, {pipeline_mode = #tpu.pipeline_mode<synchronous>, transform_indices = @transform_15, window_bounds = array<i64: 1, 64>}, {pipeline_mode = #tpu.pipeline_mode<synchronous>, transform_indices = @transform_16, window_bounds = array<i64: 64, 32>}, {pipeline_mode = #tpu.pipeline_mode<synchronous>, transform_indices = @transform_17, window_bounds = array<i64: 1, 32>}, {pipeline_mode = #tpu.pipeline_mode<synchronous>, transform_indices = @transform_18, window_bounds = array<i64: 1, 32>}, {pipeline_mode = #tpu.pipeline_mode<synchronous>, transform_indices = @transform_19, window_bounds = array<i64: 1, 32>}, {pipeline_mode = #tpu.pipeline_mode<synchronous>, transform_indices = @transform_20, window_bounds = array<i64: 32, 96>}, {pipeline_mode = #tpu.pipeline_mode<synchronous>, transform_indices = @transform_21, window_bounds = array<i64: 1, 96>}, {pipeline_mode = #tpu.pipeline_mode<synchronous>, transform_indices = @transform_22, window_bounds = array<i64: 32, 32>}, {pipeline_mode = #tpu.pipeline_mode<synchronous>, transform_indices = @transform_23, window_bounds = array<i64: 1, 32>}, {pipeline_mode = #tpu.pipeline_mode<synchronous>, transform_indices = @transform_24, window_bounds = array<i64: 1, 32>}, {pipeline_mode = #tpu.pipeline_mode<synchronous>, transform_indices = @transform_25, window_bounds = array<i64: 1, 32>}, {pipeline_mode = #tpu.pipeline_mode<synchronous>, transform_indices = @transform_26, window_bounds = array<i64: 32, 32>}, {pipeline_mode = #tpu.pipeline_mode<synchronous>, transform_indices = @transform_27, window_bounds = array<i64: 1, 32>}, {pipeline_mode = #tpu.pipeline_mode<synchronous>, transform_indices = @transform_28, window_bounds = array<i64: 32, 64>}, {pipeline_mode = #tpu.pipeline_mode<synchronous>, transform_indices = @transform_29, window_bounds = array<i64: 1, 64>}, {pipeline_mode = #tpu.pipeline_mode<synchronous>, transform_indices = @transform_30, window_bounds = array<i64: 32, 32>}, {pipeline_mode = #tpu.pipeline_mode<synchronous>, transform_indices = @transform_31, window_bounds = array<i64: 1, 32>}, {pipeline_mode = #tpu.pipeline_mode<synchronous>, transform_indices = @transform_32, window_bounds = array<i64: 1, 32>}, {pipeline_mode = #tpu.pipeline_mode<synchronous>, transform_indices = @transform_33, window_bounds = array<i64: 1, 32>}, {pipeline_mode = #tpu.pipeline_mode<synchronous>, transform_indices = @transform_34, window_bounds = array<i64: 32, 64>}, {pipeline_mode = #tpu.pipeline_mode<synchronous>, transform_indices = @transform_35, window_bounds = array<i64: 1, 64>}, {pipeline_mode = #tpu.pipeline_mode<synchronous>, transform_indices = @transform_36, window_bounds = array<i64: 64, 32>}, {pipeline_mode = #tpu.pipeline_mode<synchronous>, transform_indices = @transform_37, window_bounds = array<i64: 1, 32>}, {pipeline_mode = #tpu.pipeline_mode<synchronous>, transform_indices = @transform_38, window_bounds = array<i64: 1, 32>}, {pipeline_mode = #tpu.pipeline_mode<synchronous>, transform_indices = @transform_39, window_bounds = array<i64: 1, 32>}, {pipeline_mode = #tpu.pipeline_mode<synchronous>, transform_indices = @transform_40, window_bounds = array<i64: 32, 128>}, {pipeline_mode = #tpu.pipeline_mode<synchronous>, transform_indices = @transform_41, window_bounds = array<i64: 1, 128>}, {transform_indices = @transform_42, window_bounds = array<i64: 1, 8, 128>}]} {
    %c0 = arith.constant 0 : index
    %c0_0 = arith.constant 0 : index
    %c0_1 = arith.constant 0 : index
    %0 = vector.load %arg1[%c0, %c0_0, %c0_1] : memref<1x8x2xf32, #tpu.memory_space<vmem>>, vector<1x8x2xf32>
    %1 = vector.shape_cast %0 : vector<1x8x2xf32> to vector<8x2xf32>
    %c0_2 = arith.constant 0 : index
    %c0_3 = arith.constant 0 : index
    %2 = vector.load %arg5[%c0_2, %c0_3] : memref<2x32xbf16, #tpu.memory_space<vmem>>, vector<2x32xbf16>
    %c0_4 = arith.constant 0 : index
    %c0_5 = arith.constant 0 : index
    %3 = vector.load %arg6[%c0_4, %c0_5] : memref<1x32xf32, #tpu.memory_space<vmem>>, vector<1x32xf32>
    %4 = arith.truncf %1 : vector<8x2xf32> to vector<8x2xbf16>
    %cst = arith.constant dense<0.000000e+00> : vector<8x32xf32>
    %5 = tpu.matmul %4, %2, %cst {dimension_numbers = #tpu.dot_dimension_numbers<[1], [0], [0], [1], [0, 0, 1, 1], [], []>} : vector<8x2xbf16>, vector<2x32xbf16>, vector<8x32xf32> -> vector<8x32xf32>
    %6 = vector.broadcast %3 : vector<1x32xf32> to vector<8x32xf32>
    %7 = arith.addf %5, %6 : vector<8x32xf32>
    %c0_6 = arith.constant 0 : index
    %c0_7 = arith.constant 0 : index
    %c0_8 = arith.constant 0 : index
    %8 = vector.load %arg3[%c0_6, %c0_7, %c0_8] : memref<1x8x32xf32, #tpu.memory_space<vmem>>, vector<1x8x32xf32>
    %9 = vector.shape_cast %8 : vector<1x8x32xf32> to vector<8x32xf32>
    %10 = arith.addf %7, %9 : vector<8x32xf32>
    %c0_9 = arith.constant 0 : index
    %c0_10 = arith.constant 0 : index
    %c0_11 = arith.constant 0 : index
    %11 = vector.load %arg2[%c0_9, %c0_10, %c0_11] : memref<1x8x2xf32, #tpu.memory_space<vmem>>, vector<1x8x2xf32>
    %12 = vector.shape_cast %11 : vector<1x8x2xf32> to vector<8x2xf32>
    %c0_12 = arith.constant 0 : index
    %c0_13 = arith.constant 0 : index
    %13 = vector.load %arg7[%c0_12, %c0_13] : memref<2x32xbf16, #tpu.memory_space<vmem>>, vector<2x32xbf16>
    %c0_14 = arith.constant 0 : index
    %c0_15 = arith.constant 0 : index
    %14 = vector.load %arg8[%c0_14, %c0_15] : memref<1x32xf32, #tpu.memory_space<vmem>>, vector<1x32xf32>
    %15 = arith.truncf %12 : vector<8x2xf32> to vector<8x2xbf16>
    %cst_16 = arith.constant dense<0.000000e+00> : vector<8x32xf32>
    %16 = tpu.matmul %15, %13, %cst_16 {dimension_numbers = #tpu.dot_dimension_numbers<[1], [0], [0], [1], [0, 0, 1, 1], [], []>} : vector<8x2xbf16>, vector<2x32xbf16>, vector<8x32xf32> -> vector<8x32xf32>
    %17 = vector.broadcast %14 : vector<1x32xf32> to vector<8x32xf32>
    %18 = arith.addf %16, %17 : vector<8x32xf32>
    %c0_17 = arith.constant 0 : index
    %c0_18 = arith.constant 0 : index
    %c0_19 = arith.constant 0 : index
    %19 = vector.load %arg4[%c0_17, %c0_18, %c0_19] : memref<1x8x32xf32, #tpu.memory_space<vmem>>, vector<1x8x32xf32>
    %20 = vector.shape_cast %19 : vector<1x8x32xf32> to vector<8x32xf32>
    %21 = arith.addf %18, %20 : vector<8x32xf32>
    %c0_20 = arith.constant 0 : index
    %c0_21 = arith.constant 0 : index
    %22 = vector.load %arg9[%c0_20, %c0_21] : memref<32x96xbf16, #tpu.memory_space<vmem>>, vector<32x96xbf16>
    %c0_22 = arith.constant 0 : index
    %c0_23 = arith.constant 0 : index
    %23 = vector.load %arg10[%c0_22, %c0_23] : memref<1x96xf32, #tpu.memory_space<vmem>>, vector<1x96xf32>
    %24 = arith.truncf %10 : vector<8x32xf32> to vector<8x32xbf16>
    %cst_24 = arith.constant dense<0.000000e+00> : vector<8x96xf32>
    %25 = tpu.matmul %24, %22, %cst_24 {dimension_numbers = #tpu.dot_dimension_numbers<[1], [0], [0], [1], [0, 0, 1, 1], [], []>} : vector<8x32xbf16>, vector<32x96xbf16>, vector<8x96xf32> -> vector<8x96xf32>
    %26 = vector.broadcast %23 : vector<1x96xf32> to vector<8x96xf32>
    %27 = arith.addf %25, %26 : vector<8x96xf32>
    %28 = vector.extract_strided_slice %27 {offsets = [0, 0], sizes = [8, 32], strides = [1, 1]} : vector<8x96xf32> to vector<8x32xf32>
    %29 = vector.extract_strided_slice %27 {offsets = [0, 32], sizes = [8, 32], strides = [1, 1]} : vector<8x96xf32> to vector<8x32xf32>
    %30 = vector.extract_strided_slice %27 {offsets = [0, 64], sizes = [8, 32], strides = [1, 1]} : vector<8x96xf32> to vector<8x32xf32>
    %31 = vector.extract_strided_slice %28 {offsets = [0, 0], sizes = [8, 8], strides = [1, 1]} : vector<8x32xf32> to vector<8x8xf32>
    %32 = arith.truncf %31 : vector<8x8xf32> to vector<8x8xbf16>
    %33 = vector.extract_strided_slice %29 {offsets = [0, 0], sizes = [8, 8], strides = [1, 1]} : vector<8x32xf32> to vector<8x8xf32>
    %34 = arith.truncf %33 : vector<8x8xf32> to vector<8x8xbf16>
    %35 = vector.extract_strided_slice %30 {offsets = [0, 0], sizes = [8, 8], strides = [1, 1]} : vector<8x32xf32> to vector<8x8xf32>
    %36 = arith.truncf %35 : vector<8x8xf32> to vector<8x8xbf16>
    %cst_25 = arith.constant dense<0.000000e+00> : vector<8x8xf32>
    %37 = tpu.matmul %32, %34, %cst_25 {dimension_numbers = #tpu.dot_dimension_numbers<[1], [1], [0], [0], [0, 0, 1, 0], [], []>} : vector<8x8xbf16>, vector<8x8xbf16>, vector<8x8xf32> -> vector<8x8xf32>
    %cst_26 = arith.constant dense<0xFF800000> : vector<8xf32>
    %38 = vector.multi_reduction <maximumf>, %37, %cst_26 [1] : vector<8x8xf32> to vector<8xf32>
    %39 = vector.shape_cast %38 : vector<8xf32> to vector<8x1xf32>
    %40 = vector.broadcast %39 : vector<8x1xf32> to vector<8x8xf32>
    %41 = arith.subf %37, %40 : vector<8x8xf32>
    %42 = math.exp %41 : vector<8x8xf32>
    %cst_27 = arith.constant dense<0.000000e+00> : vector<8xf32>
    %43 = vector.multi_reduction <add>, %42, %cst_27 [1] : vector<8x8xf32> to vector<8xf32>
    %44 = vector.shape_cast %43 : vector<8xf32> to vector<8x1xf32>
    %45 = tpu.reciprocal %44 {approx = true} : vector<8x1xf32> -> vector<8x1xf32>
    %46 = vector.broadcast %45 : vector<8x1xf32> to vector<8x8xf32>
    %47 = arith.mulf %42, %46 : vector<8x8xf32>
    %48 = arith.truncf %47 : vector<8x8xf32> to vector<8x8xbf16>
    %cst_28 = arith.constant dense<0.000000e+00> : vector<8x8xf32>
    %49 = tpu.matmul %48, %36, %cst_28 {dimension_numbers = #tpu.dot_dimension_numbers<[1], [0], [0], [1], [0, 0, 1, 1], [], []>} : vector<8x8xbf16>, vector<8x8xbf16>, vector<8x8xf32> -> vector<8x8xf32>
    %50 = vector.extract_strided_slice %28 {offsets = [0, 8], sizes = [8, 8], strides = [1, 1]} : vector<8x32xf32> to vector<8x8xf32>
    %51 = arith.truncf %50 : vector<8x8xf32> to vector<8x8xbf16>
    %52 = vector.extract_strided_slice %29 {offsets = [0, 8], sizes = [8, 8], strides = [1, 1]} : vector<8x32xf32> to vector<8x8xf32>
    %53 = arith.truncf %52 : vector<8x8xf32> to vector<8x8xbf16>
    %54 = vector.extract_strided_slice %30 {offsets = [0, 8], sizes = [8, 8], strides = [1, 1]} : vector<8x32xf32> to vector<8x8xf32>
    %55 = arith.truncf %54 : vector<8x8xf32> to vector<8x8xbf16>
    %cst_29 = arith.constant dense<0.000000e+00> : vector<8x8xf32>
    %56 = tpu.matmul %51, %53, %cst_29 {dimension_numbers = #tpu.dot_dimension_numbers<[1], [1], [0], [0], [0, 0, 1, 0], [], []>} : vector<8x8xbf16>, vector<8x8xbf16>, vector<8x8xf32> -> vector<8x8xf32>
    %cst_30 = arith.constant dense<0xFF800000> : vector<8xf32>
    %57 = vector.multi_reduction <maximumf>, %56, %cst_30 [1] : vector<8x8xf32> to vector<8xf32>
    %58 = vector.shape_cast %57 : vector<8xf32> to vector<8x1xf32>
    %59 = vector.broadcast %58 : vector<8x1xf32> to vector<8x8xf32>
    %60 = arith.subf %56, %59 : vector<8x8xf32>
    %61 = math.exp %60 : vector<8x8xf32>
    %cst_31 = arith.constant dense<0.000000e+00> : vector<8xf32>
    %62 = vector.multi_reduction <add>, %61, %cst_31 [1] : vector<8x8xf32> to vector<8xf32>
    %63 = vector.shape_cast %62 : vector<8xf32> to vector<8x1xf32>
    %64 = tpu.reciprocal %63 {approx = true} : vector<8x1xf32> -> vector<8x1xf32>
    %65 = vector.broadcast %64 : vector<8x1xf32> to vector<8x8xf32>
    %66 = arith.mulf %61, %65 : vector<8x8xf32>
    %67 = arith.truncf %66 : vector<8x8xf32> to vector<8x8xbf16>
    %cst_32 = arith.constant dense<0.000000e+00> : vector<8x8xf32>
    %68 = tpu.matmul %67, %55, %cst_32 {dimension_numbers = #tpu.dot_dimension_numbers<[1], [0], [0], [1], [0, 0, 1, 1], [], []>} : vector<8x8xbf16>, vector<8x8xbf16>, vector<8x8xf32> -> vector<8x8xf32>
    %69 = vector.extract_strided_slice %28 {offsets = [0, 16], sizes = [8, 8], strides = [1, 1]} : vector<8x32xf32> to vector<8x8xf32>
    %70 = arith.truncf %69 : vector<8x8xf32> to vector<8x8xbf16>
    %71 = vector.extract_strided_slice %29 {offsets = [0, 16], sizes = [8, 8], strides = [1, 1]} : vector<8x32xf32> to vector<8x8xf32>
    %72 = arith.truncf %71 : vector<8x8xf32> to vector<8x8xbf16>
    %73 = vector.extract_strided_slice %30 {offsets = [0, 16], sizes = [8, 8], strides = [1, 1]} : vector<8x32xf32> to vector<8x8xf32>
    %74 = arith.truncf %73 : vector<8x8xf32> to vector<8x8xbf16>
    %cst_33 = arith.constant dense<0.000000e+00> : vector<8x8xf32>
    %75 = tpu.matmul %70, %72, %cst_33 {dimension_numbers = #tpu.dot_dimension_numbers<[1], [1], [0], [0], [0, 0, 1, 0], [], []>} : vector<8x8xbf16>, vector<8x8xbf16>, vector<8x8xf32> -> vector<8x8xf32>
    %cst_34 = arith.constant dense<0xFF800000> : vector<8xf32>
    %76 = vector.multi_reduction <maximumf>, %75, %cst_34 [1] : vector<8x8xf32> to vector<8xf32>
    %77 = vector.shape_cast %76 : vector<8xf32> to vector<8x1xf32>
    %78 = vector.broadcast %77 : vector<8x1xf32> to vector<8x8xf32>
    %79 = arith.subf %75, %78 : vector<8x8xf32>
    %80 = math.exp %79 : vector<8x8xf32>
    %cst_35 = arith.constant dense<0.000000e+00> : vector<8xf32>
    %81 = vector.multi_reduction <add>, %80, %cst_35 [1] : vector<8x8xf32> to vector<8xf32>
    %82 = vector.shape_cast %81 : vector<8xf32> to vector<8x1xf32>
    %83 = tpu.reciprocal %82 {approx = true} : vector<8x1xf32> -> vector<8x1xf32>
    %84 = vector.broadcast %83 : vector<8x1xf32> to vector<8x8xf32>
    %85 = arith.mulf %80, %84 : vector<8x8xf32>
    %86 = arith.truncf %85 : vector<8x8xf32> to vector<8x8xbf16>
    %cst_36 = arith.constant dense<0.000000e+00> : vector<8x8xf32>
    %87 = tpu.matmul %86, %74, %cst_36 {dimension_numbers = #tpu.dot_dimension_numbers<[1], [0], [0], [1], [0, 0, 1, 1], [], []>} : vector<8x8xbf16>, vector<8x8xbf16>, vector<8x8xf32> -> vector<8x8xf32>
    %88 = vector.extract_strided_slice %28 {offsets = [0, 24], sizes = [8, 8], strides = [1, 1]} : vector<8x32xf32> to vector<8x8xf32>
    %89 = arith.truncf %88 : vector<8x8xf32> to vector<8x8xbf16>
    %90 = vector.extract_strided_slice %29 {offsets = [0, 24], sizes = [8, 8], strides = [1, 1]} : vector<8x32xf32> to vector<8x8xf32>
    %91 = arith.truncf %90 : vector<8x8xf32> to vector<8x8xbf16>
    %92 = vector.extract_strided_slice %30 {offsets = [0, 24], sizes = [8, 8], strides = [1, 1]} : vector<8x32xf32> to vector<8x8xf32>
    %93 = arith.truncf %92 : vector<8x8xf32> to vector<8x8xbf16>
    %cst_37 = arith.constant dense<0.000000e+00> : vector<8x8xf32>
    %94 = tpu.matmul %89, %91, %cst_37 {dimension_numbers = #tpu.dot_dimension_numbers<[1], [1], [0], [0], [0, 0, 1, 0], [], []>} : vector<8x8xbf16>, vector<8x8xbf16>, vector<8x8xf32> -> vector<8x8xf32>
    %cst_38 = arith.constant dense<0xFF800000> : vector<8xf32>
    %95 = vector.multi_reduction <maximumf>, %94, %cst_38 [1] : vector<8x8xf32> to vector<8xf32>
    %96 = vector.shape_cast %95 : vector<8xf32> to vector<8x1xf32>
    %97 = vector.broadcast %96 : vector<8x1xf32> to vector<8x8xf32>
    %98 = arith.subf %94, %97 : vector<8x8xf32>
    %99 = math.exp %98 : vector<8x8xf32>
    %cst_39 = arith.constant dense<0.000000e+00> : vector<8xf32>
    %100 = vector.multi_reduction <add>, %99, %cst_39 [1] : vector<8x8xf32> to vector<8xf32>
    %101 = vector.shape_cast %100 : vector<8xf32> to vector<8x1xf32>
    %102 = tpu.reciprocal %101 {approx = true} : vector<8x1xf32> -> vector<8x1xf32>
    %103 = vector.broadcast %102 : vector<8x1xf32> to vector<8x8xf32>
    %104 = arith.mulf %99, %103 : vector<8x8xf32>
    %105 = arith.truncf %104 : vector<8x8xf32> to vector<8x8xbf16>
    %cst_40 = arith.constant dense<0.000000e+00> : vector<8x8xf32>
    %106 = tpu.matmul %105, %93, %cst_40 {dimension_numbers = #tpu.dot_dimension_numbers<[1], [0], [0], [1], [0, 0, 1, 1], [], []>} : vector<8x8xbf16>, vector<8x8xbf16>, vector<8x8xf32> -> vector<8x8xf32>
    %107 = tpu.concatenate %49, %68, %87, %106 in 1 : vector<8x8xf32>, vector<8x8xf32>, vector<8x8xf32>, vector<8x8xf32> -> vector<8x32xf32>
    %c0_41 = arith.constant 0 : index
    %c0_42 = arith.constant 0 : index
    %108 = vector.load %arg11[%c0_41, %c0_42] : memref<32x32xbf16, #tpu.memory_space<vmem>>, vector<32x32xbf16>
    %c0_43 = arith.constant 0 : index
    %c0_44 = arith.constant 0 : index
    %109 = vector.load %arg12[%c0_43, %c0_44] : memref<1x32xf32, #tpu.memory_space<vmem>>, vector<1x32xf32>
    %110 = arith.truncf %107 : vector<8x32xf32> to vector<8x32xbf16>
    %cst_45 = arith.constant dense<0.000000e+00> : vector<8x32xf32>
    %111 = tpu.matmul %110, %108, %cst_45 {dimension_numbers = #tpu.dot_dimension_numbers<[1], [0], [0], [1], [0, 0, 1, 1], [], []>} : vector<8x32xbf16>, vector<32x32xbf16>, vector<8x32xf32> -> vector<8x32xf32>
    %112 = vector.broadcast %109 : vector<1x32xf32> to vector<8x32xf32>
    %113 = arith.addf %111, %112 : vector<8x32xf32>
    %114 = arith.addf %10, %113 : vector<8x32xf32>
    %c0_46 = arith.constant 0 : index
    %c0_47 = arith.constant 0 : index
    %115 = vector.load %arg13[%c0_46, %c0_47] : memref<1x32xf32, #tpu.memory_space<vmem>>, vector<1x32xf32>
    %c0_48 = arith.constant 0 : index
    %c0_49 = arith.constant 0 : index
    %116 = vector.load %arg14[%c0_48, %c0_49] : memref<1x32xf32, #tpu.memory_space<vmem>>, vector<1x32xf32>
    %cst_50 = arith.constant dense<0.000000e+00> : vector<8xf32>
    %117 = vector.multi_reduction <add>, %114, %cst_50 [1] : vector<8x32xf32> to vector<8xf32>
    %118 = vector.shape_cast %117 : vector<8xf32> to vector<8x1xf32>
    %cst_51 = arith.constant 3.200000e+01 : f32
    %119 = vector.broadcast %cst_51 : f32 to vector<8x1xf32>
    %120 = arith.divf %118, %119 : vector<8x1xf32>
    %121 = vector.broadcast %120 : vector<8x1xf32> to vector<8x32xf32>
    %122 = arith.subf %114, %121 : vector<8x32xf32>
    %123 = arith.mulf %122, %122 : vector<8x32xf32>
    %cst_52 = arith.constant dense<0.000000e+00> : vector<8xf32>
    %124 = vector.multi_reduction <add>, %123, %cst_52 [1] : vector<8x32xf32> to vector<8xf32>
    %125 = vector.shape_cast %124 : vector<8xf32> to vector<8x1xf32>
    %cst_53 = arith.constant 3.200000e+01 : f32
    %126 = vector.broadcast %cst_53 : f32 to vector<8x1xf32>
    %127 = arith.divf %125, %126 : vector<8x1xf32>
    %128 = vector.broadcast %120 : vector<8x1xf32> to vector<8x32xf32>
    %129 = arith.subf %114, %128 : vector<8x32xf32>
    %cst_54 = arith.constant 9.99999974E-6 : f32
    %130 = vector.broadcast %cst_54 : f32 to vector<8x1xf32>
    %131 = arith.addf %127, %130 : vector<8x1xf32>
    %132 = math.rsqrt %131 : vector<8x1xf32>
    %133 = vector.broadcast %132 : vector<8x1xf32> to vector<8x32xf32>
    %134 = arith.mulf %129, %133 : vector<8x32xf32>
    %135 = vector.broadcast %115 : vector<1x32xf32> to vector<8x32xf32>
    %136 = arith.mulf %134, %135 : vector<8x32xf32>
    %137 = vector.broadcast %116 : vector<1x32xf32> to vector<8x32xf32>
    %138 = arith.addf %136, %137 : vector<8x32xf32>
    %c0_55 = arith.constant 0 : index
    %c0_56 = arith.constant 0 : index
    %139 = vector.load %arg15[%c0_55, %c0_56] : memref<32x64xbf16, #tpu.memory_space<vmem>>, vector<32x64xbf16>
    %c0_57 = arith.constant 0 : index
    %c0_58 = arith.constant 0 : index
    %140 = vector.load %arg16[%c0_57, %c0_58] : memref<1x64xf32, #tpu.memory_space<vmem>>, vector<1x64xf32>
    %141 = arith.truncf %138 : vector<8x32xf32> to vector<8x32xbf16>
    %cst_59 = arith.constant dense<0.000000e+00> : vector<8x64xf32>
    %142 = tpu.matmul %141, %139, %cst_59 {dimension_numbers = #tpu.dot_dimension_numbers<[1], [0], [0], [1], [0, 0, 1, 1], [], []>} : vector<8x32xbf16>, vector<32x64xbf16>, vector<8x64xf32> -> vector<8x64xf32>
    %143 = vector.broadcast %140 : vector<1x64xf32> to vector<8x64xf32>
    %144 = arith.addf %142, %143 : vector<8x64xf32>
    %cst_60 = arith.constant 0.000000e+00 : f32
    %145 = vector.broadcast %cst_60 : f32 to vector<8x64xf32>
    %146 = arith.maximumf %144, %145 : vector<8x64xf32>
    %c0_61 = arith.constant 0 : index
    %c0_62 = arith.constant 0 : index
    %147 = vector.load %arg17[%c0_61, %c0_62] : memref<64x32xbf16, #tpu.memory_space<vmem>>, vector<64x32xbf16>
    %c0_63 = arith.constant 0 : index
    %c0_64 = arith.constant 0 : index
    %148 = vector.load %arg18[%c0_63, %c0_64] : memref<1x32xf32, #tpu.memory_space<vmem>>, vector<1x32xf32>
    %149 = arith.truncf %146 : vector<8x64xf32> to vector<8x64xbf16>
    %cst_65 = arith.constant dense<0.000000e+00> : vector<8x32xf32>
    %150 = tpu.matmul %149, %147, %cst_65 {dimension_numbers = #tpu.dot_dimension_numbers<[1], [0], [0], [1], [0, 0, 1, 1], [], []>} : vector<8x64xbf16>, vector<64x32xbf16>, vector<8x32xf32> -> vector<8x32xf32>
    %151 = vector.broadcast %148 : vector<1x32xf32> to vector<8x32xf32>
    %152 = arith.addf %150, %151 : vector<8x32xf32>
    %153 = arith.addf %138, %152 : vector<8x32xf32>
    %c0_66 = arith.constant 0 : index
    %c0_67 = arith.constant 0 : index
    %154 = vector.load %arg19[%c0_66, %c0_67] : memref<1x32xf32, #tpu.memory_space<vmem>>, vector<1x32xf32>
    %c0_68 = arith.constant 0 : index
    %c0_69 = arith.constant 0 : index
    %155 = vector.load %arg20[%c0_68, %c0_69] : memref<1x32xf32, #tpu.memory_space<vmem>>, vector<1x32xf32>
    %cst_70 = arith.constant dense<0.000000e+00> : vector<8xf32>
    %156 = vector.multi_reduction <add>, %153, %cst_70 [1] : vector<8x32xf32> to vector<8xf32>
    %157 = vector.shape_cast %156 : vector<8xf32> to vector<8x1xf32>
    %cst_71 = arith.constant 3.200000e+01 : f32
    %158 = vector.broadcast %cst_71 : f32 to vector<8x1xf32>
    %159 = arith.divf %157, %158 : vector<8x1xf32>
    %160 = vector.broadcast %159 : vector<8x1xf32> to vector<8x32xf32>
    %161 = arith.subf %153, %160 : vector<8x32xf32>
    %162 = arith.mulf %161, %161 : vector<8x32xf32>
    %cst_72 = arith.constant dense<0.000000e+00> : vector<8xf32>
    %163 = vector.multi_reduction <add>, %162, %cst_72 [1] : vector<8x32xf32> to vector<8xf32>
    %164 = vector.shape_cast %163 : vector<8xf32> to vector<8x1xf32>
    %cst_73 = arith.constant 3.200000e+01 : f32
    %165 = vector.broadcast %cst_73 : f32 to vector<8x1xf32>
    %166 = arith.divf %164, %165 : vector<8x1xf32>
    %167 = vector.broadcast %159 : vector<8x1xf32> to vector<8x32xf32>
    %168 = arith.subf %153, %167 : vector<8x32xf32>
    %cst_74 = arith.constant 9.99999974E-6 : f32
    %169 = vector.broadcast %cst_74 : f32 to vector<8x1xf32>
    %170 = arith.addf %166, %169 : vector<8x1xf32>
    %171 = math.rsqrt %170 : vector<8x1xf32>
    %172 = vector.broadcast %171 : vector<8x1xf32> to vector<8x32xf32>
    %173 = arith.mulf %168, %172 : vector<8x32xf32>
    %174 = vector.broadcast %154 : vector<1x32xf32> to vector<8x32xf32>
    %175 = arith.mulf %173, %174 : vector<8x32xf32>
    %176 = vector.broadcast %155 : vector<1x32xf32> to vector<8x32xf32>
    %177 = arith.addf %175, %176 : vector<8x32xf32>
    %c0_75 = arith.constant 0 : index
    %c0_76 = arith.constant 0 : index
    %178 = vector.load %arg21[%c0_75, %c0_76] : memref<32x96xbf16, #tpu.memory_space<vmem>>, vector<32x96xbf16>
    %c0_77 = arith.constant 0 : index
    %c0_78 = arith.constant 0 : index
    %179 = vector.load %arg22[%c0_77, %c0_78] : memref<1x96xf32, #tpu.memory_space<vmem>>, vector<1x96xf32>
    %180 = arith.truncf %21 : vector<8x32xf32> to vector<8x32xbf16>
    %cst_79 = arith.constant dense<0.000000e+00> : vector<8x96xf32>
    %181 = tpu.matmul %180, %178, %cst_79 {dimension_numbers = #tpu.dot_dimension_numbers<[1], [0], [0], [1], [0, 0, 1, 1], [], []>} : vector<8x32xbf16>, vector<32x96xbf16>, vector<8x96xf32> -> vector<8x96xf32>
    %182 = vector.broadcast %179 : vector<1x96xf32> to vector<8x96xf32>
    %183 = arith.addf %181, %182 : vector<8x96xf32>
    %184 = vector.extract_strided_slice %183 {offsets = [0, 0], sizes = [8, 32], strides = [1, 1]} : vector<8x96xf32> to vector<8x32xf32>
    %185 = vector.extract_strided_slice %183 {offsets = [0, 32], sizes = [8, 32], strides = [1, 1]} : vector<8x96xf32> to vector<8x32xf32>
    %186 = vector.extract_strided_slice %183 {offsets = [0, 64], sizes = [8, 32], strides = [1, 1]} : vector<8x96xf32> to vector<8x32xf32>
    %187 = vector.extract_strided_slice %184 {offsets = [0, 0], sizes = [8, 8], strides = [1, 1]} : vector<8x32xf32> to vector<8x8xf32>
    %188 = arith.truncf %187 : vector<8x8xf32> to vector<8x8xbf16>
    %189 = vector.extract_strided_slice %185 {offsets = [0, 0], sizes = [8, 8], strides = [1, 1]} : vector<8x32xf32> to vector<8x8xf32>
    %190 = arith.truncf %189 : vector<8x8xf32> to vector<8x8xbf16>
    %191 = vector.extract_strided_slice %186 {offsets = [0, 0], sizes = [8, 8], strides = [1, 1]} : vector<8x32xf32> to vector<8x8xf32>
    %192 = arith.truncf %191 : vector<8x8xf32> to vector<8x8xbf16>
    %cst_80 = arith.constant dense<0.000000e+00> : vector<8x8xf32>
    %193 = tpu.matmul %188, %190, %cst_80 {dimension_numbers = #tpu.dot_dimension_numbers<[1], [1], [0], [0], [0, 0, 1, 0], [], []>} : vector<8x8xbf16>, vector<8x8xbf16>, vector<8x8xf32> -> vector<8x8xf32>
    %cst_81 = arith.constant dense<0xFF800000> : vector<8xf32>
    %194 = vector.multi_reduction <maximumf>, %193, %cst_81 [1] : vector<8x8xf32> to vector<8xf32>
    %195 = vector.shape_cast %194 : vector<8xf32> to vector<8x1xf32>
    %196 = vector.broadcast %195 : vector<8x1xf32> to vector<8x8xf32>
    %197 = arith.subf %193, %196 : vector<8x8xf32>
    %198 = math.exp %197 : vector<8x8xf32>
    %cst_82 = arith.constant dense<0.000000e+00> : vector<8xf32>
    %199 = vector.multi_reduction <add>, %198, %cst_82 [1] : vector<8x8xf32> to vector<8xf32>
    %200 = vector.shape_cast %199 : vector<8xf32> to vector<8x1xf32>
    %201 = tpu.reciprocal %200 {approx = true} : vector<8x1xf32> -> vector<8x1xf32>
    %202 = vector.broadcast %201 : vector<8x1xf32> to vector<8x8xf32>
    %203 = arith.mulf %198, %202 : vector<8x8xf32>
    %204 = arith.truncf %203 : vector<8x8xf32> to vector<8x8xbf16>
    %cst_83 = arith.constant dense<0.000000e+00> : vector<8x8xf32>
    %205 = tpu.matmul %204, %192, %cst_83 {dimension_numbers = #tpu.dot_dimension_numbers<[1], [0], [0], [1], [0, 0, 1, 1], [], []>} : vector<8x8xbf16>, vector<8x8xbf16>, vector<8x8xf32> -> vector<8x8xf32>
    %206 = vector.extract_strided_slice %184 {offsets = [0, 8], sizes = [8, 8], strides = [1, 1]} : vector<8x32xf32> to vector<8x8xf32>
    %207 = arith.truncf %206 : vector<8x8xf32> to vector<8x8xbf16>
    %208 = vector.extract_strided_slice %185 {offsets = [0, 8], sizes = [8, 8], strides = [1, 1]} : vector<8x32xf32> to vector<8x8xf32>
    %209 = arith.truncf %208 : vector<8x8xf32> to vector<8x8xbf16>
    %210 = vector.extract_strided_slice %186 {offsets = [0, 8], sizes = [8, 8], strides = [1, 1]} : vector<8x32xf32> to vector<8x8xf32>
    %211 = arith.truncf %210 : vector<8x8xf32> to vector<8x8xbf16>
    %cst_84 = arith.constant dense<0.000000e+00> : vector<8x8xf32>
    %212 = tpu.matmul %207, %209, %cst_84 {dimension_numbers = #tpu.dot_dimension_numbers<[1], [1], [0], [0], [0, 0, 1, 0], [], []>} : vector<8x8xbf16>, vector<8x8xbf16>, vector<8x8xf32> -> vector<8x8xf32>
    %cst_85 = arith.constant dense<0xFF800000> : vector<8xf32>
    %213 = vector.multi_reduction <maximumf>, %212, %cst_85 [1] : vector<8x8xf32> to vector<8xf32>
    %214 = vector.shape_cast %213 : vector<8xf32> to vector<8x1xf32>
    %215 = vector.broadcast %214 : vector<8x1xf32> to vector<8x8xf32>
    %216 = arith.subf %212, %215 : vector<8x8xf32>
    %217 = math.exp %216 : vector<8x8xf32>
    %cst_86 = arith.constant dense<0.000000e+00> : vector<8xf32>
    %218 = vector.multi_reduction <add>, %217, %cst_86 [1] : vector<8x8xf32> to vector<8xf32>
    %219 = vector.shape_cast %218 : vector<8xf32> to vector<8x1xf32>
    %220 = tpu.reciprocal %219 {approx = true} : vector<8x1xf32> -> vector<8x1xf32>
    %221 = vector.broadcast %220 : vector<8x1xf32> to vector<8x8xf32>
    %222 = arith.mulf %217, %221 : vector<8x8xf32>
    %223 = arith.truncf %222 : vector<8x8xf32> to vector<8x8xbf16>
    %cst_87 = arith.constant dense<0.000000e+00> : vector<8x8xf32>
    %224 = tpu.matmul %223, %211, %cst_87 {dimension_numbers = #tpu.dot_dimension_numbers<[1], [0], [0], [1], [0, 0, 1, 1], [], []>} : vector<8x8xbf16>, vector<8x8xbf16>, vector<8x8xf32> -> vector<8x8xf32>
    %225 = vector.extract_strided_slice %184 {offsets = [0, 16], sizes = [8, 8], strides = [1, 1]} : vector<8x32xf32> to vector<8x8xf32>
    %226 = arith.truncf %225 : vector<8x8xf32> to vector<8x8xbf16>
    %227 = vector.extract_strided_slice %185 {offsets = [0, 16], sizes = [8, 8], strides = [1, 1]} : vector<8x32xf32> to vector<8x8xf32>
    %228 = arith.truncf %227 : vector<8x8xf32> to vector<8x8xbf16>
    %229 = vector.extract_strided_slice %186 {offsets = [0, 16], sizes = [8, 8], strides = [1, 1]} : vector<8x32xf32> to vector<8x8xf32>
    %230 = arith.truncf %229 : vector<8x8xf32> to vector<8x8xbf16>
    %cst_88 = arith.constant dense<0.000000e+00> : vector<8x8xf32>
    %231 = tpu.matmul %226, %228, %cst_88 {dimension_numbers = #tpu.dot_dimension_numbers<[1], [1], [0], [0], [0, 0, 1, 0], [], []>} : vector<8x8xbf16>, vector<8x8xbf16>, vector<8x8xf32> -> vector<8x8xf32>
    %cst_89 = arith.constant dense<0xFF800000> : vector<8xf32>
    %232 = vector.multi_reduction <maximumf>, %231, %cst_89 [1] : vector<8x8xf32> to vector<8xf32>
    %233 = vector.shape_cast %232 : vector<8xf32> to vector<8x1xf32>
    %234 = vector.broadcast %233 : vector<8x1xf32> to vector<8x8xf32>
    %235 = arith.subf %231, %234 : vector<8x8xf32>
    %236 = math.exp %235 : vector<8x8xf32>
    %cst_90 = arith.constant dense<0.000000e+00> : vector<8xf32>
    %237 = vector.multi_reduction <add>, %236, %cst_90 [1] : vector<8x8xf32> to vector<8xf32>
    %238 = vector.shape_cast %237 : vector<8xf32> to vector<8x1xf32>
    %239 = tpu.reciprocal %238 {approx = true} : vector<8x1xf32> -> vector<8x1xf32>
    %240 = vector.broadcast %239 : vector<8x1xf32> to vector<8x8xf32>
    %241 = arith.mulf %236, %240 : vector<8x8xf32>
    %242 = arith.truncf %241 : vector<8x8xf32> to vector<8x8xbf16>
    %cst_91 = arith.constant dense<0.000000e+00> : vector<8x8xf32>
    %243 = tpu.matmul %242, %230, %cst_91 {dimension_numbers = #tpu.dot_dimension_numbers<[1], [0], [0], [1], [0, 0, 1, 1], [], []>} : vector<8x8xbf16>, vector<8x8xbf16>, vector<8x8xf32> -> vector<8x8xf32>
    %244 = vector.extract_strided_slice %184 {offsets = [0, 24], sizes = [8, 8], strides = [1, 1]} : vector<8x32xf32> to vector<8x8xf32>
    %245 = arith.truncf %244 : vector<8x8xf32> to vector<8x8xbf16>
    %246 = vector.extract_strided_slice %185 {offsets = [0, 24], sizes = [8, 8], strides = [1, 1]} : vector<8x32xf32> to vector<8x8xf32>
    %247 = arith.truncf %246 : vector<8x8xf32> to vector<8x8xbf16>
    %248 = vector.extract_strided_slice %186 {offsets = [0, 24], sizes = [8, 8], strides = [1, 1]} : vector<8x32xf32> to vector<8x8xf32>
    %249 = arith.truncf %248 : vector<8x8xf32> to vector<8x8xbf16>
    %cst_92 = arith.constant dense<0.000000e+00> : vector<8x8xf32>
    %250 = tpu.matmul %245, %247, %cst_92 {dimension_numbers = #tpu.dot_dimension_numbers<[1], [1], [0], [0], [0, 0, 1, 0], [], []>} : vector<8x8xbf16>, vector<8x8xbf16>, vector<8x8xf32> -> vector<8x8xf32>
    %cst_93 = arith.constant dense<0xFF800000> : vector<8xf32>
    %251 = vector.multi_reduction <maximumf>, %250, %cst_93 [1] : vector<8x8xf32> to vector<8xf32>
    %252 = vector.shape_cast %251 : vector<8xf32> to vector<8x1xf32>
    %253 = vector.broadcast %252 : vector<8x1xf32> to vector<8x8xf32>
    %254 = arith.subf %250, %253 : vector<8x8xf32>
    %255 = math.exp %254 : vector<8x8xf32>
    %cst_94 = arith.constant dense<0.000000e+00> : vector<8xf32>
    %256 = vector.multi_reduction <add>, %255, %cst_94 [1] : vector<8x8xf32> to vector<8xf32>
    %257 = vector.shape_cast %256 : vector<8xf32> to vector<8x1xf32>
    %258 = tpu.reciprocal %257 {approx = true} : vector<8x1xf32> -> vector<8x1xf32>
    %259 = vector.broadcast %258 : vector<8x1xf32> to vector<8x8xf32>
    %260 = arith.mulf %255, %259 : vector<8x8xf32>
    %261 = arith.truncf %260 : vector<8x8xf32> to vector<8x8xbf16>
    %cst_95 = arith.constant dense<0.000000e+00> : vector<8x8xf32>
    %262 = tpu.matmul %261, %249, %cst_95 {dimension_numbers = #tpu.dot_dimension_numbers<[1], [0], [0], [1], [0, 0, 1, 1], [], []>} : vector<8x8xbf16>, vector<8x8xbf16>, vector<8x8xf32> -> vector<8x8xf32>
    %263 = tpu.concatenate %205, %224, %243, %262 in 1 : vector<8x8xf32>, vector<8x8xf32>, vector<8x8xf32>, vector<8x8xf32> -> vector<8x32xf32>
    %c0_96 = arith.constant 0 : index
    %c0_97 = arith.constant 0 : index
    %264 = vector.load %arg23[%c0_96, %c0_97] : memref<32x32xbf16, #tpu.memory_space<vmem>>, vector<32x32xbf16>
    %c0_98 = arith.constant 0 : index
    %c0_99 = arith.constant 0 : index
    %265 = vector.load %arg24[%c0_98, %c0_99] : memref<1x32xf32, #tpu.memory_space<vmem>>, vector<1x32xf32>
    %266 = arith.truncf %263 : vector<8x32xf32> to vector<8x32xbf16>
    %cst_100 = arith.constant dense<0.000000e+00> : vector<8x32xf32>
    %267 = tpu.matmul %266, %264, %cst_100 {dimension_numbers = #tpu.dot_dimension_numbers<[1], [0], [0], [1], [0, 0, 1, 1], [], []>} : vector<8x32xbf16>, vector<32x32xbf16>, vector<8x32xf32> -> vector<8x32xf32>
    %268 = vector.broadcast %265 : vector<1x32xf32> to vector<8x32xf32>
    %269 = arith.addf %267, %268 : vector<8x32xf32>
    %270 = arith.addf %21, %269 : vector<8x32xf32>
    %c0_101 = arith.constant 0 : index
    %c0_102 = arith.constant 0 : index
    %271 = vector.load %arg25[%c0_101, %c0_102] : memref<1x32xf32, #tpu.memory_space<vmem>>, vector<1x32xf32>
    %c0_103 = arith.constant 0 : index
    %c0_104 = arith.constant 0 : index
    %272 = vector.load %arg26[%c0_103, %c0_104] : memref<1x32xf32, #tpu.memory_space<vmem>>, vector<1x32xf32>
    %cst_105 = arith.constant dense<0.000000e+00> : vector<8xf32>
    %273 = vector.multi_reduction <add>, %270, %cst_105 [1] : vector<8x32xf32> to vector<8xf32>
    %274 = vector.shape_cast %273 : vector<8xf32> to vector<8x1xf32>
    %cst_106 = arith.constant 3.200000e+01 : f32
    %275 = vector.broadcast %cst_106 : f32 to vector<8x1xf32>
    %276 = arith.divf %274, %275 : vector<8x1xf32>
    %277 = vector.broadcast %276 : vector<8x1xf32> to vector<8x32xf32>
    %278 = arith.subf %270, %277 : vector<8x32xf32>
    %279 = arith.mulf %278, %278 : vector<8x32xf32>
    %cst_107 = arith.constant dense<0.000000e+00> : vector<8xf32>
    %280 = vector.multi_reduction <add>, %279, %cst_107 [1] : vector<8x32xf32> to vector<8xf32>
    %281 = vector.shape_cast %280 : vector<8xf32> to vector<8x1xf32>
    %cst_108 = arith.constant 3.200000e+01 : f32
    %282 = vector.broadcast %cst_108 : f32 to vector<8x1xf32>
    %283 = arith.divf %281, %282 : vector<8x1xf32>
    %284 = vector.broadcast %276 : vector<8x1xf32> to vector<8x32xf32>
    %285 = arith.subf %270, %284 : vector<8x32xf32>
    %cst_109 = arith.constant 9.99999974E-6 : f32
    %286 = vector.broadcast %cst_109 : f32 to vector<8x1xf32>
    %287 = arith.addf %283, %286 : vector<8x1xf32>
    %288 = math.rsqrt %287 : vector<8x1xf32>
    %289 = vector.broadcast %288 : vector<8x1xf32> to vector<8x32xf32>
    %290 = arith.mulf %285, %289 : vector<8x32xf32>
    %291 = vector.broadcast %271 : vector<1x32xf32> to vector<8x32xf32>
    %292 = arith.mulf %290, %291 : vector<8x32xf32>
    %293 = vector.broadcast %272 : vector<1x32xf32> to vector<8x32xf32>
    %294 = arith.addf %292, %293 : vector<8x32xf32>
    %c0_110 = arith.constant 0 : index
    %c0_111 = arith.constant 0 : index
    %295 = vector.load %arg27[%c0_110, %c0_111] : memref<32x32xbf16, #tpu.memory_space<vmem>>, vector<32x32xbf16>
    %c0_112 = arith.constant 0 : index
    %c0_113 = arith.constant 0 : index
    %296 = vector.load %arg28[%c0_112, %c0_113] : memref<1x32xf32, #tpu.memory_space<vmem>>, vector<1x32xf32>
    %297 = arith.truncf %294 : vector<8x32xf32> to vector<8x32xbf16>
    %cst_114 = arith.constant dense<0.000000e+00> : vector<8x32xf32>
    %298 = tpu.matmul %297, %295, %cst_114 {dimension_numbers = #tpu.dot_dimension_numbers<[1], [0], [0], [1], [0, 0, 1, 1], [], []>} : vector<8x32xbf16>, vector<32x32xbf16>, vector<8x32xf32> -> vector<8x32xf32>
    %299 = vector.broadcast %296 : vector<1x32xf32> to vector<8x32xf32>
    %300 = arith.addf %298, %299 : vector<8x32xf32>
    %c0_115 = arith.constant 0 : index
    %c0_116 = arith.constant 0 : index
    %301 = vector.load %arg29[%c0_115, %c0_116] : memref<32x64xbf16, #tpu.memory_space<vmem>>, vector<32x64xbf16>
    %c0_117 = arith.constant 0 : index
    %c0_118 = arith.constant 0 : index
    %302 = vector.load %arg30[%c0_117, %c0_118] : memref<1x64xf32, #tpu.memory_space<vmem>>, vector<1x64xf32>
    %303 = arith.truncf %177 : vector<8x32xf32> to vector<8x32xbf16>
    %cst_119 = arith.constant dense<0.000000e+00> : vector<8x64xf32>
    %304 = tpu.matmul %303, %301, %cst_119 {dimension_numbers = #tpu.dot_dimension_numbers<[1], [0], [0], [1], [0, 0, 1, 1], [], []>} : vector<8x32xbf16>, vector<32x64xbf16>, vector<8x64xf32> -> vector<8x64xf32>
    %305 = vector.broadcast %302 : vector<1x64xf32> to vector<8x64xf32>
    %306 = arith.addf %304, %305 : vector<8x64xf32>
    %307 = vector.extract_strided_slice %306 {offsets = [0, 0], sizes = [8, 32], strides = [1, 1]} : vector<8x64xf32> to vector<8x32xf32>
    %308 = vector.extract_strided_slice %306 {offsets = [0, 32], sizes = [8, 32], strides = [1, 1]} : vector<8x64xf32> to vector<8x32xf32>
    %309 = vector.extract_strided_slice %300 {offsets = [0, 0], sizes = [8, 8], strides = [1, 1]} : vector<8x32xf32> to vector<8x8xf32>
    %310 = arith.truncf %309 : vector<8x8xf32> to vector<8x8xbf16>
    %311 = vector.extract_strided_slice %307 {offsets = [0, 0], sizes = [8, 8], strides = [1, 1]} : vector<8x32xf32> to vector<8x8xf32>
    %312 = arith.truncf %311 : vector<8x8xf32> to vector<8x8xbf16>
    %313 = vector.extract_strided_slice %308 {offsets = [0, 0], sizes = [8, 8], strides = [1, 1]} : vector<8x32xf32> to vector<8x8xf32>
    %314 = arith.truncf %313 : vector<8x8xf32> to vector<8x8xbf16>
    %cst_120 = arith.constant dense<0.000000e+00> : vector<8x8xf32>
    %315 = tpu.matmul %310, %312, %cst_120 {dimension_numbers = #tpu.dot_dimension_numbers<[1], [1], [0], [0], [0, 0, 1, 0], [], []>} : vector<8x8xbf16>, vector<8x8xbf16>, vector<8x8xf32> -> vector<8x8xf32>
    %cst_121 = arith.constant dense<0xFF800000> : vector<8xf32>
    %316 = vector.multi_reduction <maximumf>, %315, %cst_121 [1] : vector<8x8xf32> to vector<8xf32>
    %317 = vector.shape_cast %316 : vector<8xf32> to vector<8x1xf32>
    %318 = vector.broadcast %317 : vector<8x1xf32> to vector<8x8xf32>
    %319 = arith.subf %315, %318 : vector<8x8xf32>
    %320 = math.exp %319 : vector<8x8xf32>
    %cst_122 = arith.constant dense<0.000000e+00> : vector<8xf32>
    %321 = vector.multi_reduction <add>, %320, %cst_122 [1] : vector<8x8xf32> to vector<8xf32>
    %322 = vector.shape_cast %321 : vector<8xf32> to vector<8x1xf32>
    %323 = tpu.reciprocal %322 {approx = true} : vector<8x1xf32> -> vector<8x1xf32>
    %324 = vector.broadcast %323 : vector<8x1xf32> to vector<8x8xf32>
    %325 = arith.mulf %320, %324 : vector<8x8xf32>
    %326 = arith.truncf %325 : vector<8x8xf32> to vector<8x8xbf16>
    %cst_123 = arith.constant dense<0.000000e+00> : vector<8x8xf32>
    %327 = tpu.matmul %326, %314, %cst_123 {dimension_numbers = #tpu.dot_dimension_numbers<[1], [0], [0], [1], [0, 0, 1, 1], [], []>} : vector<8x8xbf16>, vector<8x8xbf16>, vector<8x8xf32> -> vector<8x8xf32>
    %328 = vector.extract_strided_slice %300 {offsets = [0, 8], sizes = [8, 8], strides = [1, 1]} : vector<8x32xf32> to vector<8x8xf32>
    %329 = arith.truncf %328 : vector<8x8xf32> to vector<8x8xbf16>
    %330 = vector.extract_strided_slice %307 {offsets = [0, 8], sizes = [8, 8], strides = [1, 1]} : vector<8x32xf32> to vector<8x8xf32>
    %331 = arith.truncf %330 : vector<8x8xf32> to vector<8x8xbf16>
    %332 = vector.extract_strided_slice %308 {offsets = [0, 8], sizes = [8, 8], strides = [1, 1]} : vector<8x32xf32> to vector<8x8xf32>
    %333 = arith.truncf %332 : vector<8x8xf32> to vector<8x8xbf16>
    %cst_124 = arith.constant dense<0.000000e+00> : vector<8x8xf32>
    %334 = tpu.matmul %329, %331, %cst_124 {dimension_numbers = #tpu.dot_dimension_numbers<[1], [1], [0], [0], [0, 0, 1, 0], [], []>} : vector<8x8xbf16>, vector<8x8xbf16>, vector<8x8xf32> -> vector<8x8xf32>
    %cst_125 = arith.constant dense<0xFF800000> : vector<8xf32>
    %335 = vector.multi_reduction <maximumf>, %334, %cst_125 [1] : vector<8x8xf32> to vector<8xf32>
    %336 = vector.shape_cast %335 : vector<8xf32> to vector<8x1xf32>
    %337 = vector.broadcast %336 : vector<8x1xf32> to vector<8x8xf32>
    %338 = arith.subf %334, %337 : vector<8x8xf32>
    %339 = math.exp %338 : vector<8x8xf32>
    %cst_126 = arith.constant dense<0.000000e+00> : vector<8xf32>
    %340 = vector.multi_reduction <add>, %339, %cst_126 [1] : vector<8x8xf32> to vector<8xf32>
    %341 = vector.shape_cast %340 : vector<8xf32> to vector<8x1xf32>
    %342 = tpu.reciprocal %341 {approx = true} : vector<8x1xf32> -> vector<8x1xf32>
    %343 = vector.broadcast %342 : vector<8x1xf32> to vector<8x8xf32>
    %344 = arith.mulf %339, %343 : vector<8x8xf32>
    %345 = arith.truncf %344 : vector<8x8xf32> to vector<8x8xbf16>
    %cst_127 = arith.constant dense<0.000000e+00> : vector<8x8xf32>
    %346 = tpu.matmul %345, %333, %cst_127 {dimension_numbers = #tpu.dot_dimension_numbers<[1], [0], [0], [1], [0, 0, 1, 1], [], []>} : vector<8x8xbf16>, vector<8x8xbf16>, vector<8x8xf32> -> vector<8x8xf32>
    %347 = vector.extract_strided_slice %300 {offsets = [0, 16], sizes = [8, 8], strides = [1, 1]} : vector<8x32xf32> to vector<8x8xf32>
    %348 = arith.truncf %347 : vector<8x8xf32> to vector<8x8xbf16>
    %349 = vector.extract_strided_slice %307 {offsets = [0, 16], sizes = [8, 8], strides = [1, 1]} : vector<8x32xf32> to vector<8x8xf32>
    %350 = arith.truncf %349 : vector<8x8xf32> to vector<8x8xbf16>
    %351 = vector.extract_strided_slice %308 {offsets = [0, 16], sizes = [8, 8], strides = [1, 1]} : vector<8x32xf32> to vector<8x8xf32>
    %352 = arith.truncf %351 : vector<8x8xf32> to vector<8x8xbf16>
    %cst_128 = arith.constant dense<0.000000e+00> : vector<8x8xf32>
    %353 = tpu.matmul %348, %350, %cst_128 {dimension_numbers = #tpu.dot_dimension_numbers<[1], [1], [0], [0], [0, 0, 1, 0], [], []>} : vector<8x8xbf16>, vector<8x8xbf16>, vector<8x8xf32> -> vector<8x8xf32>
    %cst_129 = arith.constant dense<0xFF800000> : vector<8xf32>
    %354 = vector.multi_reduction <maximumf>, %353, %cst_129 [1] : vector<8x8xf32> to vector<8xf32>
    %355 = vector.shape_cast %354 : vector<8xf32> to vector<8x1xf32>
    %356 = vector.broadcast %355 : vector<8x1xf32> to vector<8x8xf32>
    %357 = arith.subf %353, %356 : vector<8x8xf32>
    %358 = math.exp %357 : vector<8x8xf32>
    %cst_130 = arith.constant dense<0.000000e+00> : vector<8xf32>
    %359 = vector.multi_reduction <add>, %358, %cst_130 [1] : vector<8x8xf32> to vector<8xf32>
    %360 = vector.shape_cast %359 : vector<8xf32> to vector<8x1xf32>
    %361 = tpu.reciprocal %360 {approx = true} : vector<8x1xf32> -> vector<8x1xf32>
    %362 = vector.broadcast %361 : vector<8x1xf32> to vector<8x8xf32>
    %363 = arith.mulf %358, %362 : vector<8x8xf32>
    %364 = arith.truncf %363 : vector<8x8xf32> to vector<8x8xbf16>
    %cst_131 = arith.constant dense<0.000000e+00> : vector<8x8xf32>
    %365 = tpu.matmul %364, %352, %cst_131 {dimension_numbers = #tpu.dot_dimension_numbers<[1], [0], [0], [1], [0, 0, 1, 1], [], []>} : vector<8x8xbf16>, vector<8x8xbf16>, vector<8x8xf32> -> vector<8x8xf32>
    %366 = vector.extract_strided_slice %300 {offsets = [0, 24], sizes = [8, 8], strides = [1, 1]} : vector<8x32xf32> to vector<8x8xf32>
    %367 = arith.truncf %366 : vector<8x8xf32> to vector<8x8xbf16>
    %368 = vector.extract_strided_slice %307 {offsets = [0, 24], sizes = [8, 8], strides = [1, 1]} : vector<8x32xf32> to vector<8x8xf32>
    %369 = arith.truncf %368 : vector<8x8xf32> to vector<8x8xbf16>
    %370 = vector.extract_strided_slice %308 {offsets = [0, 24], sizes = [8, 8], strides = [1, 1]} : vector<8x32xf32> to vector<8x8xf32>
    %371 = arith.truncf %370 : vector<8x8xf32> to vector<8x8xbf16>
    %cst_132 = arith.constant dense<0.000000e+00> : vector<8x8xf32>
    %372 = tpu.matmul %367, %369, %cst_132 {dimension_numbers = #tpu.dot_dimension_numbers<[1], [1], [0], [0], [0, 0, 1, 0], [], []>} : vector<8x8xbf16>, vector<8x8xbf16>, vector<8x8xf32> -> vector<8x8xf32>
    %cst_133 = arith.constant dense<0xFF800000> : vector<8xf32>
    %373 = vector.multi_reduction <maximumf>, %372, %cst_133 [1] : vector<8x8xf32> to vector<8xf32>
    %374 = vector.shape_cast %373 : vector<8xf32> to vector<8x1xf32>
    %375 = vector.broadcast %374 : vector<8x1xf32> to vector<8x8xf32>
    %376 = arith.subf %372, %375 : vector<8x8xf32>
    %377 = math.exp %376 : vector<8x8xf32>
    %cst_134 = arith.constant dense<0.000000e+00> : vector<8xf32>
    %378 = vector.multi_reduction <add>, %377, %cst_134 [1] : vector<8x8xf32> to vector<8xf32>
    %379 = vector.shape_cast %378 : vector<8xf32> to vector<8x1xf32>
    %380 = tpu.reciprocal %379 {approx = true} : vector<8x1xf32> -> vector<8x1xf32>
    %381 = vector.broadcast %380 : vector<8x1xf32> to vector<8x8xf32>
    %382 = arith.mulf %377, %381 : vector<8x8xf32>
    %383 = arith.truncf %382 : vector<8x8xf32> to vector<8x8xbf16>
    %cst_135 = arith.constant dense<0.000000e+00> : vector<8x8xf32>
    %384 = tpu.matmul %383, %371, %cst_135 {dimension_numbers = #tpu.dot_dimension_numbers<[1], [0], [0], [1], [0, 0, 1, 1], [], []>} : vector<8x8xbf16>, vector<8x8xbf16>, vector<8x8xf32> -> vector<8x8xf32>
    %385 = tpu.concatenate %327, %346, %365, %384 in 1 : vector<8x8xf32>, vector<8x8xf32>, vector<8x8xf32>, vector<8x8xf32> -> vector<8x32xf32>
    %c0_136 = arith.constant 0 : index
    %c0_137 = arith.constant 0 : index
    %386 = vector.load %arg31[%c0_136, %c0_137] : memref<32x32xbf16, #tpu.memory_space<vmem>>, vector<32x32xbf16>
    %c0_138 = arith.constant 0 : index
    %c0_139 = arith.constant 0 : index
    %387 = vector.load %arg32[%c0_138, %c0_139] : memref<1x32xf32, #tpu.memory_space<vmem>>, vector<1x32xf32>
    %388 = arith.truncf %385 : vector<8x32xf32> to vector<8x32xbf16>
    %cst_140 = arith.constant dense<0.000000e+00> : vector<8x32xf32>
    %389 = tpu.matmul %388, %386, %cst_140 {dimension_numbers = #tpu.dot_dimension_numbers<[1], [0], [0], [1], [0, 0, 1, 1], [], []>} : vector<8x32xbf16>, vector<32x32xbf16>, vector<8x32xf32> -> vector<8x32xf32>
    %390 = vector.broadcast %387 : vector<1x32xf32> to vector<8x32xf32>
    %391 = arith.addf %389, %390 : vector<8x32xf32>
    %392 = arith.addf %294, %391 : vector<8x32xf32>
    %c0_141 = arith.constant 0 : index
    %c0_142 = arith.constant 0 : index
    %393 = vector.load %arg33[%c0_141, %c0_142] : memref<1x32xf32, #tpu.memory_space<vmem>>, vector<1x32xf32>
    %c0_143 = arith.constant 0 : index
    %c0_144 = arith.constant 0 : index
    %394 = vector.load %arg34[%c0_143, %c0_144] : memref<1x32xf32, #tpu.memory_space<vmem>>, vector<1x32xf32>
    %cst_145 = arith.constant dense<0.000000e+00> : vector<8xf32>
    %395 = vector.multi_reduction <add>, %392, %cst_145 [1] : vector<8x32xf32> to vector<8xf32>
    %396 = vector.shape_cast %395 : vector<8xf32> to vector<8x1xf32>
    %cst_146 = arith.constant 3.200000e+01 : f32
    %397 = vector.broadcast %cst_146 : f32 to vector<8x1xf32>
    %398 = arith.divf %396, %397 : vector<8x1xf32>
    %399 = vector.broadcast %398 : vector<8x1xf32> to vector<8x32xf32>
    %400 = arith.subf %392, %399 : vector<8x32xf32>
    %401 = arith.mulf %400, %400 : vector<8x32xf32>
    %cst_147 = arith.constant dense<0.000000e+00> : vector<8xf32>
    %402 = vector.multi_reduction <add>, %401, %cst_147 [1] : vector<8x32xf32> to vector<8xf32>
    %403 = vector.shape_cast %402 : vector<8xf32> to vector<8x1xf32>
    %cst_148 = arith.constant 3.200000e+01 : f32
    %404 = vector.broadcast %cst_148 : f32 to vector<8x1xf32>
    %405 = arith.divf %403, %404 : vector<8x1xf32>
    %406 = vector.broadcast %398 : vector<8x1xf32> to vector<8x32xf32>
    %407 = arith.subf %392, %406 : vector<8x32xf32>
    %cst_149 = arith.constant 9.99999974E-6 : f32
    %408 = vector.broadcast %cst_149 : f32 to vector<8x1xf32>
    %409 = arith.addf %405, %408 : vector<8x1xf32>
    %410 = math.rsqrt %409 : vector<8x1xf32>
    %411 = vector.broadcast %410 : vector<8x1xf32> to vector<8x32xf32>
    %412 = arith.mulf %407, %411 : vector<8x32xf32>
    %413 = vector.broadcast %393 : vector<1x32xf32> to vector<8x32xf32>
    %414 = arith.mulf %412, %413 : vector<8x32xf32>
    %415 = vector.broadcast %394 : vector<1x32xf32> to vector<8x32xf32>
    %416 = arith.addf %414, %415 : vector<8x32xf32>
    %c0_150 = arith.constant 0 : index
    %c0_151 = arith.constant 0 : index
    %417 = vector.load %arg35[%c0_150, %c0_151] : memref<32x64xbf16, #tpu.memory_space<vmem>>, vector<32x64xbf16>
    %c0_152 = arith.constant 0 : index
    %c0_153 = arith.constant 0 : index
    %418 = vector.load %arg36[%c0_152, %c0_153] : memref<1x64xf32, #tpu.memory_space<vmem>>, vector<1x64xf32>
    %419 = arith.truncf %416 : vector<8x32xf32> to vector<8x32xbf16>
    %cst_154 = arith.constant dense<0.000000e+00> : vector<8x64xf32>
    %420 = tpu.matmul %419, %417, %cst_154 {dimension_numbers = #tpu.dot_dimension_numbers<[1], [0], [0], [1], [0, 0, 1, 1], [], []>} : vector<8x32xbf16>, vector<32x64xbf16>, vector<8x64xf32> -> vector<8x64xf32>
    %421 = vector.broadcast %418 : vector<1x64xf32> to vector<8x64xf32>
    %422 = arith.addf %420, %421 : vector<8x64xf32>
    %cst_155 = arith.constant 0.000000e+00 : f32
    %423 = vector.broadcast %cst_155 : f32 to vector<8x64xf32>
    %424 = arith.maximumf %422, %423 : vector<8x64xf32>
    %c0_156 = arith.constant 0 : index
    %c0_157 = arith.constant 0 : index
    %425 = vector.load %arg37[%c0_156, %c0_157] : memref<64x32xbf16, #tpu.memory_space<vmem>>, vector<64x32xbf16>
    %c0_158 = arith.constant 0 : index
    %c0_159 = arith.constant 0 : index
    %426 = vector.load %arg38[%c0_158, %c0_159] : memref<1x32xf32, #tpu.memory_space<vmem>>, vector<1x32xf32>
    %427 = arith.truncf %424 : vector<8x64xf32> to vector<8x64xbf16>
    %cst_160 = arith.constant dense<0.000000e+00> : vector<8x32xf32>
    %428 = tpu.matmul %427, %425, %cst_160 {dimension_numbers = #tpu.dot_dimension_numbers<[1], [0], [0], [1], [0, 0, 1, 1], [], []>} : vector<8x64xbf16>, vector<64x32xbf16>, vector<8x32xf32> -> vector<8x32xf32>
    %429 = vector.broadcast %426 : vector<1x32xf32> to vector<8x32xf32>
    %430 = arith.addf %428, %429 : vector<8x32xf32>
    %431 = arith.addf %416, %430 : vector<8x32xf32>
    %c0_161 = arith.constant 0 : index
    %c0_162 = arith.constant 0 : index
    %432 = vector.load %arg39[%c0_161, %c0_162] : memref<1x32xf32, #tpu.memory_space<vmem>>, vector<1x32xf32>
    %c0_163 = arith.constant 0 : index
    %c0_164 = arith.constant 0 : index
    %433 = vector.load %arg40[%c0_163, %c0_164] : memref<1x32xf32, #tpu.memory_space<vmem>>, vector<1x32xf32>
    %cst_165 = arith.constant dense<0.000000e+00> : vector<8xf32>
    %434 = vector.multi_reduction <add>, %431, %cst_165 [1] : vector<8x32xf32> to vector<8xf32>
    %435 = vector.shape_cast %434 : vector<8xf32> to vector<8x1xf32>
    %cst_166 = arith.constant 3.200000e+01 : f32
    %436 = vector.broadcast %cst_166 : f32 to vector<8x1xf32>
    %437 = arith.divf %435, %436 : vector<8x1xf32>
    %438 = vector.broadcast %437 : vector<8x1xf32> to vector<8x32xf32>
    %439 = arith.subf %431, %438 : vector<8x32xf32>
    %440 = arith.mulf %439, %439 : vector<8x32xf32>
    %cst_167 = arith.constant dense<0.000000e+00> : vector<8xf32>
    %441 = vector.multi_reduction <add>, %440, %cst_167 [1] : vector<8x32xf32> to vector<8xf32>
    %442 = vector.shape_cast %441 : vector<8xf32> to vector<8x1xf32>
    %cst_168 = arith.constant 3.200000e+01 : f32
    %443 = vector.broadcast %cst_168 : f32 to vector<8x1xf32>
    %444 = arith.divf %442, %443 : vector<8x1xf32>
    %445 = vector.broadcast %437 : vector<8x1xf32> to vector<8x32xf32>
    %446 = arith.subf %431, %445 : vector<8x32xf32>
    %cst_169 = arith.constant 9.99999974E-6 : f32
    %447 = vector.broadcast %cst_169 : f32 to vector<8x1xf32>
    %448 = arith.addf %444, %447 : vector<8x1xf32>
    %449 = math.rsqrt %448 : vector<8x1xf32>
    %450 = vector.broadcast %449 : vector<8x1xf32> to vector<8x32xf32>
    %451 = arith.mulf %446, %450 : vector<8x32xf32>
    %452 = vector.broadcast %432 : vector<1x32xf32> to vector<8x32xf32>
    %453 = arith.mulf %451, %452 : vector<8x32xf32>
    %454 = vector.broadcast %433 : vector<1x32xf32> to vector<8x32xf32>
    %455 = arith.addf %453, %454 : vector<8x32xf32>
    %c0_170 = arith.constant 0 : index
    %c0_171 = arith.constant 0 : index
    %456 = vector.load %arg41[%c0_170, %c0_171] : memref<32x128xbf16, #tpu.memory_space<vmem>>, vector<32x128xbf16>
    %c0_172 = arith.constant 0 : index
    %c0_173 = arith.constant 0 : index
    %457 = vector.load %arg42[%c0_172, %c0_173] : memref<1x128xf32, #tpu.memory_space<vmem>>, vector<1x128xf32>
    %458 = arith.truncf %455 : vector<8x32xf32> to vector<8x32xbf16>
    %cst_174 = arith.constant dense<0.000000e+00> : vector<8x128xf32>
    %459 = tpu.matmul %458, %456, %cst_174 {dimension_numbers = #tpu.dot_dimension_numbers<[1], [0], [0], [1], [0, 0, 1, 1], [], []>} : vector<8x32xbf16>, vector<32x128xbf16>, vector<8x128xf32> -> vector<8x128xf32>
    %460 = vector.broadcast %457 : vector<1x128xf32> to vector<8x128xf32>
    %461 = arith.addf %459, %460 : vector<8x128xf32>
    %c0_175 = arith.constant 0 : index
    %c0_176 = arith.constant 0 : index
    %c0_177 = arith.constant 0 : index
    %462 = vector.load %arg43[%c0_175, %c0_176, %c0_177] : memref<1x8x128xf32, #tpu.memory_space<vmem>>, vector<1x8x128xf32>
    %463 = vector.shape_cast %462 : vector<1x8x128xf32> to vector<8x128xf32>
    %464 = vector.shape_cast %461 : vector<8x128xf32> to vector<1x8x128xf32>
    tpu.vector_store %arg43[%c0_175, %c0_176, %c0_177], %464 {strides = array<i32>} : memref<1x8x128xf32, #tpu.memory_space<vmem>>, vector<1x8x128xf32>,
    return
  }
  func.func @transform_0(%arg0: i32) -> (i32, i32, i32) {
    %c0_i32 = arith.constant 0 : i32
    %c0_i32_0 = arith.constant 0 : i32
    %c0_i32_1 = arith.constant 0 : i32
    return %arg0, %c0_i32, %c0_i32_0 : i32, i32, i32
  }
  func.func @transform_1(%arg0: i32) -> (i32, i32, i32) {
    %c0_i32 = arith.constant 0 : i32
    %c0_i32_0 = arith.constant 0 : i32
    %c0_i32_1 = arith.constant 0 : i32
    return %arg0, %c0_i32, %c0_i32_0 : i32, i32, i32
  }
  func.func @transform_2(%arg0: i32) -> (i32, i32, i32) {
    %c0_i32 = arith.constant 0 : i32
    %c0_i32_0 = arith.constant 0 : i32
    %c0_i32_1 = arith.constant 0 : i32
    return %arg0, %c0_i32, %c0_i32_0 : i32, i32, i32
  }
  func.func @transform_3(%arg0: i32) -> (i32, i32, i32) {
    %c0_i32 = arith.constant 0 : i32
    %c0_i32_0 = arith.constant 0 : i32
    %c0_i32_1 = arith.constant 0 : i32
    return %arg0, %c0_i32, %c0_i32_0 : i32, i32, i32
  }
  func.func @transform_4(%arg0: i32) -> (i32, i32) {
    %c0_i32 = arith.constant 0 : i32
    %c0_i32_0 = arith.constant 0 : i32
    %c0_i32_1 = arith.constant 0 : i32
    return %c0_i32, %c0_i32_0 : i32, i32
  }
  func.func @transform_5(%arg0: i32) -> (i32, i32) {
    %c0_i32 = arith.constant 0 : i32
    %c0_i32_0 = arith.constant 0 : i32
    %c0_i32_1 = arith.constant 0 : i32
    return %c0_i32, %c0_i32_0 : i32, i32
  }
  func.func @transform_6(%arg0: i32) -> (i32, i32) {
    %c0_i32 = arith.constant 0 : i32
    %c0_i32_0 = arith.constant 0 : i32
    %c0_i32_1 = arith.constant 0 : i32
    return %c0_i32, %c0_i32_0 : i32, i32
  }
  func.func @transform_7(%arg0: i32) -> (i32, i32) {
    %c0_i32 = arith.constant 0 : i32
    %c0_i32_0 = arith.constant 0 : i32
    %c0_i32_1 = arith.constant 0 : i32
    return %c0_i32, %c0_i32_0 : i32, i32
  }
  func.func @transform_8(%arg0: i32) -> (i32, i32) {
    %c0_i32 = arith.constant 0 : i32
    %c0_i32_0 = arith.constant 0 : i32
    %c0_i32_1 = arith.constant 0 : i32
    return %c0_i32, %c0_i32_0 : i32, i32
  }
  func.func @transform_9(%arg0: i32) -> (i32, i32) {
    %c0_i32 = arith.constant 0 : i32
    %c0_i32_0 = arith.constant 0 : i32
    %c0_i32_1 = arith.constant 0 : i32
    return %c0_i32, %c0_i32_0 : i32, i32
  }
  func.func @transform_10(%arg0: i32) -> (i32, i32) {
    %c0_i32 = arith.constant 0 : i32
    %c0_i32_0 = arith.constant 0 : i32
    %c0_i32_1 = arith.constant 0 : i32
    return %c0_i32, %c0_i32_0 : i32, i32
  }
  func.func @transform_11(%arg0: i32) -> (i32, i32) {
    %c0_i32 = arith.constant 0 : i32
    %c0_i32_0 = arith.constant 0 : i32
    %c0_i32_1 = arith.constant 0 : i32
    return %c0_i32, %c0_i32_0 : i32, i32
  }
  func.func @transform_12(%arg0: i32) -> (i32, i32) {
    %c0_i32 = arith.constant 0 : i32
    %c0_i32_0 = arith.constant 0 : i32
    %c0_i32_1 = arith.constant 0 : i32
    return %c0_i32, %c0_i32_0 : i32, i32
  }
  func.func @transform_13(%arg0: i32) -> (i32, i32) {
    %c0_i32 = arith.constant 0 : i32
    %c0_i32_0 = arith.constant 0 : i32
    %c0_i32_1 = arith.constant 0 : i32
    return %c0_i32, %c0_i32_0 : i32, i32
  }
  func.func @transform_14(%arg0: i32) -> (i32, i32) {
    %c0_i32 = arith.constant 0 : i32
    %c0_i32_0 = arith.constant 0 : i32
    %c0_i32_1 = arith.constant 0 : i32
    return %c0_i32, %c0_i32_0 : i32, i32
  }
  func.func @transform_15(%arg0: i32) -> (i32, i32) {
    %c0_i32 = arith.constant 0 : i32
    %c0_i32_0 = arith.constant 0 : i32
    %c0_i32_1 = arith.constant 0 : i32
    return %c0_i32, %c0_i32_0 : i32, i32
  }
  func.func @transform_16(%arg0: i32) -> (i32, i32) {
    %c0_i32 = arith.constant 0 : i32
    %c0_i32_0 = arith.constant 0 : i32
    %c0_i32_1 = arith.constant 0 : i32
    return %c0_i32, %c0_i32_0 : i32, i32
  }
  func.func @transform_17(%arg0: i32) -> (i32, i32) {
    %c0_i32 = arith.constant 0 : i32
    %c0_i32_0 = arith.constant 0 : i32
    %c0_i32_1 = arith.constant 0 : i32
    return %c0_i32, %c0_i32_0 : i32, i32
  }
  func.func @transform_18(%arg0: i32) -> (i32, i32) {
    %c0_i32 = arith.constant 0 : i32
    %c0_i32_0 = arith.constant 0 : i32
    %c0_i32_1 = arith.constant 0 : i32
    return %c0_i32, %c0_i32_0 : i32, i32
  }
  func.func @transform_19(%arg0: i32) -> (i32, i32) {
    %c0_i32 = arith.constant 0 : i32
    %c0_i32_0 = arith.constant 0 : i32
    %c0_i32_1 = arith.constant 0 : i32
    return %c0_i32, %c0_i32_0 : i32, i32
  }
  func.func @transform_20(%arg0: i32) -> (i32, i32) {
    %c0_i32 = arith.constant 0 : i32
    %c0_i32_0 = arith.constant 0 : i32
    %c0_i32_1 = arith.constant 0 : i32
    return %c0_i32, %c0_i32_0 : i32, i32
  }
  func.func @transform_21(%arg0: i32) -> (i32, i32) {
    %c0_i32 = arith.constant 0 : i32
    %c0_i32_0 = arith.constant 0 : i32
    %c0_i32_1 = arith.constant 0 : i32
    return %c0_i32, %c0_i32_0 : i32, i32
  }
  func.func @transform_22(%arg0: i32) -> (i32, i32) {
    %c0_i32 = arith.constant 0 : i32
    %c0_i32_0 = arith.constant 0 : i32
    %c0_i32_1 = arith.constant 0 : i32
    return %c0_i32, %c0_i32_0 : i32, i32
  }
  func.func @transform_23(%arg0: i32) -> (i32, i32) {
    %c0_i32 = arith.constant 0 : i32
    %c0_i32_0 = arith.constant 0 : i32
    %c0_i32_1 = arith.constant 0 : i32
    return %c0_i32, %c0_i32_0 : i32, i32
  }
  func.func @transform_24(%arg0: i32) -> (i32, i32) {
    %c0_i32 = arith.constant 0 : i32
    %c0_i32_0 = arith.constant 0 : i32
    %c0_i32_1 = arith.constant 0 : i32
    return %c0_i32, %c0_i32_0 : i32, i32
  }
  func.func @transform_25(%arg0: i32) -> (i32, i32) {
    %c0_i32 = arith.constant 0 : i32
    %c0_i32_0 = arith.constant 0 : i32
    %c0_i32_1 = arith.constant 0 : i32
    return %c0_i32, %c0_i32_0 : i32, i32
  }
  func.func @transform_26(%arg0: i32) -> (i32, i32) {
    %c0_i32 = arith.constant 0 : i32
    %c0_i32_0 = arith.constant 0 : i32
    %c0_i32_1 = arith.constant 0 : i32
    return %c0_i32, %c0_i32_0 : i32, i32
  }
  func.func @transform_27(%arg0: i32) -> (i32, i32) {
    %c0_i32 = arith.constant 0 : i32
    %c0_i32_0 = arith.constant 0 : i32
    %c0_i32_1 = arith.constant 0 : i32
    return %c0_i32, %c0_i32_0 : i32, i32
  }
  func.func @transform_28(%arg0: i32) -> (i32, i32) {
    %c0_i32 = arith.constant 0 : i32
    %c0_i32_0 = arith.constant 0 : i32
    %c0_i32_1 = arith.constant 0 : i32
    return %c0_i32, %c0_i32_0 : i32, i32
  }
  func.func @transform_29(%arg0: i32) -> (i32, i32) {
    %c0_i32 = arith.constant 0 : i32
    %c0_i32_0 = arith.constant 0 : i32
    %c0_i32_1 = arith.constant 0 : i32
    return %c0_i32, %c0_i32_0 : i32, i32
  }
  func.func @transform_30(%arg0: i32) -> (i32, i32) {
    %c0_i32 = arith.constant 0 : i32
    %c0_i32_0 = arith.constant 0 : i32
    %c0_i32_1 = arith.constant 0 : i32
    return %c0_i32, %c0_i32_0 : i32, i32
  }
  func.func @transform_31(%arg0: i32) -> (i32, i32) {
    %c0_i32 = arith.constant 0 : i32
    %c0_i32_0 = arith.constant 0 : i32
    %c0_i32_1 = arith.constant 0 : i32
    return %c0_i32, %c0_i32_0 : i32, i32
  }
  func.func @transform_32(%arg0: i32) -> (i32, i32) {
    %c0_i32 = arith.constant 0 : i32
    %c0_i32_0 = arith.constant 0 : i32
    %c0_i32_1 = arith.constant 0 : i32
    return %c0_i32, %c0_i32_0 : i32, i32
  }
  func.func @transform_33(%arg0: i32) -> (i32, i32) {
    %c0_i32 = arith.constant 0 : i32
    %c0_i32_0 = arith.constant 0 : i32
    %c0_i32_1 = arith.constant 0 : i32
    return %c0_i32, %c0_i32_0 : i32, i32
  }
  func.func @transform_34(%arg0: i32) -> (i32, i32) {
    %c0_i32 = arith.constant 0 : i32
    %c0_i32_0 = arith.constant 0 : i32
    %c0_i32_1 = arith.constant 0 : i32
    return %c0_i32, %c0_i32_0 : i32, i32
  }
  func.func @transform_35(%arg0: i32) -> (i32, i32) {
    %c0_i32 = arith.constant 0 : i32
    %c0_i32_0 = arith.constant 0 : i32
    %c0_i32_1 = arith.constant 0 : i32
    return %c0_i32, %c0_i32_0 : i32, i32
  }
  func.func @transform_36(%arg0: i32) -> (i32, i32) {
    %c0_i32 = arith.constant 0 : i32
    %c0_i32_0 = arith.constant 0 : i32
    %c0_i32_1 = arith.constant 0 : i32
    return %c0_i32, %c0_i32_0 : i32, i32
  }
  func.func @transform_37(%arg0: i32) -> (i32, i32) {
    %c0_i32 = arith.constant 0 : i32
    %c0_i32_0 = arith.constant 0 : i32
    %c0_i32_1 = arith.constant 0 : i32
    return %c0_i32, %c0_i32_0 : i32, i32
  }
  func.func @transform_38(%arg0: i32) -> (i32, i32) {
    %c0_i32 = arith.constant 0 : i32
    %c0_i32_0 = arith.constant 0 : i32
    %c0_i32_1 = arith.constant 0 : i32
    return %c0_i32, %c0_i32_0 : i32, i32
  }
  func.func @transform_39(%arg0: i32) -> (i32, i32) {
    %c0_i32 = arith.constant 0 : i32
    %c0_i32_0 = arith.constant 0 : i32
    %c0_i32_1 = arith.constant 0 : i32
    return %c0_i32, %c0_i32_0 : i32, i32
  }
  func.func @transform_40(%arg0: i32) -> (i32, i32) {
    %c0_i32 = arith.constant 0 : i32
    %c0_i32_0 = arith.constant 0 : i32
    %c0_i32_1 = arith.constant 0 : i32
    return %c0_i32, %c0_i32_0 : i32, i32
  }
  func.func @transform_41(%arg0: i32) -> (i32, i32) {
    %c0_i32 = arith.constant 0 : i32
    %c0_i32_0 = arith.constant 0 : i32
    %c0_i32_1 = arith.constant 0 : i32
    return %c0_i32, %c0_i32_0 : i32, i32
  }
  func.func @transform_42(%arg0: i32) -> (i32, i32, i32) {
    %c0_i32 = arith.constant 0 : i32
    %c0_i32_0 = arith.constant 0 : i32
    %c0_i32_1 = arith.constant 0 : i32
    return %arg0, %c0_i32, %c0_i32_0 : i32, i32, i32
  }
}

</mosaic_0001>

<llo_original>
// kernel: motion_prediction_forward.1
$region0: #{motion_prediction_forward.1}
  #allocation0 [shape = 'u32[]', space=smem, size = 0x4, offset = 0x4, fixed_abs, tag = 'smem constant byte address 0x4 - core index']
  #allocation1 [shape = 'u32[72,128]{1,0:T(1,128)}', space=vmem, size = 0x9000, scoped, tag = 'internal scratch']
  %s0 = inlined_call_operand.smem [shape: u32[43], index: -1, kind: input, shape index: {}]
  %s1 = sld [smem:[%s0]]
  %s2 = scalar_lea.smem %s0, 1
  %s3 = sld [smem:[%s2]]
  %s4 = scalar_lea.smem %s0, 2
  %s5 = sld [smem:[%s4]]
  %s6 = scalar_lea.smem %s0, 3
  %s7 = sld [smem:[%s6]]
  %s8 = scalar_lea.smem %s0, 4
  %s9 = sld [smem:[%s8]]
  %s10 = scalar_lea.smem %s0, 5
  %s11 = sld [smem:[%s10]]
  %s12 = scalar_lea.smem %s0, 6
  %s13 = sld [smem:[%s12]]
  %s14 = scalar_lea.smem %s0, 7
  %s15 = sld [smem:[%s14]]
  %s16 = scalar_lea.smem %s0, 8
  %s17 = sld [smem:[%s16]]
  %s18 = scalar_lea.smem %s0, 9
  %s19 = sld [smem:[%s18]]
  %s20 = scalar_lea.smem %s0, 10
  %s21 = sld [smem:[%s20]]
  %s22 = scalar_lea.smem %s0, 11
  %s23 = sld [smem:[%s22]]
  %s24 = scalar_lea.smem %s0, 12
  %s25 = sld [smem:[%s24]]
  %s26 = scalar_lea.smem %s0, 13
  %s27 = sld [smem:[%s26]]
  %s28 = scalar_lea.smem %s0, 14
  %s29 = sld [smem:[%s28]]
  %s30 = scalar_lea.smem %s0, 15
  %s31 = sld [smem:[%s30]]
  %s32 = scalar_lea.smem %s0, 16
  %s33 = sld [smem:[%s32]]
  %s34 = scalar_lea.smem %s0, 17
  %s35 = sld [smem:[%s34]]
  %s36 = scalar_lea.smem %s0, 18
  %s37 = sld [smem:[%s36]]
  %s38 = scalar_lea.smem %s0, 19
  %s39 = sld [smem:[%s38]]
  %s40 = scalar_lea.smem %s0, 20
  %s41 = sld [smem:[%s40]]
  %s42 = scalar_lea.smem %s0, 21
  %s43 = sld [smem:[%s42]]
  %s44 = scalar_lea.smem %s0, 22
  %s45 = sld [smem:[%s44]]
  %s46 = scalar_lea.smem %s0, 23
  %s47 = sld [smem:[%s46]]
  %s48 = scalar_lea.smem %s0, 24
  %s49 = sld [smem:[%s48]]
  %s50 = scalar_lea.smem %s0, 25
  %s51 = sld [smem:[%s50]]
  %s52 = scalar_lea.smem %s0, 26
  %s53 = sld [smem:[%s52]]
  %s54 = scalar_lea.smem %s0, 27
  %s55 = sld [smem:[%s54]]
  %s56 = scalar_lea.smem %s0, 28
  %s57 = sld [smem:[%s56]]
  %s58 = scalar_lea.smem %s0, 29
  %s59 = sld [smem:[%s58]]
  %s60 = scalar_lea.smem %s0, 30
  %s61 = sld [smem:[%s60]]
  %s62 = scalar_lea.smem %s0, 31
  %s63 = sld [smem:[%s62]]
  %s64 = scalar_lea.smem %s0, 32
  %s65 = sld [smem:[%s64]]
  %s66 = scalar_lea.smem %s0, 33
  %s67 = sld [smem:[%s66]]
  %s68 = scalar_lea.smem %s0, 34
  %s69 = sld [smem:[%s68]]
  %s70 = scalar_lea.smem %s0, 35
  %s71 = sld [smem:[%s70]]
  %s72 = scalar_lea.smem %s0, 36
  %s73 = sld [smem:[%s72]]
  %s74 = scalar_lea.smem %s0, 37
  %s75 = sld [smem:[%s74]]
  %s76 = scalar_lea.smem %s0, 38
  %s77 = sld [smem:[%s76]]
  %s78 = scalar_lea.smem %s0, 39
  %s79 = sld [smem:[%s78]]
  %s80 = scalar_lea.smem %s0, 40
  %s81 = sld [smem:[%s80]]
  %s82 = scalar_lea.smem %s0, 41
  %s83 = sld [smem:[%s82]]
  %s84 = scalar_lea.smem %s0, 42
  %s85 = sld [smem:[%s84]]
  %s86 = sld [smem:[#allocation0]]
  $region201: #{motion_prediction_forward.1} parent=0
    _
  %s88 = ssub.s32 1, %s86
  %s89 = scalar_select 0, %s88, %s86
  loop: start=0, step=1, limit=4
  $region2: #{motion_prediction_forward.1} parent=0 // loop_pre_header
    _
  $region3: #{motion_prediction_forward.1} parent=0 // loop_header
    %s91 = sphi 0, %s95
    %p92 = scmp.ge.s32.totalorder %s91, 4
    %s101 = sphi 0, %s103
    %s104 = sphi 0, %s101
    %s105 = sphi 0, %s104
    %s121 = sphi 0, %s105
    %s127 = sphi 0, %s129
    %s130 = sphi 0, %s127
    %s131 = sphi 0, %s130
    %s147 = sphi 0, %s131
    %s153 = sphi 0, %s155
    %s156 = sphi 0, %s153
    %s157 = sphi 0, %s156
    %s173 = sphi 0, %s157
    %s179 = sphi 0, %s181
    %s182 = sphi 0, %s179
    %s183 = sphi 0, %s182
    %s199 = sphi 0, %s183
    %s203 = sphi 0, %s203
    %s205 = sphi 0, %s203
    %s206 = sphi 0, %s205
    %s220 = sphi 0, %s206
    %s224 = sphi 0, %s224
    %s226 = sphi 0, %s224
    %s227 = sphi 0, %s226
    %s241 = sphi 0, %s227
    %s245 = sphi 0, %s245
    %s247 = sphi 0, %s245
    %s248 = sphi 0, %s247
    %s262 = sphi 0, %s248
    %s266 = sphi 0, %s266
    %s268 = sphi 0, %s266
    %s269 = sphi 0, %s268
    %s283 = sphi 0, %s269
    %s287 = sphi 0, %s287
    %s289 = sphi 0, %s287
    %s290 = sphi 0, %s289
    %s304 = sphi 0, %s290
    %s308 = sphi 0, %s308
    %s310 = sphi 0, %s308
    %s311 = sphi 0, %s310
    %s325 = sphi 0, %s311
    %s329 = sphi 0, %s329
    %s331 = sphi 0, %s329
    %s332 = sphi 0, %s331
    %s346 = sphi 0, %s332
    %s350 = sphi 0, %s350
    %s352 = sphi 0, %s350
    %s353 = sphi 0, %s352
    %s367 = sphi 0, %s353
    %s371 = sphi 0, %s371
    %s373 = sphi 0, %s371
    %s374 = sphi 0, %s373
    %s388 = sphi 0, %s374
    %s392 = sphi 0, %s392
    %s394 = sphi 0, %s392
    %s395 = sphi 0, %s394
    %s409 = sphi 0, %s395
    %s413 = sphi 0, %s413
    %s415 = sphi 0, %s413
    %s416 = sphi 0, %s415
    %s430 = sphi 0, %s416
    %s434 = sphi 0, %s434
    %s436 = sphi 0, %s434
    %s437 = sphi 0, %s436
    %s451 = sphi 0, %s437
    %s455 = sphi 0, %s455
    %s457 = sphi 0, %s455
    %s458 = sphi 0, %s457
    %s472 = sphi 0, %s458
    %s476 = sphi 0, %s476
    %s478 = sphi 0, %s476
    %s479 = sphi 0, %s478
    %s493 = sphi 0, %s479
    %s497 = sphi 0, %s497
    %s499 = sphi 0, %s497
    %s500 = sphi 0, %s499
    %s514 = sphi 0, %s500
    %s518 = sphi 0, %s518
    %s520 = sphi 0, %s518
    %s521 = sphi 0, %s520
    %s535 = sphi 0, %s521
    %s539 = sphi 0, %s539
    %s541 = sphi 0, %s539
    %s542 = sphi 0, %s541
    %s556 = sphi 0, %s542
    %s560 = sphi 0, %s560
    %s562 = sphi 0, %s560
    %s563 = sphi 0, %s562
    %s577 = sphi 0, %s563
    %s581 = sphi 0, %s581
    %s583 = sphi 0, %s581
    %s584 = sphi 0, %s583
    %s598 = sphi 0, %s584
    %s602 = sphi 0, %s602
    %s604 = sphi 0, %s602
    %s605 = sphi 0, %s604
    %s619 = sphi 0, %s605
    %s623 = sphi 0, %s623
    %s625 = sphi 0, %s623
    %s626 = sphi 0, %s625
    %s640 = sphi 0, %s626
    %s644 = sphi 0, %s644
    %s646 = sphi 0, %s644
    %s647 = sphi 0, %s646
    %s661 = sphi 0, %s647
    %s665 = sphi 0, %s665
    %s667 = sphi 0, %s665
    %s668 = sphi 0, %s667
    %s682 = sphi 0, %s668
    %s686 = sphi 0, %s686
    %s688 = sphi 0, %s686
    %s689 = sphi 0, %s688
    %s703 = sphi 0, %s689
    %s707 = sphi 0, %s707
    %s709 = sphi 0, %s707
    %s710 = sphi 0, %s709
    %s724 = sphi 0, %s710
    %s728 = sphi 0, %s728
    %s730 = sphi 0, %s728
    %s731 = sphi 0, %s730
    %s745 = sphi 0, %s731
    %s749 = sphi 0, %s749
    %s751 = sphi 0, %s749
    %s752 = sphi 0, %s751
    %s766 = sphi 0, %s752
    %s770 = sphi 0, %s770
    %s772 = sphi 0, %s770
    %s773 = sphi 0, %s772
    %s787 = sphi 0, %s773
    %s791 = sphi 0, %s791
    %s793 = sphi 0, %s791
    %s794 = sphi 0, %s793
    %s808 = sphi 0, %s794
    %s812 = sphi 0, %s812
    %s814 = sphi 0, %s812
    %s815 = sphi 0, %s814
    %s829 = sphi 0, %s815
    %s833 = sphi 0, %s833
    %s835 = sphi 0, %s833
    %s836 = sphi 0, %s835
    %s850 = sphi 0, %s836
    %s854 = sphi 0, %s854
    %s856 = sphi 0, %s854
    %s857 = sphi 0, %s856
    %s871 = sphi 0, %s857
    %s875 = sphi 0, %s875
    %s877 = sphi 0, %s875
    %s878 = sphi 0, %s877
    %s892 = sphi 0, %s878
    %s896 = sphi 0, %s896
    %s898 = sphi 0, %s896
    %s899 = sphi 0, %s898
    %s913 = sphi 0, %s899
    %s917 = sphi 0, %s917
    %s919 = sphi 0, %s917
    %s920 = sphi 0, %s919
    %s934 = sphi 0, %s920
    %s938 = sphi 0, %s938
    %s940 = sphi 0, %s938
    %s941 = sphi 0, %s940
    %s955 = sphi 0, %s941
    %s959 = sphi 0, %s959
    %s961 = sphi 0, %s959
    %s962 = sphi 0, %s961
    %s976 = sphi 0, %s962
    %s980 = sphi 0, %s980
    %s982 = sphi 0, %s980
    %s983 = sphi 0, %s982
    %s997 = sphi 0, %s983
    %s1003 = sphi 0, %s1005
    %s1006 = sphi 0, %s1003
    %s1007 = sphi 0, %s1006
    %s1023 = sphi 0, %s1007
  $region4: #{motion_prediction_forward.1} parent=0 // loop_header_branch
    %94 = sbr.rel (%p92) target = $region8
  $region5: #{motion_prediction_forward.1} parent=0 // loop_body
    %s96 = ssub.s32 %s91, 1
    %s97 = ssub.s32 %s91, 2
    %s98 = sadd.s32 %s91, 1
    %s99 = ssub.s32 %s91, %s98
    %p100 = scmp.eq.s32.totalorder %s99, 0
    %s102 = sadd.s32 %s101, 1
    %s103 = scalar_select %p100, %s101, %s102
    %p106 = pneg %p100
    %p107 = scmp.eq.s32.totalorder %s91, 1
    %p108 = por %p106, %p107
    %p109 = scmp.ne.s32.totalorder %s101, %s104
    %p110 = scmp.eq.s32.totalorder %s91, 0
    %p111 = por %p109, %p110
    %p112 = scmp.ne.s32.totalorder %s101, %s104
    %p113 = scmp.eq.s32.totalorder %s96, 1
    %p114 = por %p112, %p113
    %p115 = scmp.ne.s32.totalorder %s104, %s105
    %p116 = scmp.eq.s32.totalorder %s96, 0
    %p117 = por %p115, %p116
    %p118 = scmp.ne.s32.totalorder %s104, %s105
    %p119 = scmp.eq.s32.totalorder %s97, 1
    %p120 = por %p118, %p119
    %p122 = scmp.ne.s32.totalorder %s105, %s121
    %p123 = scmp.eq.s32.totalorder %s97, 0
    %p124 = por %p122, %p123
    %s125 = ssub.s32 %s91, %s98
    %p126 = scmp.eq.s32.totalorder %s125, 0
    %s128 = sadd.s32 %s127, 1
    %s129 = scalar_select %p126, %s127, %s128
    %p132 = pneg %p126
    %p133 = scmp.eq.s32.totalorder %s91, 1
    %p134 = por %p132, %p133
    %p135 = scmp.ne.s32.totalorder %s127, %s130
    %p136 = scmp.eq.s32.totalorder %s91, 0
    %p137 = por %p135, %p136
    %p138 = scmp.ne.s32.totalorder %s127, %s130
    %p139 = scmp.eq.s32.totalorder %s96, 1
    %p140 = por %p138, %p139
    %p141 = scmp.ne.s32.totalorder %s130, %s131
    %p142 = scmp.eq.s32.totalorder %s96, 0
    %p143 = por %p141, %p142
    %p144 = scmp.ne.s32.totalorder %s130, %s131
    %p145 = scmp.eq.s32.totalorder %s97, 1
    %p146 = por %p144, %p145
    %p148 = scmp.ne.s32.totalorder %s131, %s147
    %p149 = scmp.eq.s32.totalorder %s97, 0
    %p150 = por %p148, %p149
    %s151 = ssub.s32 %s91, %s98
    %p152 = scmp.eq.s32.totalorder %s151, 0
    %s154 = sadd.s32 %s153, 1
    %s155 = scalar_select %p152, %s153, %s154
    %p158 = pneg %p152
    %p159 = scmp.eq.s32.totalorder %s91, 1
    %p160 = por %p158, %p159
    %p161 = scmp.ne.s32.totalorder %s153, %s156
    %p162 = scmp.eq.s32.totalorder %s91, 0
    %p163 = por %p161, %p162
    %p164 = scmp.ne.s32.totalorder %s153, %s156
    %p165 = scmp.eq.s32.totalorder %s96, 1
    %p166 = por %p164, %p165
    %p167 = scmp.ne.s32.totalorder %s156, %s157
    %p168 = scmp.eq.s32.totalorder %s96, 0
    %p169 = por %p167, %p168
    %p170 = scmp.ne.s32.totalorder %s156, %s157
    %p171 = scmp.eq.s32.totalorder %s97, 1
    %p172 = por %p170, %p171
    %p174 = scmp.ne.s32.totalorder %s157, %s173
    %p175 = scmp.eq.s32.totalorder %s97, 0
    %p176 = por %p174, %p175
    %s177 = ssub.s32 %s91, %s98
    %p178 = scmp.eq.s32.totalorder %s177, 0
    %s180 = sadd.s32 %s179, 1
    %s181 = scalar_select %p178, %s179, %s180
    %p184 = pneg %p178
    %p185 = scmp.eq.s32.totalorder %s91, 1
    %p186 = por %p184, %p185
    %p187 = scmp.ne.s32.totalorder %s179, %s182
    %p188 = scmp.eq.s32.totalorder %s91, 0
    %p189 = por %p187, %p188
    %p190 = scmp.ne.s32.totalorder %s179, %s182
    %p191 = scmp.eq.s32.totalorder %s96, 1
    %p192 = por %p190, %p191
    %p193 = scmp.ne.s32.totalorder %s182, %s183
    %p194 = scmp.eq.s32.totalorder %s96, 0
    %p195 = por %p193, %p194
    %p196 = scmp.ne.s32.totalorder %s182, %s183
    %p197 = scmp.eq.s32.totalorder %s97, 1
    %p198 = por %p196, %p197
    %p200 = scmp.ne.s32.totalorder %s183, %s199
    %p201 = scmp.eq.s32.totalorder %s97, 0
    %p202 = por %p200, %p201
    %s204 = sadd.s32 %s203, 1
    %p207 = scmp.eq.s32.totalorder %s91, 1
    %p208 = scmp.ne.s32.totalorder %s203, %s205
    %p209 = scmp.eq.s32.totalorder %s91, 0
    %p210 = por %p208, %p209
    %p211 = scmp.ne.s32.totalorder %s203, %s205
    %p212 = scmp.eq.s32.totalorder %s96, 1
    %p213 = por %p211, %p212
    %p214 = scmp.ne.s32.totalorder %s205, %s206
    %p215 = scmp.eq.s32.totalorder %s96, 0
    %p216 = por %p214, %p215
    %p217 = scmp.ne.s32.totalorder %s205, %s206
    %p218 = scmp.eq.s32.totalorder %s97, 1
    %p219 = por %p217, %p218
    %p221 = scmp.ne.s32.totalorder %s206, %s220
    %p222 = scmp.eq.s32.totalorder %s97, 0
    %p223 = por %p221, %p222
    %s225 = sadd.s32 %s224, 1
    %p228 = scmp.eq.s32.totalorder %s91, 1
    %p229 = scmp.ne.s32.totalorder %s224, %s226
    %p230 = scmp.eq.s32.totalorder %s91, 0
    %p231 = por %p229, %p230
    %p232 = scmp.ne.s32.totalorder %s224, %s226
    %p233 = scmp.eq.s32.totalorder %s96, 1
    %p234 = por %p232, %p233
    %p235 = scmp.ne.s32.totalorder %s226, %s227
    %p236 = scmp.eq.s32.totalorder %s96, 0
    %p237 = por %p235, %p236
    %p238 = scmp.ne.s32.totalorder %s226, %s227
    %p239 = scmp.eq.s32.totalorder %s97, 1
    %p240 = por %p238, %p239
    %p242 = scmp.ne.s32.totalorder %s227, %s241
    %p243 = scmp.eq.s32.totalorder %s97, 0
    %p244 = por %p242, %p243
    %s246 = sadd.s32 %s245, 1
    %p249 = scmp.eq.s32.totalorder %s91, 1
    %p250 = scmp.ne.s32.totalorder %s245, %s247
    %p251 = scmp.eq.s32.totalorder %s91, 0
    %p252 = por %p250, %p251
    %p253 = scmp.ne.s32.totalorder %s245, %s247
    %p254 = scmp.eq.s32.totalorder %s96, 1
    %p255 = por %p253, %p254
    %p256 = scmp.ne.s32.totalorder %s247, %s248
    %p257 = scmp.eq.s32.totalorder %s96, 0
    %p258 = por %p256, %p257
    %p259 = scmp.ne.s32.totalorder %s247, %s248
    %p260 = scmp.eq.s32.totalorder %s97, 1
    %p261 = por %p259, %p260
    %p263 = scmp.ne.s32.totalorder %s248, %s262
    %p264 = scmp.eq.s32.totalorder %s97, 0
    %p265 = por %p263, %p264
    %s267 = sadd.s32 %s266, 1
    %p270 = scmp.eq.s32.totalorder %s91, 1
    %p271 = scmp.ne.s32.totalorder %s266, %s268
    %p272 = scmp.eq.s32.totalorder %s91, 0
    %p273 = por %p271, %p272
    %p274 = scmp.ne.s32.totalorder %s266, %s268
    %p275 = scmp.eq.s32.totalorder %s96, 1
    %p276 = por %p274, %p275
    %p277 = scmp.ne.s32.totalorder %s268, %s269
    %p278 = scmp.eq.s32.totalorder %s96, 0
    %p279 = por %p277, %p278
    %p280 = scmp.ne.s32.totalorder %s268, %s269
    %p281 = scmp.eq.s32.totalorder %s97, 1
    %p282 = por %p280, %p281
    %p284 = scmp.ne.s32.totalorder %s269, %s283
    %p285 = scmp.eq.s32.totalorder %s97, 0
    %p286 = por %p284, %p285
    %s288 = sadd.s32 %s287, 1
    %p291 = scmp.eq.s32.totalorder %s91, 1
    %p292 = scmp.ne.s32.totalorder %s287, %s289
    %p293 = scmp.eq.s32.totalorder %s91, 0
    %p294 = por %p292, %p293
    %p295 = scmp.ne.s32.totalorder %s287, %s289
    %p296 = scmp.eq.s32.totalorder %s96, 1
    %p297 = por %p295, %p296
    %p298 = scmp.ne.s32.totalorder %s289, %s290
    %p299 = scmp.eq.s32.totalorder %s96, 0
    %p300 = por %p298, %p299
    %p301 = scmp.ne.s32.totalorder %s289, %s290
    %p302 = scmp.eq.s32.totalorder %s97, 1
    %p303 = por %p301, %p302
    %p305 = scmp.ne.s32.totalorder %s290, %s304
    %p306 = scmp.eq.s32.totalorder %s97, 0
    %p307 = por %p305, %p306
    %s309 = sadd.s32 %s308, 1
    %p312 = scmp.eq.s32.totalorder %s91, 1
    %p313 = scmp.ne.s32.totalorder %s308, %s310
    %p314 = scmp.eq.s32.totalorder %s91, 0
    %p315 = por %p313, %p314
    %p316 = scmp.ne.s32.totalorder %s308, %s310
    %p317 = scmp.eq.s32.totalorder %s96, 1
    %p318 = por %p316, %p317
    %p319 = scmp.ne.s32.totalorder %s310, %s311
    %p320 = scmp.eq.s32.totalorder %s96, 0
    %p321 = por %p319, %p320
    %p322 = scmp.ne.s32.totalorder %s310, %s311
    %p323 = scmp.eq.s32.totalorder %s97, 1
    %p324 = por %p322, %p323
    %p326 = scmp.ne.s32.totalorder %s311, %s325
    %p327 = scmp.eq.s32.totalorder %s97, 0
    %p328 = por %p326, %p327
    %s330 = sadd.s32 %s329, 1
    %p333 = scmp.eq.s32.totalorder %s91, 1
    %p334 = scmp.ne.s32.totalorder %s329, %s331
    %p335 = scmp.eq.s32.totalorder %s91, 0
    %p336 = por %p334, %p335
    %p337 = scmp.ne.s32.totalorder %s329, %s331
    %p338 = scmp.eq.s32.totalorder %s96, 1
    %p339 = por %p337, %p338
    %p340 = scmp.ne.s32.totalorder %s331, %s332
    %p341 = scmp.eq.s32.totalorder %s96, 0
    %p342 = por %p340, %p341
    %p343 = scmp.ne.s32.totalorder %s331, %s332
    %p344 = scmp.eq.s32.totalorder %s97, 1
    %p345 = por %p343, %p344
    %p347 = scmp.ne.s32.totalorder %s332, %s346
    %p348 = scmp.eq.s32.totalorder %s97, 0
    %p349 = por %p347, %p348
    %s351 = sadd.s32 %s350, 1
    %p354 = scmp.eq.s32.totalorder %s91, 1
    %p355 = scmp.ne.s32.totalorder %s350, %s352
    %p356 = scmp.eq.s32.totalorder %s91, 0
    %p357 = por %p355, %p356
    %p358 = scmp.ne.s32.totalorder %s350, %s352
    %p359 = scmp.eq.s32.totalorder %s96, 1
    %p360 = por %p358, %p359
    %p361 = scmp.ne.s32.totalorder %s352, %s353
    %p362 = scmp.eq.s32.totalorder %s96, 0
    %p363 = por %p361, %p362
    %p364 = scmp.ne.s32.totalorder %s352, %s353
    %p365 = scmp.eq.s32.totalorder %s97, 1
    %p366 = por %p364, %p365
    %p368 = scmp.ne.s32.totalorder %s353, %s367
    %p369 = scmp.eq.s32.totalorder %s97, 0
    %p370 = por %p368, %p369
    %s372 = sadd.s32 %s371, 1
    %p375 = scmp.eq.s32.totalorder %s91, 1
    %p376 = scmp.ne.s32.totalorder %s371, %s373
    %p377 = scmp.eq.s32.totalorder %s91, 0
    %p378 = por %p376, %p377
    %p379 = scmp.ne.s32.totalorder %s371, %s373
    %p380 = scmp.eq.s32.totalorder %s96, 1
    %p381 = por %p379, %p380
    %p382 = scmp.ne.s32.totalorder %s373, %s374
    %p383 = scmp.eq.s32.totalorder %s96, 0
    %p384 = por %p382, %p383
    %p385 = scmp.ne.s32.totalorder %s373, %s374
    %p386 = scmp.eq.s32.totalorder %s97, 1
    %p387 = por %p385, %p386
    %p389 = scmp.ne.s32.totalorder %s374, %s388
    %p390 = scmp.eq.s32.totalorder %s97, 0
    %p391 = por %p389, %p390
    %s393 = sadd.s32 %s392, 1
    %p396 = scmp.eq.s32.totalorder %s91, 1
    %p397 = scmp.ne.s32.totalorder %s392, %s394
    %p398 = scmp.eq.s32.totalorder %s91, 0
    %p399 = por %p397, %p398
    %p400 = scmp.ne.s32.totalorder %s392, %s394
    %p401 = scmp.eq.s32.totalorder %s96, 1
    %p402 = por %p400, %p401
    %p403 = scmp.ne.s32.totalorder %s394, %s395
    %p404 = scmp.eq.s32.totalorder %s96, 0
    %p405 = por %p403, %p404
    %p406 = scmp.ne.s32.totalorder %s394, %s395
    %p407 = scmp.eq.s32.totalorder %s97, 1
    %p408 = por %p406, %p407
    %p410 = scmp.ne.s32.totalorder %s395, %s409
    %p411 = scmp.eq.s32.totalorder %s97, 0
    %p412 = por %p410, %p411
    %s414 = sadd.s32 %s413, 1
    %p417 = scmp.eq.s32.totalorder %s91, 1
    %p418 = scmp.ne.s32.totalorder %s413, %s415
    %p419 = scmp.eq.s32.totalorder %s91, 0
    %p420 = por %p418, %p419
    %p421 = scmp.ne.s32.totalorder %s413, %s415
    %p422 = scmp.eq.s32.totalorder %s96, 1
    %p423 = por %p421, %p422
    %p424 = scmp.ne.s32.totalorder %s415, %s416
    %p425 = scmp.eq.s32.totalorder %s96, 0
    %p426 = por %p424, %p425
    %p427 = scmp.ne.s32.totalorder %s415, %s416
    %p428 = scmp.eq.s32.totalorder %s97, 1
    %p429 = por %p427, %p428
    %p431 = scmp.ne.s32.totalorder %s416, %s430
    %p432 = scmp.eq.s32.totalorder %s97, 0
    %p433 = por %p431, %p432
    %s435 = sadd.s32 %s434, 1
    %p438 = scmp.eq.s32.totalorder %s91, 1
    %p439 = scmp.ne.s32.totalorder %s434, %s436
    %p440 = scmp.eq.s32.totalorder %s91, 0
    %p441 = por %p439, %p440
    %p442 = scmp.ne.s32.totalorder %s434, %s436
    %p443 = scmp.eq.s32.totalorder %s96, 1
    %p444 = por %p442, %p443
    %p445 = scmp.ne.s32.totalorder %s436, %s437
    %p446 = scmp.eq.s32.totalorder %s96, 0
    %p447 = por %p445, %p446
    %p448 = scmp.ne.s32.totalorder %s436, %s437
    %p449 = scmp.eq.s32.totalorder %s97, 1
    %p450 = por %p448, %p449
    %p452 = scmp.ne.s32.totalorder %s437, %s451
    %p453 = scmp.eq.s32.totalorder %s97, 0
    %p454 = por %p452, %p453
    %s456 = sadd.s32 %s455, 1
    %p459 = scmp.eq.s32.totalorder %s91, 1
    %p460 = scmp.ne.s32.totalorder %s455, %s457
    %p461 = scmp.eq.s32.totalorder %s91, 0
    %p462 = por %p460, %p461
    %p463 = scmp.ne.s32.totalorder %s455, %s457
    %p464 = scmp.eq.s32.totalorder %s96, 1
    %p465 = por %p463, %p464
    %p466 = scmp.ne.s32.totalorder %s457, %s458
    %p467 = scmp.eq.s32.totalorder %s96, 0
    %p468 = por %p466, %p467
    %p469 = scmp.ne.s32.totalorder %s457, %s458
    %p470 = scmp.eq.s32.totalorder %s97, 1
    %p471 = por %p469, %p470
    %p473 = scmp.ne.s32.totalorder %s458, %s472
    %p474 = scmp.eq.s32.totalorder %s97, 0
    %p475 = por %p473, %p474
    %s477 = sadd.s32 %s476, 1
    %p480 = scmp.eq.s32.totalorder %s91, 1
    %p481 = scmp.ne.s32.totalorder %s476, %s478
    %p482 = scmp.eq.s32.totalorder %s91, 0
    %p483 = por %p481, %p482
    %p484 = scmp.ne.s32.totalorder %s476, %s478
    %p485 = scmp.eq.s32.totalorder %s96, 1
    %p486 = por %p484, %p485
    %p487 = scmp.ne.s32.totalorder %s478, %s479
    %p488 = scmp.eq.s32.totalorder %s96, 0
    %p489 = por %p487, %p488
    %p490 = scmp.ne.s32.totalorder %s478, %s479
    %p491 = scmp.eq.s32.totalorder %s97, 1
    %p492 = por %p490, %p491
    %p494 = scmp.ne.s32.totalorder %s479, %s493
    %p495 = scmp.eq.s32.totalorder %s97, 0
    %p496 = por %p494, %p495
    %s498 = sadd.s32 %s497, 1
    %p501 = scmp.eq.s32.totalorder %s91, 1
    %p502 = scmp.ne.s32.totalorder %s497, %s499
    %p503 = scmp.eq.s32.totalorder %s91, 0
    %p504 = por %p502, %p503
    %p505 = scmp.ne.s32.totalorder %s497, %s499
    %p506 = scmp.eq.s32.totalorder %s96, 1
    %p507 = por %p505, %p506
    %p508 = scmp.ne.s32.totalorder %s499, %s500
    %p509 = scmp.eq.s32.totalorder %s96, 0
    %p510 = por %p508, %p509
    %p511 = scmp.ne.s32.totalorder %s499, %s500
    %p512 = scmp.eq.s32.totalorder %s97, 1
    %p513 = por %p511, %p512
    %p515 = scmp.ne.s32.totalorder %s500, %s514
    %p516 = scmp.eq.s32.totalorder %s97, 0
    %p517 = por %p515, %p516
    %s519 = sadd.s32 %s518, 1
    %p522 = scmp.eq.s32.totalorder %s91, 1
    %p523 = scmp.ne.s32.totalorder %s518, %s520
    %p524 = scmp.eq.s32.totalorder %s91, 0
    %p525 = por %p523, %p524
    %p526 = scmp.ne.s32.totalorder %s518, %s520
    %p527 = scmp.eq.s32.totalorder %s96, 1
    %p528 = por %p526, %p527
    %p529 = scmp.ne.s32.totalorder %s520, %s521
    %p530 = scmp.eq.s32.totalorder %s96, 0
    %p531 = por %p529, %p530
    %p532 = scmp.ne.s32.totalorder %s520, %s521
    %p533 = scmp.eq.s32.totalorder %s97, 1
    %p534 = por %p532, %p533
    %p536 = scmp.ne.s32.totalorder %s521, %s535
    %p537 = scmp.eq.s32.totalorder %s97, 0
    %p538 = por %p536, %p537
    %s540 = sadd.s32 %s539, 1
    %p543 = scmp.eq.s32.totalorder %s91, 1
    %p544 = scmp.ne.s32.totalorder %s539, %s541
    %p545 = scmp.eq.s32.totalorder %s91, 0
    %p546 = por %p544, %p545
    %p547 = scmp.ne.s32.totalorder %s539, %s541
    %p548 = scmp.eq.s32.totalorder %s96, 1
    %p549 = por %p547, %p548
    %p550 = scmp.ne.s32.totalorder %s541, %s542
    %p551 = scmp.eq.s32.totalorder %s96, 0
    %p552 = por %p550, %p551
    %p553 = scmp.ne.s32.totalorder %s541, %s542
    %p554 = scmp.eq.s32.totalorder %s97, 1
    %p555 = por %p553, %p554
    %p557 = scmp.ne.s32.totalorder %s542, %s556
    %p558 = scmp.eq.s32.totalorder %s97, 0
    %p559 = por %p557, %p558
    %s561 = sadd.s32 %s560, 1
    %p564 = scmp.eq.s32.totalorder %s91, 1
    %p565 = scmp.ne.s32.totalorder %s560, %s562
    %p566 = scmp.eq.s32.totalorder %s91, 0
    %p567 = por %p565, %p566
    %p568 = scmp.ne.s32.totalorder %s560, %s562
    %p569 = scmp.eq.s32.totalorder %s96, 1
    %p570 = por %p568, %p569
    %p571 = scmp.ne.s32.totalorder %s562, %s563
    %p572 = scmp.eq.s32.totalorder %s96, 0
    %p573 = por %p571, %p572
    %p574 = scmp.ne.s32.totalorder %s562, %s563
    %p575 = scmp.eq.s32.totalorder %s97, 1
    %p576 = por %p574, %p575
    %p578 = scmp.ne.s32.totalorder %s563, %s577
    %p579 = scmp.eq.s32.totalorder %s97, 0
    %p580 = por %p578, %p579
    %s582 = sadd.s32 %s581, 1
    %p585 = scmp.eq.s32.totalorder %s91, 1
    %p586 = scmp.ne.s32.totalorder %s581, %s583
    %p587 = scmp.eq.s32.totalorder %s91, 0
    %p588 = por %p586, %p587
    %p589 = scmp.ne.s32.totalorder %s581, %s583
    %p590 = scmp.eq.s32.totalorder %s96, 1
    %p591 = por %p589, %p590
    %p592 = scmp.ne.s32.totalorder %s583, %s584
    %p593 = scmp.eq.s32.totalorder %s96, 0
    %p594 = por %p592, %p593
    %p595 = scmp.ne.s32.totalorder %s583, %s584
    %p596 = scmp.eq.s32.totalorder %s97, 1
    %p597 = por %p595, %p596
    %p599 = scmp.ne.s32.totalorder %s584, %s598
    %p600 = scmp.eq.s32.totalorder %s97, 0
    %p601 = por %p599, %p600
    %s603 = sadd.s32 %s602, 1
    %p606 = scmp.eq.s32.totalorder %s91, 1
    %p607 = scmp.ne.s32.totalorder %s602, %s604
    %p608 = scmp.eq.s32.totalorder %s91, 0
    %p609 = por %p607, %p608
    %p610 = scmp.ne.s32.totalorder %s602, %s604
    %p611 = scmp.eq.s32.totalorder %s96, 1
    %p612 = por %p610, %p611
    %p613 = scmp.ne.s32.totalorder %s604, %s605
    %p614 = scmp.eq.s32.totalorder %s96, 0
    %p615 = por %p613, %p614
    %p616 = scmp.ne.s32.totalorder %s604, %s605
    %p617 = scmp.eq.s32.totalorder %s97, 1
    %p618 = por %p616, %p617
    %p620 = scmp.ne.s32.totalorder %s605, %s619
    %p621 = scmp.eq.s32.totalorder %s97, 0
    %p622 = por %p620, %p621
    %s624 = sadd.s32 %s623, 1
    %p627 = scmp.eq.s32.totalorder %s91, 1
    %p628 = scmp.ne.s32.totalorder %s623, %s625
    %p629 = scmp.eq.s32.totalorder %s91, 0
    %p630 = por %p628, %p629
    %p631 = scmp.ne.s32.totalorder %s623, %s625
    %p632 = scmp.eq.s32.totalorder %s96, 1
    %p633 = por %p631, %p632
    %p634 = scmp.ne.s32.totalorder %s625, %s626
    %p635 = scmp.eq.s32.totalorder %s96, 0
    %p636 = por %p634, %p635
    %p637 = scmp.ne.s32.totalorder %s625, %s626
    %p638 = scmp.eq.s32.totalorder %s97, 1
    %p639 = por %p637, %p638
    %p641 = scmp.ne.s32.totalorder %s626, %s640
    %p642 = scmp.eq.s32.totalorder %s97, 0
    %p643 = por %p641, %p642
    %s645 = sadd.s32 %s644, 1
    %p648 = scmp.eq.s32.totalorder %s91, 1
    %p649 = scmp.ne.s32.totalorder %s644, %s646
    %p650 = scmp.eq.s32.totalorder %s91, 0
    %p651 = por %p649, %p650
    %p652 = scmp.ne.s32.totalorder %s644, %s646
    %p653 = scmp.eq.s32.totalorder %s96, 1
    %p654 = por %p652, %p653
    %p655 = scmp.ne.s32.totalorder %s646, %s647
    %p656 = scmp.eq.s32.totalorder %s96, 0
    %p657 = por %p655, %p656
    %p658 = scmp.ne.s32.totalorder %s646, %s647
    %p659 = scmp.eq.s32.totalorder %s97, 1
    %p660 = por %p658, %p659
    %p662 = scmp.ne.s32.totalorder %s647, %s661
    %p663 = scmp.eq.s32.totalorder %s97, 0
    %p664 = por %p662, %p663
    %s666 = sadd.s32 %s665, 1
    %p669 = scmp.eq.s32.totalorder %s91, 1
    %p670 = scmp.ne.s32.totalorder %s665, %s667
    %p671 = scmp.eq.s32.totalorder %s91, 0
    %p672 = por %p670, %p671
    %p673 = scmp.ne.s32.totalorder %s665, %s667
    %p674 = scmp.eq.s32.totalorder %s96, 1
    %p675 = por %p673, %p674
    %p676 = scmp.ne.s32.totalorder %s667, %s668
    %p677 = scmp.eq.s32.totalorder %s96, 0
    %p678 = por %p676, %p677
    %p679 = scmp.ne.s32.totalorder %s667, %s668
    %p680 = scmp.eq.s32.totalorder %s97, 1
    %p681 = por %p679, %p680
    %p683 = scmp.ne.s32.totalorder %s668, %s682
    %p684 = scmp.eq.s32.totalorder %s97, 0
    %p685 = por %p683, %p684
    %s687 = sadd.s32 %s686, 1
    %p690 = scmp.eq.s32.totalorder %s91, 1
    %p691 = scmp.ne.s32.totalorder %s686, %s688
    %p692 = scmp.eq.s32.totalorder %s91, 0
    %p693 = por %p691, %p692
    %p694 = scmp.ne.s32.totalorder %s686, %s688
    %p695 = scmp.eq.s32.totalorder %s96, 1
    %p696 = por %p694, %p695
    %p697 = scmp.ne.s32.totalorder %s688, %s689
    %p698 = scmp.eq.s32.totalorder %s96, 0
    %p699 = por %p697, %p698
    %p700 = scmp.ne.s32.totalorder %s688, %s689
    %p701 = scmp.eq.s32.totalorder %s97, 1
    %p702 = por %p700, %p701
    %p704 = scmp.ne.s32.totalorder %s689, %s703
    %p705 = scmp.eq.s32.totalorder %s97, 0
    %p706 = por %p704, %p705
    %s708 = sadd.s32 %s707, 1
    %p711 = scmp.eq.s32.totalorder %s91, 1
    %p712 = scmp.ne.s32.totalorder %s707, %s709
    %p713 = scmp.eq.s32.totalorder %s91, 0
    %p714 = por %p712, %p713
    %p715 = scmp.ne.s32.totalorder %s707, %s709
    %p716 = scmp.eq.s32.totalorder %s96, 1
    %p717 = por %p715, %p716
    %p718 = scmp.ne.s32.totalorder %s709, %s710
    %p719 = scmp.eq.s32.totalorder %s96, 0
    %p720 = por %p718, %p719
    %p721 = scmp.ne.s32.totalorder %s709, %s710
    %p722 = scmp.eq.s32.totalorder %s97, 1
    %p723 = por %p721, %p722
    %p725 = scmp.ne.s32.totalorder %s710, %s724
    %p726 = scmp.eq.s32.totalorder %s97, 0
    %p727 = por %p725, %p726
    %s729 = sadd.s32 %s728, 1
    %p732 = scmp.eq.s32.totalorder %s91, 1
    %p733 = scmp.ne.s32.totalorder %s728, %s730
    %p734 = scmp.eq.s32.totalorder %s91, 0
    %p735 = por %p733, %p734
    %p736 = scmp.ne.s32.totalorder %s728, %s730
    %p737 = scmp.eq.s32.totalorder %s96, 1
    %p738 = por %p736, %p737
    %p739 = scmp.ne.s32.totalorder %s730, %s731
    %p740 = scmp.eq.s32.totalorder %s96, 0
    %p741 = por %p739, %p740
    %p742 = scmp.ne.s32.totalorder %s730, %s731
    %p743 = scmp.eq.s32.totalorder %s97, 1
    %p744 = por %p742, %p743
    %p746 = scmp.ne.s32.totalorder %s731, %s745
    %p747 = scmp.eq.s32.totalorder %s97, 0
    %p748 = por %p746, %p747
    %s750 = sadd.s32 %s749, 1
    %p753 = scmp.eq.s32.totalorder %s91, 1
    %p754 = scmp.ne.s32.totalorder %s749, %s751
    %p755 = scmp.eq.s32.totalorder %s91, 0
    %p756 = por %p754, %p755
    %p757 = scmp.ne.s32.totalorder %s749, %s751
    %p758 = scmp.eq.s32.totalorder %s96, 1
    %p759 = por %p757, %p758
    %p760 = scmp.ne.s32.totalorder %s751, %s752
    %p761 = scmp.eq.s32.totalorder %s96, 0
    %p762 = por %p760, %p761
    %p763 = scmp.ne.s32.totalorder %s751, %s752
    %p764 = scmp.eq.s32.totalorder %s97, 1
    %p765 = por %p763, %p764
    %p767 = scmp.ne.s32.totalorder %s752, %s766
    %p768 = scmp.eq.s32.totalorder %s97, 0
    %p769 = por %p767, %p768
    %s771 = sadd.s32 %s770, 1
    %p774 = scmp.eq.s32.totalorder %s91, 1
    %p775 = scmp.ne.s32.totalorder %s770, %s772
    %p776 = scmp.eq.s32.totalorder %s91, 0
    %p777 = por %p775, %p776
    %p778 = scmp.ne.s32.totalorder %s770, %s772
    %p779 = scmp.eq.s32.totalorder %s96, 1
    %p780 = por %p778, %p779
    %p781 = scmp.ne.s32.totalorder %s772, %s773
    %p782 = scmp.eq.s32.totalorder %s96, 0
    %p783 = por %p781, %p782
    %p784 = scmp.ne.s32.totalorder %s772, %s773
    %p785 = scmp.eq.s32.totalorder %s97, 1
    %p786 = por %p784, %p785
    %p788 = scmp.ne.s32.totalorder %s773, %s787
    %p789 = scmp.eq.s32.totalorder %s97, 0
    %p790 = por %p788, %p789
    %s792 = sadd.s32 %s791, 1
    %p795 = scmp.eq.s32.totalorder %s91, 1
    %p796 = scmp.ne.s32.totalorder %s791, %s793
    %p797 = scmp.eq.s32.totalorder %s91, 0
    %p798 = por %p796, %p797
    %p799 = scmp.ne.s32.totalorder %s791, %s793
    %p800 = scmp.eq.s32.totalorder %s96, 1
    %p801 = por %p799, %p800
    %p802 = scmp.ne.s32.totalorder %s793, %s794
    %p803 = scmp.eq.s32.totalorder %s96, 0
    %p804 = por %p802, %p803
    %p805 = scmp.ne.s32.totalorder %s793, %s794
    %p806 = scmp.eq.s32.totalorder %s97, 1
    %p807 = por %p805, %p806
    %p809 = scmp.ne.s32.totalorder %s794, %s808
    %p810 = scmp.eq.s32.totalorder %s97, 0
    %p811 = por %p809, %p810
    %s813 = sadd.s32 %s812, 1
    %p816 = scmp.eq.s32.totalorder %s91, 1
    %p817 = scmp.ne.s32.totalorder %s812, %s814
    %p818 = scmp.eq.s32.totalorder %s91, 0
    %p819 = por %p817, %p818
    %p820 = scmp.ne.s32.totalorder %s812, %s814
    %p821 = scmp.eq.s32.totalorder %s96, 1
    %p822 = por %p820, %p821
    %p823 = scmp.ne.s32.totalorder %s814, %s815
    %p824 = scmp.eq.s32.totalorder %s96, 0
    %p825 = por %p823, %p824
    %p826 = scmp.ne.s32.totalorder %s814, %s815
    %p827 = scmp.eq.s32.totalorder %s97, 1
    %p828 = por %p826, %p827
    %p830 = scmp.ne.s32.totalorder %s815, %s829
    %p831 = scmp.eq.s32.totalorder %s97, 0
    %p832 = por %p830, %p831
    %s834 = sadd.s32 %s833, 1
    %p837 = scmp.eq.s32.totalorder %s91, 1
    %p838 = scmp.ne.s32.totalorder %s833, %s835
    %p839 = scmp.eq.s32.totalorder %s91, 0
    %p840 = por %p838, %p839
    %p841 = scmp.ne.s32.totalorder %s833, %s835
    %p842 = scmp.eq.s32.totalorder %s96, 1
    %p843 = por %p841, %p842
    %p844 = scmp.ne.s32.totalorder %s835, %s836
    %p845 = scmp.eq.s32.totalorder %s96, 0
    %p846 = por %p844, %p845
    %p847 = scmp.ne.s32.totalorder %s835, %s836
    %p848 = scmp.eq.s32.totalorder %s97, 1
    %p849 = por %p847, %p848
    %p851 = scmp.ne.s32.totalorder %s836, %s850
    %p852 = scmp.eq.s32.totalorder %s97, 0
    %p853 = por %p851, %p852
    %s855 = sadd.s32 %s854, 1
    %p858 = scmp.eq.s32.totalorder %s91, 1
    %p859 = scmp.ne.s32.totalorder %s854, %s856
    %p860 = scmp.eq.s32.totalorder %s91, 0
    %p861 = por %p859, %p860
    %p862 = scmp.ne.s32.totalorder %s854, %s856
    %p863 = scmp.eq.s32.totalorder %s96, 1
    %p864 = por %p862, %p863
    %p865 = scmp.ne.s32.totalorder %s856, %s857
    %p866 = scmp.eq.s32.totalorder %s96, 0
    %p867 = por %p865, %p866
    %p868 = scmp.ne.s32.totalorder %s856, %s857
    %p869 = scmp.eq.s32.totalorder %s97, 1
    %p870 = por %p868, %p869
    %p872 = scmp.ne.s32.totalorder %s857, %s871
    %p873 = scmp.eq.s32.totalorder %s97, 0
    %p874 = por %p872, %p873
    %s876 = sadd.s32 %s875, 1
    %p879 = scmp.eq.s32.totalorder %s91, 1
    %p880 = scmp.ne.s32.totalorder %s875, %s877
    %p881 = scmp.eq.s32.totalorder %s91, 0
    %p882 = por %p880, %p881
    %p883 = scmp.ne.s32.totalorder %s875, %s877
    %p884 = scmp.eq.s32.totalorder %s96, 1
    %p885 = por %p883, %p884
    %p886 = scmp.ne.s32.totalorder %s877, %s878
    %p887 = scmp.eq.s32.totalorder %s96, 0
    %p888 = por %p886, %p887
    %p889 = scmp.ne.s32.totalorder %s877, %s878
    %p890 = scmp.eq.s32.totalorder %s97, 1
    %p891 = por %p889, %p890
    %p893 = scmp.ne.s32.totalorder %s878, %s892
    %p894 = scmp.eq.s32.totalorder %s97, 0
    %p895 = por %p893, %p894
    %s897 = sadd.s32 %s896, 1
    %p900 = scmp.eq.s32.totalorder %s91, 1
    %p901 = scmp.ne.s32.totalorder %s896, %s898
    %p902 = scmp.eq.s32.totalorder %s91, 0
    %p903 = por %p901, %p902
    %p904 = scmp.ne.s32.totalorder %s896, %s898
    %p905 = scmp.eq.s32.totalorder %s96, 1
    %p906 = por %p904, %p905
    %p907 = scmp.ne.s32.totalorder %s898, %s899
    %p908 = scmp.eq.s32.totalorder %s96, 0
    %p909 = por %p907, %p908
    %p910 = scmp.ne.s32.totalorder %s898, %s899
    %p911 = scmp.eq.s32.totalorder %s97, 1
    %p912 = por %p910, %p911
    %p914 = scmp.ne.s32.totalorder %s899, %s913
    %p915 = scmp.eq.s32.totalorder %s97, 0
    %p916 = por %p914, %p915
    %s918 = sadd.s32 %s917, 1
    %p921 = scmp.eq.s32.totalorder %s91, 1
    %p922 = scmp.ne.s32.totalorder %s917, %s919
    %p923 = scmp.eq.s32.totalorder %s91, 0
    %p924 = por %p922, %p923
    %p925 = scmp.ne.s32.totalorder %s917, %s919
    %p926 = scmp.eq.s32.totalorder %s96, 1
    %p927 = por %p925, %p926
    %p928 = scmp.ne.s32.totalorder %s919, %s920
    %p929 = scmp.eq.s32.totalorder %s96, 0
    %p930 = por %p928, %p929
    %p931 = scmp.ne.s32.totalorder %s919, %s920
    %p932 = scmp.eq.s32.totalorder %s97, 1
    %p933 = por %p931, %p932
    %p935 = scmp.ne.s32.totalorder %s920, %s934
    %p936 = scmp.eq.s32.totalorder %s97, 0
    %p937 = por %p935, %p936
    %s939 = sadd.s32 %s938, 1
    %p942 = scmp.eq.s32.totalorder %s91, 1
    %p943 = scmp.ne.s32.totalorder %s938, %s940
    %p944 = scmp.eq.s32.totalorder %s91, 0
    %p945 = por %p943, %p944
    %p946 = scmp.ne.s32.totalorder %s938, %s940
    %p947 = scmp.eq.s32.totalorder %s96, 1
    %p948 = por %p946, %p947
    %p949 = scmp.ne.s32.totalorder %s940, %s941
    %p950 = scmp.eq.s32.totalorder %s96, 0
    %p951 = por %p949, %p950
    %p952 = scmp.ne.s32.totalorder %s940, %s941
    %p953 = scmp.eq.s32.totalorder %s97, 1
    %p954 = por %p952, %p953
    %p956 = scmp.ne.s32.totalorder %s941, %s955
    %p957 = scmp.eq.s32.totalorder %s97, 0
    %p958 = por %p956, %p957
    %s960 = sadd.s32 %s959, 1
    %p963 = scmp.eq.s32.totalorder %s91, 1
    %p964 = scmp.ne.s32.totalorder %s959, %s961
    %p965 = scmp.eq.s32.totalorder %s91, 0
    %p966 = por %p964, %p965
    %p967 = scmp.ne.s32.totalorder %s959, %s961
    %p968 = scmp.eq.s32.totalorder %s96, 1
    %p969 = por %p967, %p968
    %p970 = scmp.ne.s32.totalorder %s961, %s962
    %p971 = scmp.eq.s32.totalorder %s96, 0
    %p972 = por %p970, %p971
    %p973 = scmp.ne.s32.totalorder %s961, %s962
    %p974 = scmp.eq.s32.totalorder %s97, 1
    %p975 = por %p973, %p974
    %p977 = scmp.ne.s32.totalorder %s962, %s976
    %p978 = scmp.eq.s32.totalorder %s97, 0
    %p979 = por %p977, %p978
    %s981 = sadd.s32 %s980, 1
    %p984 = scmp.eq.s32.totalorder %s91, 1
    %p985 = scmp.ne.s32.totalorder %s980, %s982
    %p986 = scmp.eq.s32.totalorder %s91, 0
    %p987 = por %p985, %p986
    %p988 = scmp.ne.s32.totalorder %s980, %s982
    %p989 = scmp.eq.s32.totalorder %s96, 1
    %p990 = por %p988, %p989
    %p991 = scmp.ne.s32.totalorder %s982, %s983
    %p992 = scmp.eq.s32.totalorder %s96, 0
    %p993 = por %p991, %p992
    %p994 = scmp.ne.s32.totalorder %s982, %s983
    %p995 = scmp.eq.s32.totalorder %s97, 1
    %p996 = por %p994, %p995
    %p998 = scmp.ne.s32.totalorder %s983, %s997
    %p999 = scmp.eq.s32.totalorder %s97, 0
    %p1000 = por %p998, %p999
    %s1001 = ssub.s32 %s91, %s98
    %p1002 = scmp.eq.s32.totalorder %s1001, 0
    %s1004 = sadd.s32 %s1003, 1
    %s1005 = scalar_select %p1002, %s1003, %s1004
    %p1008 = pneg %p1002
    %p1009 = scmp.eq.s32.totalorder %s91, 1
    %p1010 = por %p1008, %p1009
    %p1011 = scmp.ne.s32.totalorder %s1003, %s1006
    %p1012 = scmp.eq.s32.totalorder %s91, 0
    %p1013 = por %p1011, %p1012
    %p1014 = scmp.ne.s32.totalorder %s1003, %s1006
    %p1015 = scmp.eq.s32.totalorder %s96, 1
    %p1016 = por %p1014, %p1015
    %p1017 = scmp.ne.s32.totalorder %s1006, %s1007
    %p1018 = scmp.eq.s32.totalorder %s96, 0
    %p1019 = por %p1017, %p1018
    %p1020 = scmp.ne.s32.totalorder %s1006, %s1007
    %p1021 = scmp.eq.s32.totalorder %s97, 1
    %p1022 = por %p1020, %p1021
    %p1024 = scmp.ne.s32.totalorder %s1007, %s1023
    %p1025 = scmp.eq.s32.totalorder %s97, 0
    %p1026 = por %p1024, %p1025
    %p1027 = scmp.le.s32.totalorder 1, %s91
    %p1028 = scmp.lt.s32.totalorder %s91, 3
    %p1029 = pnand %p1027, %p1028
    %p1030 = pneg %p1029
    // Predicated region
    $region9: #{motion_prediction_forward.1} parent=5 // pred_check
      _
    $region10: #{motion_prediction_forward.1} parent=5 // pred_check_branch
      %1032 = sbr.rel (%p1029) target = $region12
    $region11: #{motion_prediction_forward.1} parent=5 // pred_region
      %s1033 = ssub.s32 %s91, 1
      // Predicated region
      $region13: #{motion_prediction_forward.1} parent=11 // pred_check
        %p1034 = pneg %p216
      $region14: #{motion_prediction_forward.1} parent=11 // pred_check_branch
        %1036 = sbr.rel (%p1034) target = $region16
      $region15: #{motion_prediction_forward.1} parent=11 // pred_region
        _
      $region16: #{motion_prediction_forward.1} parent=11 // pred_fallthru
        _
      // Predicated region
      $region17: #{motion_prediction_forward.1} parent=11 // pred_check
        %p1037 = pneg %p237
      $region18: #{motion_prediction_forward.1} parent=11 // pred_check_branch
        %1039 = sbr.rel (%p1037) target = $region20
      $region19: #{motion_prediction_forward.1} parent=11 // pred_region
        _
      $region20: #{motion_prediction_forward.1} parent=11 // pred_fallthru
        _
      // Predicated region
      $region21: #{motion_prediction_forward.1} parent=11 // pred_check
        %p1040 = pneg %p258
      $region22: #{motion_prediction_forward.1} parent=11 // pred_check_branch
        %1042 = sbr.rel (%p1040) target = $region24
      $region23: #{motion_prediction_forward.1} parent=11 // pred_region
        _
      $region24: #{motion_prediction_forward.1} parent=11 // pred_fallthru
        _
      // Predicated region
      $region25: #{motion_prediction_forward.1} parent=11 // pred_check
        %p1043 = pneg %p279
      $region26: #{motion_prediction_forward.1} parent=11 // pred_check_branch
        %1045 = sbr.rel (%p1043) target = $region28
      $region27: #{motion_prediction_forward.1} parent=11 // pred_region
        _
      $region28: #{motion_prediction_forward.1} parent=11 // pred_fallthru
        _
      // Predicated region
      $region29: #{motion_prediction_forward.1} parent=11 // pred_check
        %p1046 = pneg %p300
      $region30: #{motion_prediction_forward.1} parent=11 // pred_check_branch
        %1048 = sbr.rel (%p1046) target = $region32
      $region31: #{motion_prediction_forward.1} parent=11 // pred_region
        _
      $region32: #{motion_prediction_forward.1} parent=11 // pred_fallthru
        _
      // Predicated region
      $region33: #{motion_prediction_forward.1} parent=11 // pred_check
        %p1049 = pneg %p321
      $region34: #{motion_prediction_forward.1} parent=11 // pred_check_branch
        %1051 = sbr.rel (%p1049) target = $region36
      $region35: #{motion_prediction_forward.1} parent=11 // pred_region
        _
      $region36: #{motion_prediction_forward.1} parent=11 // pred_fallthru
        _
      // Predicated region
      $region37: #{motion_prediction_forward.1} parent=11 // pred_check
        %p1052 = pneg %p342
      $region38: #{motion_prediction_forward.1} parent=11 // pred_check_branch
        %1054 = sbr.rel (%p1052) target = $region40
      $region39: #{motion_prediction_forward.1} parent=11 // pred_region
        _
      $region40: #{motion_prediction_forward.1} parent=11 // pred_fallthru
        _
      // Predicated region
      $region41: #{motion_prediction_forward.1} parent=11 // pred_check
        %p1055 = pneg %p363
      $region42: #{motion_prediction_forward.1} parent=11 // pred_check_branch
        %1057 = sbr.rel (%p1055) target = $region44
      $region43: #{motion_prediction_forward.1} parent=11 // pred_region
        _
      $region44: #{motion_prediction_forward.1} parent=11 // pred_fallthru
        _
      // Predicated region
      $region45: #{motion_prediction_forward.1} parent=11 // pred_check
        %p1058 = pneg %p384
      $region46: #{motion_prediction_forward.1} parent=11 // pred_check_branch
        %1060 = sbr.rel (%p1058) target = $region48
      $region47: #{motion_prediction_forward.1} parent=11 // pred_region
        _
      $region48: #{motion_prediction_forward.1} parent=11 // pred_fallthru
        _
      // Predicated region
      $region49: #{motion_prediction_forward.1} parent=11 // pred_check
        %p1061 = pneg %p405
      $region50: #{motion_prediction_forward.1} parent=11 // pred_check_branch
        %1063 = sbr.rel (%p1061) target = $region52
      $region51: #{motion_prediction_forward.1} parent=11 // pred_region
        _
      $region52: #{motion_prediction_forward.1} parent=11 // pred_fallthru
        _
      // Predicated region
      $region53: #{motion_prediction_forward.1} parent=11 // pred_check
        %p1064 = pneg %p426
      $region54: #{motion_prediction_forward.1} parent=11 // pred_check_branch
        %1066 = sbr.rel (%p1064) target = $region56
      $region55: #{motion_prediction_forward.1} parent=11 // pred_region
        _
      $region56: #{motion_prediction_forward.1} parent=11 // pred_fallthru
        _
      // Predicated region
      $region57: #{motion_prediction_forward.1} parent=11 // pred_check
        %p1067 = pneg %p447
      $region58: #{motion_prediction_forward.1} parent=11 // pred_check_branch
        %1069 = sbr.rel (%p1067) target = $region60
      $region59: #{motion_prediction_forward.1} parent=11 // pred_region
        _
      $region60: #{motion_prediction_forward.1} parent=11 // pred_fallthru
        _
      // Predicated region
      $region61: #{motion_prediction_forward.1} parent=11 // pred_check
        %p1070 = pneg %p468
      $region62: #{motion_prediction_forward.1} parent=11 // pred_check_branch
        %1072 = sbr.rel (%p1070) target = $region64
      $region63: #{motion_prediction_forward.1} parent=11 // pred_region
        _
      $region64: #{motion_prediction_forward.1} parent=11 // pred_fallthru
        _
      // Predicated region
      $region65: #{motion_prediction_forward.1} parent=11 // pred_check
        %p1073 = pneg %p489
      $region66: #{motion_prediction_forward.1} parent=11 // pred_check_branch
        %1075 = sbr.rel (%p1073) target = $region68
      $region67: #{motion_prediction_forward.1} parent=11 // pred_region
        _
      $region68: #{motion_prediction_forward.1} parent=11 // pred_fallthru
        _
      // Predicated region
      $region69: #{motion_prediction_forward.1} parent=11 // pred_check
        %p1076 = pneg %p510
      $region70: #{motion_prediction_forward.1} parent=11 // pred_check_branch
        %1078 = sbr.rel (%p1076) target = $region72
      $region71: #{motion_prediction_forward.1} parent=11 // pred_region
        _
      $region72: #{motion_prediction_forward.1} parent=11 // pred_fallthru
        _
      // Predicated region
      $region73: #{motion_prediction_forward.1} parent=11 // pred_check
        %p1079 = pneg %p531
      $region74: #{motion_prediction_forward.1} parent=11 // pred_check_branch
        %1081 = sbr.rel (%p1079) target = $region76
      $region75: #{motion_prediction_forward.1} parent=11 // pred_region
        _
      $region76: #{motion_prediction_forward.1} parent=11 // pred_fallthru
        _
      // Predicated region
      $region77: #{motion_prediction_forward.1} parent=11 // pred_check
        %p1082 = pneg %p552
      $region78: #{motion_prediction_forward.1} parent=11 // pred_check_branch
        %1084 = sbr.rel (%p1082) target = $region80
      $region79: #{motion_prediction_forward.1} parent=11 // pred_region
        _
      $region80: #{motion_prediction_forward.1} parent=11 // pred_fallthru
        _
      // Predicated region
      $region81: #{motion_prediction_forward.1} parent=11 // pred_check
        %p1085 = pneg %p573
      $region82: #{motion_prediction_forward.1} parent=11 // pred_check_branch
        %1087 = sbr.rel (%p1085) target = $region84
      $region83: #{motion_prediction_forward.1} parent=11 // pred_region
        _
      $region84: #{motion_prediction_forward.1} parent=11 // pred_fallthru
        _
      // Predicated region
      $region85: #{motion_prediction_forward.1} parent=11 // pred_check
        %p1088 = pneg %p594
      $region86: #{motion_prediction_forward.1} parent=11 // pred_check_branch
        %1090 = sbr.rel (%p1088) target = $region88
      $region87: #{motion_prediction_forward.1} parent=11 // pred_region
        _
      $region88: #{motion_prediction_forward.1} parent=11 // pred_fallthru
        _
      // Predicated region
      $region89: #{motion_prediction_forward.1} parent=11 // pred_check
        %p1091 = pneg %p615
      $region90: #{motion_prediction_forward.1} parent=11 // pred_check_branch
        %1093 = sbr.rel (%p1091) target = $region92
      $region91: #{motion_prediction_forward.1} parent=11 // pred_region
        _
      $region92: #{motion_prediction_forward.1} parent=11 // pred_fallthru
        _
      // Predicated region
      $region93: #{motion_prediction_forward.1} parent=11 // pred_check
        %p1094 = pneg %p636
      $region94: #{motion_prediction_forward.1} parent=11 // pred_check_branch
        %1096 = sbr.rel (%p1094) target = $region96
      $region95: #{motion_prediction_forward.1} parent=11 // pred_region
        _
      $region96: #{motion_prediction_forward.1} parent=11 // pred_fallthru
        _
      // Predicated region
      $region97: #{motion_prediction_forward.1} parent=11 // pred_check
        %p1097 = pneg %p657
      $region98: #{motion_prediction_forward.1} parent=11 // pred_check_branch
        %1099 = sbr.rel (%p1097) target = $region100
      $region99: #{motion_prediction_forward.1} parent=11 // pred_region
        _
      $region100: #{motion_prediction_forward.1} parent=11 // pred_fallthru
        _
      // Predicated region
      $region101: #{motion_prediction_forward.1} parent=11 // pred_check
        %p1100 = pneg %p678
      $region102: #{motion_prediction_forward.1} parent=11 // pred_check_branch
        %1102 = sbr.rel (%p1100) target = $region104
      $region103: #{motion_prediction_forward.1} parent=11 // pred_region
        _
      $region104: #{motion_prediction_forward.1} parent=11 // pred_fallthru
        _
      // Predicated region
      $region105: #{motion_prediction_forward.1} parent=11 // pred_check
        %p1103 = pneg %p699
      $region106: #{motion_prediction_forward.1} parent=11 // pred_check_branch
        %1105 = sbr.rel (%p1103) target = $region108
      $region107: #{motion_prediction_forward.1} parent=11 // pred_region
        _
      $region108: #{motion_prediction_forward.1} parent=11 // pred_fallthru
        _
      // Predicated region
      $region109: #{motion_prediction_forward.1} parent=11 // pred_check
        %p1106 = pneg %p720
      $region110: #{motion_prediction_forward.1} parent=11 // pred_check_branch
        %1108 = sbr.rel (%p1106) target = $region112
      $region111: #{motion_prediction_forward.1} parent=11 // pred_region
        _
      $region112: #{motion_prediction_forward.1} parent=11 // pred_fallthru
        _
      // Predicated region
      $region113: #{motion_prediction_forward.1} parent=11 // pred_check
        %p1109 = pneg %p741
      $region114: #{motion_prediction_forward.1} parent=11 // pred_check_branch
        %1111 = sbr.rel (%p1109) target = $region116
      $region115: #{motion_prediction_forward.1} parent=11 // pred_region
        _
      $region116: #{motion_prediction_forward.1} parent=11 // pred_fallthru
        _
      // Predicated region
      $region117: #{motion_prediction_forward.1} parent=11 // pred_check
        %p1112 = pneg %p762
      $region118: #{motion_prediction_forward.1} parent=11 // pred_check_branch
        %1114 = sbr.rel (%p1112) target = $region120
      $region119: #{motion_prediction_forward.1} parent=11 // pred_region
        _
      $region120: #{motion_prediction_forward.1} parent=11 // pred_fallthru
        _
      // Predicated region
      $region121: #{motion_prediction_forward.1} parent=11 // pred_check
        %p1115 = pneg %p783
      $region122: #{motion_prediction_forward.1} parent=11 // pred_check_branch
        %1117 = sbr.rel (%p1115) target = $region124
      $region123: #{motion_prediction_forward.1} parent=11 // pred_region
        _
      $region124: #{motion_prediction_forward.1} parent=11 // pred_fallthru
        _
      // Predicated region
      $region125: #{motion_prediction_forward.1} parent=11 // pred_check
        %p1118 = pneg %p804
      $region126: #{motion_prediction_forward.1} parent=11 // pred_check_branch
        %1120 = sbr.rel (%p1118) target = $region128
      $region127: #{motion_prediction_forward.1} parent=11 // pred_region
        _
      $region128: #{motion_prediction_forward.1} parent=11 // pred_fallthru
        _
      // Predicated region
      $region129: #{motion_prediction_forward.1} parent=11 // pred_check
        %p1121 = pneg %p825
      $region130: #{motion_prediction_forward.1} parent=11 // pred_check_branch
        %1123 = sbr.rel (%p1121) target = $region132
      $region131: #{motion_prediction_forward.1} parent=11 // pred_region
        _
      $region132: #{motion_prediction_forward.1} parent=11 // pred_fallthru
        _
      // Predicated region
      $region133: #{motion_prediction_forward.1} parent=11 // pred_check
        %p1124 = pneg %p846
      $region134: #{motion_prediction_forward.1} parent=11 // pred_check_branch
        %1126 = sbr.rel (%p1124) target = $region136
      $region135: #{motion_prediction_forward.1} parent=11 // pred_region
        _
      $region136: #{motion_prediction_forward.1} parent=11 // pred_fallthru
        _
      // Predicated region
      $region137: #{motion_prediction_forward.1} parent=11 // pred_check
        %p1127 = pneg %p867
      $region138: #{motion_prediction_forward.1} parent=11 // pred_check_branch
        %1129 = sbr.rel (%p1127) target = $region140
      $region139: #{motion_prediction_forward.1} parent=11 // pred_region
        _
      $region140: #{motion_prediction_forward.1} parent=11 // pred_fallthru
        _
      // Predicated region
      $region141: #{motion_prediction_forward.1} parent=11 // pred_check
        %p1130 = pneg %p888
      $region142: #{motion_prediction_forward.1} parent=11 // pred_check_branch
        %1132 = sbr.rel (%p1130) target = $region144
      $region143: #{motion_prediction_forward.1} parent=11 // pred_region
        _
      $region144: #{motion_prediction_forward.1} parent=11 // pred_fallthru
        _
      // Predicated region
      $region145: #{motion_prediction_forward.1} parent=11 // pred_check
        %p1133 = pneg %p909
      $region146: #{motion_prediction_forward.1} parent=11 // pred_check_branch
        %1135 = sbr.rel (%p1133) target = $region148
      $region147: #{motion_prediction_forward.1} parent=11 // pred_region
        _
      $region148: #{motion_prediction_forward.1} parent=11 // pred_fallthru
        _
      // Predicated region
      $region149: #{motion_prediction_forward.1} parent=11 // pred_check
        %p1136 = pneg %p930
      $region150: #{motion_prediction_forward.1} parent=11 // pred_check_branch
        %1138 = sbr.rel (%p1136) target = $region152
      $region151: #{motion_prediction_forward.1} parent=11 // pred_region
        _
      $region152: #{motion_prediction_forward.1} parent=11 // pred_fallthru
        _
      // Predicated region
      $region153: #{motion_prediction_forward.1} parent=11 // pred_check
        %p1139 = pneg %p951
      $region154: #{motion_prediction_forward.1} parent=11 // pred_check_branch
        %1141 = sbr.rel (%p1139) target = $region156
      $region155: #{motion_prediction_forward.1} parent=11 // pred_region
        _
      $region156: #{motion_prediction_forward.1} parent=11 // pred_fallthru
        _
      // Predicated region
      $region157: #{motion_prediction_forward.1} parent=11 // pred_check
        %p1142 = pneg %p972
      $region158: #{motion_prediction_forward.1} parent=11 // pred_check_branch
        %1144 = sbr.rel (%p1142) target = $region160
      $region159: #{motion_prediction_forward.1} parent=11 // pred_region
        _
      $region160: #{motion_prediction_forward.1} parent=11 // pred_fallthru
        _
      // Predicated region
      $region161: #{motion_prediction_forward.1} parent=11 // pred_check
        %p1145 = pneg %p993
      $region162: #{motion_prediction_forward.1} parent=11 // pred_check_branch
        %1147 = sbr.rel (%p1145) target = $region164
      $region163: #{motion_prediction_forward.1} parent=11 // pred_region
        _
      $region164: #{motion_prediction_forward.1} parent=11 // pred_fallthru
        _
    $region12: #{motion_prediction_forward.1} parent=5 // pred_fallthru
      _
    %p1148 = scmp.lt.s32.totalorder %s91, 2
    // Predicated region
    $region165: #{motion_prediction_forward.1} parent=5 // pred_check
      %p1149 = pneg %p1148
    $region166: #{motion_prediction_forward.1} parent=5 // pred_check_branch
      %1151 = sbr.rel (%p1149) target = $region168
    $region167: #{motion_prediction_forward.1} parent=5 // pred_region
      // Predicated region
      $region169: #{motion_prediction_forward.1} parent=167 // pred_check
        %p1152 = pneg %p111
      $region170: #{motion_prediction_forward.1} parent=167 // pred_check_branch
        %1154 = sbr.rel (%p1152) target = $region172
      $region171: #{motion_prediction_forward.1} parent=167 // pred_region
        %p1155 = scmp.lt.s32.totalorder %s91, 1
        %s1156 = scalar_select %p1155, %s91, 1
        %s1157 = smul.addr %s1156, 8
        %s1158 = scalar_lea.vmem %s1, %s1157
      $region172: #{motion_prediction_forward.1} parent=167 // pred_fallthru
        _
      // Predicated region
      $region173: #{motion_prediction_forward.1} parent=167 // pred_check
        %p1159 = pneg %p137
      $region174: #{motion_prediction_forward.1} parent=167 // pred_check_branch
        %1161 = sbr.rel (%p1159) target = $region176
      $region175: #{motion_prediction_forward.1} parent=167 // pred_region
        %p1162 = scmp.lt.s32.totalorder %s91, 1
        %s1163 = scalar_select %p1162, %s91, 1
        %s1164 = smul.addr %s1163, 8
        %s1165 = scalar_lea.vmem %s3, %s1164
      $region176: #{motion_prediction_forward.1} parent=167 // pred_fallthru
        _
      // Predicated region
      $region177: #{motion_prediction_forward.1} parent=167 // pred_check
        %p1166 = pneg %p163
      $region178: #{motion_prediction_forward.1} parent=167 // pred_check_branch
        %1168 = sbr.rel (%p1166) target = $region180
      $region179: #{motion_prediction_forward.1} parent=167 // pred_region
        %p1169 = scmp.lt.s32.totalorder %s91, 1
        %s1170 = scalar_select %p1169, %s91, 1
        %s1171 = smul.addr %s1170, 8
        %s1172 = scalar_lea.vmem %s5, %s1171
      $region180: #{motion_prediction_forward.1} parent=167 // pred_fallthru
        _
      // Predicated region
      $region181: #{motion_prediction_forward.1} parent=167 // pred_check
        %p1173 = pneg %p189
      $region182: #{motion_prediction_forward.1} parent=167 // pred_check_branch
        %1175 = sbr.rel (%p1173) target = $region184
      $region183: #{motion_prediction_forward.1} parent=167 // pred_region
        %p1176 = scmp.lt.s32.totalorder %s91, 1
        %s1177 = scalar_select %p1176, %s91, 1
        %s1178 = smul.addr %s1177, 8
        %s1179 = scalar_lea.vmem %s7, %s1178
      $region184: #{motion_prediction_forward.1} parent=167 // pred_fallthru
        _
    $region168: #{motion_prediction_forward.1} parent=5 // pred_fallthru
      _
    %p1180 = scmp.le.s32.totalorder 1, %s91
    %p1181 = scmp.lt.s32.totalorder %s91, 3
    %p1182 = pnand %p1180, %p1181
    %p1183 = pneg %p1182
    // Predicated region
    $region185: #{motion_prediction_forward.1} parent=5 // pred_check
      _
    $region186: #{motion_prediction_forward.1} parent=5 // pred_check_branch
      %1185 = sbr.rel (%p1182) target = $region188
    $region187: #{motion_prediction_forward.1} parent=5 // pred_region
      %s1186 = ssub.s32 %s91, 1
      %p1187 = scmp.lt.s32.totalorder %s96, 1
      %s1188 = scalar_select %p1187, %s96, 1
      %s1189 = smul.addr %s1188, 8
      %s1190 = scalar_lea.vmem %s1, %s1189
      %p1191 = pneg %p117
      %p1192 = pneg %p114
      %p1193 = scmp.lt.s32.totalorder %s96, 1
      %s1194 = scalar_select %p1193, %s96, 1
      %s1195 = smul.addr %s1194, 8
      %s1196 = scalar_lea.vmem %s3, %s1195
      %p1197 = pneg %p143
      %p1198 = pneg %p140
      %p1199 = scmp.lt.s32.totalorder %s96, 1
      %s1200 = scalar_select %p1199, %s96, 1
      %s1201 = smul.addr %s1200, 8
      %s1202 = scalar_lea.vmem %s5, %s1201
      %p1203 = pneg %p169
      %p1204 = pneg %p166
      %p1205 = scmp.lt.s32.totalorder %s96, 1
      %s1206 = scalar_select %p1205, %s96, 1
      %s1207 = smul.addr %s1206, 8
      %s1208 = scalar_lea.vmem %s7, %s1207
      %p1209 = pneg %p195
      %p1210 = pneg %p192
      %p1211 = pneg %p216
      %p1212 = pneg %p213
      %p1213 = pneg %p237
      %p1214 = pneg %p234
      %p1215 = pneg %p258
      %p1216 = pneg %p255
      %p1217 = pneg %p279
      %p1218 = pneg %p276
      %p1219 = pneg %p300
      %p1220 = pneg %p297
      %p1221 = pneg %p321
      %p1222 = pneg %p318
      %p1223 = pneg %p342
      %p1224 = pneg %p339
      %p1225 = pneg %p363
      %p1226 = pneg %p360
      %p1227 = pneg %p384
      %p1228 = pneg %p381
      %p1229 = pneg %p405
      %p1230 = pneg %p402
      %p1231 = pneg %p426
      %p1232 = pneg %p423
      %p1233 = pneg %p447
      %p1234 = pneg %p444
      %p1235 = pneg %p468
      %p1236 = pneg %p465
      %p1237 = pneg %p489
      %p1238 = pneg %p486
      %p1239 = pneg %p510
      %p1240 = pneg %p507
      %p1241 = pneg %p531
      %p1242 = pneg %p528
      %p1243 = pneg %p552
      %p1244 = pneg %p549
      %p1245 = pneg %p573
      %p1246 = pneg %p570
      %p1247 = pneg %p594
      %p1248 = pneg %p591
      %p1249 = pneg %p615
      %p1250 = pneg %p612
      %p1251 = pneg %p636
      %p1252 = pneg %p633
      %p1253 = pneg %p657
      %p1254 = pneg %p654
      %p1255 = pneg %p678
      %p1256 = pneg %p675
      %p1257 = pneg %p699
      %p1258 = pneg %p696
      %p1259 = pneg %p720
      %p1260 = pneg %p717
      %p1261 = pneg %p741
      %p1262 = pneg %p738
      %p1263 = pneg %p762
      %p1264 = pneg %p759
      %p1265 = pneg %p783
      %p1266 = pneg %p780
      %p1267 = pneg %p804
      %p1268 = pneg %p801
      %p1269 = pneg %p825
      %p1270 = pneg %p822
      %p1271 = pneg %p846
      %p1272 = pneg %p843
      %p1273 = pneg %p867
      %p1274 = pneg %p864
      %p1275 = pneg %p888
      %p1276 = pneg %p885
      %p1277 = pneg %p909
      %p1278 = pneg %p906
      %p1279 = pneg %p930
      %p1280 = pneg %p927
      %p1281 = pneg %p951
      %p1282 = pneg %p948
      %p1283 = pneg %p972
      %p1284 = pneg %p969
      %p1285 = pneg %p993
      %p1286 = pneg %p990
      %p1287 = pneg %p1019
      %p1288 = pneg %p1016
      %p1289 = scmp.lt.s32.totalorder %s96, 1
      %s1290 = scalar_select %p1289, %s96, 1
      %s1291 = smul.addr %s1290, 8
      %s1292 = scalar_lea.vmem %s85, %s1291
      %p1293 = scmp.lt.s32.totalorder %s96, 1
      %s1294 = scalar_select %p1293, %s96, 1
      %s1295 = smul.addr %s1294, 8
      %s1296 = scalar_lea.vmem %s1, %s1295
      %p1297 = scmp.lt.s32.totalorder %s96, 1
      %s1298 = scalar_select %p1297, %s96, 1
      %s1299 = smul.addr %s1298, 8
      %s1300 = scalar_lea.vmem %s3, %s1299
      %p1301 = scmp.lt.s32.totalorder %s96, 1
      %s1302 = scalar_select %p1301, %s96, 1
      %s1303 = smul.addr %s1302, 8
      %s1304 = scalar_lea.vmem %s5, %s1303
      %p1305 = scmp.lt.s32.totalorder %s96, 1
      %s1306 = scalar_select %p1305, %s96, 1
      %s1307 = smul.addr %s1306, 8
      %s1308 = scalar_lea.vmem %s7, %s1307
      %p1309 = scmp.lt.s32.totalorder %s96, 1
      %s1310 = scalar_select %p1309, %s96, 1
      %s1311 = smul.addr %s1310, 8
      %s1312 = scalar_lea.vmem %s85, %s1311
      %v1314 = vld [vmem:[%s1296] sm:$0xff]
      %v1315 = vld [vmem:[%s9] sm:$0x1]
      %v1316 = vld [vmem:[%s11] sm:$0x1]
      %v1317 = vpack.c.bf16 %v1314, %v1314
      %v1319 = vperm.slane %v1316, 0
      %vm1321 = vcmask 15360
      %v1323 = vsel %vm1321, %v1317, 0
      %vm1325 = vcmask 1040384
      %v1327 = vsel %vm1325, %v1315, 0
      %1329 = vmatpush.bf16.msra.mxu0 0
      %1330 = vmatpush.bf16.msra.mxu0 0
      %1331 = vmatpush.bf16.msra.mxu0 0
      %1332 = vmatpush.bf16.msra.mxu0 0
      %1333 = vmatpush.bf16.msra.mxu0 0
      %1334 = vmatpush.bf16.msra.mxu0 0
      %1335 = vmatpush.bf16.msra.mxu0 0
      %1336 = vmatpush.bf16.msra.mxu0 %v1327
      %1337 = vmatmul.bf16.gmra.mxu0 %v1323
      %v1338 = vpop.f32.mrf.mxu0
      %v1339 = vadd.f32 %v1319, %v1338
      %v1340 = vpop.f32.mrf.mxu0
      %1341 = vdwg.mxu0
      %v1342 = vld [vmem:[%s1304] sm:$0xff]
      %v1343 = vadd.f32 %v1339, %v1342
      %v1344 = vld [vmem:[%s1300] sm:$0xff]
      %v1345 = vld [vmem:[%s13] sm:$0x1]
      %v1346 = vld [vmem:[%s15] sm:$0x1]
      %v1347 = vpack.c.bf16 %v1344, %v1344
      %v1349 = vperm.slane %v1346, 0
      %v1352 = vsel %vm1321, %v1347, 0
      %v1355 = vsel %vm1325, %v1345, 0
      %1357 = vmatpush.bf16.msra.mxu0 0
      %1358 = vmatpush.bf16.msra.mxu0 0
      %1359 = vmatpush.bf16.msra.mxu0 0
      %1360 = vmatpush.bf16.msra.mxu0 0
      %1361 = vmatpush.bf16.msra.mxu0 0
      %1362 = vmatpush.bf16.msra.mxu0 0
      %1363 = vmatpush.bf16.msra.mxu0 0
      %1364 = vmatpush.bf16.msra.mxu0 %v1355
      %1365 = vmatmul.bf16.gmra.mxu0 %v1352
      %v1366 = vpop.f32.mrf.mxu0
      %v1367 = vadd.f32 %v1349, %v1366
      %v1368 = vpop.f32.mrf.mxu0
      %1369 = vdwg.mxu0
      %v1370 = vld [vmem:[%s1308] sm:$0xff]
      %v1371 = vadd.f32 %v1367, %v1370
      %v1372 = vld [vmem:[%s17] sm:$0xf]
      %v1373 = vld [vmem:[%s17 + $0x4] sm:$0xf]
      %v1374 = vld [vmem:[%s17 + $0x8] sm:$0xf]
      %v1375 = vld [vmem:[%s17 + $0xc] sm:$0xf]
      %v1376 = vld [vmem:[%s19] sm:$0x1]
      %v1377 = vpack.c.bf16 %v1343, %v1343
      %v1379 = vperm.slane %v1376, 0
      %v1385 = vunpack.c.l.b16 %v1372
      %v1386 = vunpack.c.l.b16 %v1373
      %v1387 = vunpack.c.l.b16 %v1374
      %v1388 = vunpack.c.l.b16 %v1375
      %v1389 = vpack.c.b16 %v1386, %v1385
      %v1390 = vpack.c.b16 %v1388, %v1387
      %vm1393 = vcmask 261120
      %v1395 = vsel %vm1393, %v1377, 0
      %1397 = vmatpush.bf16.msra.mxu0 0
      %1398 = vmatpush.bf16.msra.mxu0 0
      %1399 = vmatpush.bf16.msra.mxu0 0
      %1400 = vmatpush.bf16.msra.mxu0 0
      %1401 = vmatpush.bf16.msra.mxu0 0
      %1402 = vmatpush.bf16.msra.mxu0 0
      %1403 = vmatpush.bf16.msra.mxu0 %v1390
      %1404 = vmatpush.bf16.msra.mxu0 %v1389
      %1405 = vmatmul.bf16.gmra.mxu0 %v1395
      %v1406 = vpop.f32.mrf.mxu0
      %v1407 = vadd.f32 %v1379, %v1406
      %v1408 = vpop.f32.mrf.mxu0
      %1409 = vdwg.mxu0
      %v1410 = vpack.c.bf16 %v1407, %v1407
      %1412 = vrot.lane.b32.xlu0 %v1410, 96
      %v1413 = vpop.permute.xlu0 %1412
      %vm1414 = vcmask 64512
      %v1416 = vsel %vm1414, %v1410, 0
      %v1419 = vsel %vm1414, %v1413, 0
      %1421 = vmatpush.bf16.xpose.msra.mxu0 0
      %1422 = vmatpush.bf16.xpose.msra.mxu0 0
      %1423 = vmatpush.bf16.xpose.msra.mxu0 0
      %1424 = vmatpush.bf16.xpose.msra.mxu0 0
      %1425 = vmatpush.bf16.xpose.msra.mxu0 0
      %1426 = vmatpush.bf16.xpose.msra.mxu0 0
      %1427 = vmatpush.bf16.xpose.msra.mxu0 0
      %1428 = vmatpush.bf16.xpose.msra.mxu0 %v1419
      %1429 = vmatmul.bf16.gmra.mxu0 %v1416
      %v1430 = vpop.f32.mrf.mxu0
      %v1431 = vadd.f32 0.0, %v1430
      %v1432 = vpop.f32.mrf.mxu0
      %1433 = vdwg.mxu0
      %v1434 = vsel %vm1414, %v1431, -inf
      %1435 = vmax.xlane.f32.xlu0 %v1434
      %v1436 = vpop.xlane.xlu0 %1435
      %v1437 = vsub.f32 %v1431, %v1436
      %v1438 = vmul.f32 %v1437, 1.442695
      %v1439 = vpow.pop %v1438
      %v1440 = vsel %vm1414, %v1439, 0.0
      %1441 = vadd.xlane.f32.xlu0 %v1440
      %v1442 = vpop.xlane.xlu0 %1441
      %v1443 = vrcp.pop %v1442
      %v1444 = vmul.f32 %v1439, %v1443
      %v1445 = vpack.c.bf16 %v1444, %v1444
      %1446 = vrot.lane.b32.xlu0 %v1410, 64
      %v1447 = vpop.permute.xlu0 %1446
      %v1449 = vsel %vm1414, %v1445, 0
      %vm1451 = vcmask 1043456
      %v1453 = vsel %vm1451, %v1447, 0
      %1455 = vmatpush.bf16.msra.mxu0 0
      %1456 = vmatpush.bf16.msra.mxu0 0
      %1457 = vmatpush.bf16.msra.mxu0 0
      %1458 = vmatpush.bf16.msra.mxu0 0
      %1459 = vmatpush.bf16.msra.mxu0 0
      %1460 = vmatpush.bf16.msra.mxu0 0
      %1461 = vmatpush.bf16.msra.mxu0 0
      %1462 = vmatpush.bf16.msra.mxu0 %v1453
      %1463 = vmatmul.bf16.gmra.mxu0 %v1449
      %v1464 = vpop.f32.mrf.mxu0
      %v1465 = vadd.f32 0.0, %v1464
      %v1466 = vpop.f32.mrf.mxu0
      %1467 = vdwg.mxu0
      %1468 = vrot.lane.b32.xlu0 %v1410, 120
      %v1469 = vpop.permute.xlu0 %1468
      %1470 = vrot.lane.b32.xlu0 %v1410, 88
      %v1471 = vpop.permute.xlu0 %1470
      %v1473 = vsel %vm1414, %v1469, 0
      %v1476 = vsel %vm1414, %v1471, 0
      %1478 = vmatpush.bf16.xpose.msra.mxu0 0
      %1479 = vmatpush.bf16.xpose.msra.mxu0 0
      %1480 = vmatpush.bf16.xpose.msra.mxu0 0
      %1481 = vmatpush.bf16.xpose.msra.mxu0 0
      %1482 = vmatpush.bf16.xpose.msra.mxu0 0
      %1483 = vmatpush.bf16.xpose.msra.mxu0 0
      %1484 = vmatpush.bf16.xpose.msra.mxu0 0
      %1485 = vmatpush.bf16.xpose.msra.mxu0 %v1476
      %1486 = vmatmul.bf16.gmra.mxu0 %v1473
      %v1487 = vpop.f32.mrf.mxu0
      %v1488 = vadd.f32 0.0, %v1487
      %v1489 = vpop.f32.mrf.mxu0
      %1490 = vdwg.mxu0
      %v1491 = vsel %vm1414, %v1488, -inf
      %1492 = vmax.xlane.f32.xlu0 %v1491
      %v1493 = vpop.xlane.xlu0 %1492
      %v1494 = vsub.f32 %v1488, %v1493
      %v1495 = vmul.f32 %v1494, 1.442695
      %v1496 = vpow.pop %v1495
      %v1497 = vsel %vm1414, %v1496, 0.0
      %1498 = vadd.xlane.f32.xlu0 %v1497
      %v1499 = vpop.xlane.xlu0 %1498
      %v1500 = vrcp.pop %v1499
      %v1501 = vmul.f32 %v1496, %v1500
      %v1502 = vpack.c.bf16 %v1501, %v1501
      %1503 = vrot.lane.b32.xlu0 %v1410, 56
      %v1504 = vpop.permute.xlu0 %1503
      %v1506 = vsel %vm1414, %v1502, 0
      %v1509 = vsel %vm1451, %v1504, 0
      %1511 = vmatpush.bf16.msra.mxu0 0
      %1512 = vmatpush.bf16.msra.mxu0 0
      %1513 = vmatpush.bf16.msra.mxu0 0
      %1514 = vmatpush.bf16.msra.mxu0 0
      %1515 = vmatpush.bf16.msra.mxu0 0
      %1516 = vmatpush.bf16.msra.mxu0 0
      %1517 = vmatpush.bf16.msra.mxu0 0
      %1518 = vmatpush.bf16.msra.mxu0 %v1509
      %1519 = vmatmul.bf16.gmra.mxu0 %v1506
      %v1520 = vpop.f32.mrf.mxu0
      %v1521 = vadd.f32 0.0, %v1520
      %v1522 = vpop.f32.mrf.mxu0
      %1523 = vdwg.mxu0
      %1524 = vrot.lane.b32.xlu0 %v1410, 112
      %v1525 = vpop.permute.xlu0 %1524
      %1526 = vrot.lane.b32.xlu0 %v1410, 80
      %v1527 = vpop.permute.xlu0 %1526
      %v1529 = vsel %vm1414, %v1525, 0
      %v1532 = vsel %vm1414, %v1527, 0
      %1534 = vmatpush.bf16.xpose.msra.mxu0 0
      %1535 = vmatpush.bf16.xpose.msra.mxu0 0
      %1536 = vmatpush.bf16.xpose.msra.mxu0 0
      %1537 = vmatpush.bf16.xpose.msra.mxu0 0
      %1538 = vmatpush.bf16.xpose.msra.mxu0 0
      %1539 = vmatpush.bf16.xpose.msra.mxu0 0
      %1540 = vmatpush.bf16.xpose.msra.mxu0 0
      %1541 = vmatpush.bf16.xpose.msra.mxu0 %v1532
      %1542 = vmatmul.bf16.gmra.mxu0 %v1529
      %v1543 = vpop.f32.mrf.mxu0
      %v1544 = vadd.f32 0.0, %v1543
      %v1545 = vpop.f32.mrf.mxu0
      %1546 = vdwg.mxu0
      %v1547 = vsel %vm1414, %v1544, -inf
      %1548 = vmax.xlane.f32.xlu0 %v1547
      %v1549 = vpop.xlane.xlu0 %1548
      %v1550 = vsub.f32 %v1544, %v1549
      %v1551 = vmul.f32 %v1550, 1.442695
      %v1552 = vpow.pop %v1551
      %v1553 = vsel %vm1414, %v1552, 0.0
      %1554 = vadd.xlane.f32.xlu0 %v1553
      %v1555 = vpop.xlane.xlu0 %1554
      %v1556 = vrcp.pop %v1555
      %v1557 = vmul.f32 %v1552, %v1556
      %v1558 = vpack.c.bf16 %v1557, %v1557
      %1559 = vrot.lane.b32.xlu0 %v1410, 48
      %v1560 = vpop.permute.xlu0 %1559
      %v1562 = vsel %vm1414, %v1558, 0
      %v1565 = vsel %vm1451, %v1560, 0
      %1567 = vmatpush.bf16.msra.mxu0 0
      %1568 = vmatpush.bf16.msra.mxu0 0
      %1569 = vmatpush.bf16.msra.mxu0 0
      %1570 = vmatpush.bf16.msra.mxu0 0
      %1571 = vmatpush.bf16.msra.mxu0 0
      %1572 = vmatpush.bf16.msra.mxu0 0
      %1573 = vmatpush.bf16.msra.mxu0 0
      %1574 = vmatpush.bf16.msra.mxu0 %v1565
      %1575 = vmatmul.bf16.gmra.mxu0 %v1562
      %v1576 = vpop.f32.mrf.mxu0
      %v1577 = vadd.f32 0.0, %v1576
      %v1578 = vpop.f32.mrf.mxu0
      %1579 = vdwg.mxu0
      %1580 = vrot.lane.b32.xlu0 %v1410, 104
      %v1581 = vpop.permute.xlu0 %1580
      %1582 = vrot.lane.b32.xlu0 %v1410, 72
      %v1583 = vpop.permute.xlu0 %1582
      %v1585 = vsel %vm1414, %v1581, 0
      %v1588 = vsel %vm1414, %v1583, 0
      %1590 = vmatpush.bf16.xpose.msra.mxu0 0
      %1591 = vmatpush.bf16.xpose.msra.mxu0 0
      %1592 = vmatpush.bf16.xpose.msra.mxu0 0
      %1593 = vmatpush.bf16.xpose.msra.mxu0 0
      %1594 = vmatpush.bf16.xpose.msra.mxu0 0
      %1595 = vmatpush.bf16.xpose.msra.mxu0 0
      %1596 = vmatpush.bf16.xpose.msra.mxu0 0
      %1597 = vmatpush.bf16.xpose.msra.mxu0 %v1588
      %1598 = vmatmul.bf16.gmra.mxu0 %v1585
      %v1599 = vpop.f32.mrf.mxu0
      %v1600 = vadd.f32 0.0, %v1599
      %v1601 = vpop.f32.mrf.mxu0
      %1602 = vdwg.mxu0
      %v1603 = vsel %vm1414, %v1600, -inf
      %1604 = vmax.xlane.f32.xlu0 %v1603
      %v1605 = vpop.xlane.xlu0 %1604
      %v1606 = vsub.f32 %v1600, %v1605
      %v1607 = vmul.f32 %v1606, 1.442695
      %v1608 = vpow.pop %v1607
      %v1609 = vsel %vm1414, %v1608, 0.0
      %1610 = vadd.xlane.f32.xlu0 %v1609
      %v1611 = vpop.xlane.xlu0 %1610
      %v1612 = vrcp.pop %v1611
      %v1613 = vmul.f32 %v1608, %v1612
      %v1614 = vpack.c.bf16 %v1613, %v1613
      %1615 = vrot.lane.b32.xlu0 %v1410, 40
      %v1616 = vpop.permute.xlu0 %1615
      %v1618 = vsel %vm1414, %v1614, 0
      %v1621 = vsel %vm1451, %v1616, 0
      %1623 = vmatpush.bf16.msra.mxu0 0
      %1624 = vmatpush.bf16.msra.mxu0 0
      %1625 = vmatpush.bf16.msra.mxu0 0
      %1626 = vmatpush.bf16.msra.mxu0 0
      %1627 = vmatpush.bf16.msra.mxu0 0
      %1628 = vmatpush.bf16.msra.mxu0 0
      %1629 = vmatpush.bf16.msra.mxu0 0
      %1630 = vmatpush.bf16.msra.mxu0 %v1621
      %1631 = vmatmul.bf16.gmra.mxu0 %v1618
      %v1632 = vpop.f32.mrf.mxu0
      %v1633 = vadd.f32 0.0, %v1632
      %v1634 = vpop.f32.mrf.mxu0
      %1635 = vdwg.mxu0
      %1637 = vrot.lane.b32.xlu0 %v1521, 8
      %v1638 = vpop.permute.xlu0 %1637
      %1641 = vrot.lane.b32.xlu0 %v1577, 16
      %v1642 = vpop.permute.xlu0 %1641
      %1645 = vrot.lane.b32.xlu0 %v1633, 24
      %v1646 = vpop.permute.xlu0 %1645
      %v1648 = vsel %vm1414, %v1465, %v1638
      %vm1649 = vcmask 130048
      %v1650 = vsel %vm1649, %v1648, %v1642
      %vm1651 = vcmask 195584
      %v1652 = vsel %vm1651, %v1650, %v1646
      %v1653 = vld [vmem:[%s21] sm:$0xf]
      %v1654 = vld [vmem:[%s21 + $0x4] sm:$0xf]
      %v1655 = vld [vmem:[%s21 + $0x8] sm:$0xf]
      %v1656 = vld [vmem:[%s21 + $0xc] sm:$0xf]
      %v1657 = vld [vmem:[%s23] sm:$0x1]
      %v1658 = vpack.c.bf16 %v1652, %v1652
      %v1660 = vperm.slane %v1657, 0
      %v1666 = vunpack.c.l.b16 %v1653
      %v1667 = vunpack.c.l.b16 %v1654
      %v1668 = vunpack.c.l.b16 %v1655
      %v1669 = vunpack.c.l.b16 %v1656
      %v1670 = vpack.c.b16 %v1667, %v1666
      %v1671 = vpack.c.b16 %v1669, %v1668
      %v1675 = vsel %vm1393, %v1658, 0
      %1677 = vmatpush.bf16.msra.mxu0 0
      %1678 = vmatpush.bf16.msra.mxu0 0
      %1679 = vmatpush.bf16.msra.mxu0 0
      %1680 = vmatpush.bf16.msra.mxu0 0
      %1681 = vmatpush.bf16.msra.mxu0 0
      %1682 = vmatpush.bf16.msra.mxu0 0
      %1683 = vmatpush.bf16.msra.mxu0 %v1671
      %1684 = vmatpush.bf16.msra.mxu0 %v1670
      %1685 = vmatmul.bf16.gmra.mxu0 %v1675
      %v1686 = vpop.f32.mrf.mxu0
      %v1687 = vadd.f32 %v1660, %v1686
      %v1688 = vpop.f32.mrf.mxu0
      %1689 = vdwg.mxu0
      %v1690 = vadd.f32 %v1343, %v1687
      %v1691 = vld [vmem:[%s25] sm:$0x1]
      %v1692 = vld [vmem:[%s27] sm:$0x1]
      %v1693 = vsel %vm1393, %v1690, 0.0
      %1694 = vadd.xlane.f32.xlu0 %v1693
      %v1695 = vpop.xlane.xlu0 %1694
      %v1696 = vrcp.pop 32.0
      %v1697 = vmul.f32 32.0, %v1696
      %v1698 = vsub.f32 1.0, %v1697
      %v1699 = vmul.f32 %v1696, %v1698
      %v1700 = vadd.f32 %v1696, %v1699
      %vm1701 = vweird.f32 %v1696
      %v1702 = vsel %vm1701, %v1696, %v1700
      %v1703 = vmul.f32 %v1695, %v1702
      %v1704 = vsub.f32 %v1690, %v1703
      %v1705 = vmul.f32 %v1704, %v1704
      %v1706 = vsel %vm1393, %v1705, 0.0
      %1707 = vadd.xlane.f32.xlu0 %v1706
      %v1708 = vpop.xlane.xlu0 %1707
      %v1709 = vmul.f32 %v1708, %v1702
      %v1710 = vadd.f32 %v1709, 1e-05
      %v1711 = vrsqrt.pop %v1710
      %v1712 = vmul.f32 %v1711, %v1710
      %v1713 = vmul.f32 %v1712, %v1711
      %v1714 = vmul.f32 0.5, %v1713
      %v1715 = vsub.f32 1.5, %v1714
      %v1716 = vmul.f32 %v1711, %v1715
      %vm1717 = vweird.f32 %v1710
      %vm1718 = vweird.f32 %v1711
      %vm1719 = vmor %vm1717, %vm1718
      %v1720 = vsel %vm1719, %v1711, %v1716
      %v1721 = vmul.f32 %v1704, %v1720
      %v1723 = vperm.slane %v1691, 0
      %v1725 = vmul.f32 %v1721, %v1723
      %v1727 = vperm.slane %v1692, 0
      %v1729 = vadd.f32 %v1725, %v1727
      %v1730 = vld [vmem:[%s29] sm:$0xf]
      %v1731 = vld [vmem:[%s29 + $0x4] sm:$0xf]
      %v1732 = vld [vmem:[%s29 + $0x8] sm:$0xf]
      %v1733 = vld [vmem:[%s29 + $0xc] sm:$0xf]
      %v1734 = vld [vmem:[%s31] sm:$0x1]
      %v1735 = vpack.c.bf16 %v1729, %v1729
      %v1737 = vperm.slane %v1734, 0
      %v1743 = vunpack.c.l.b16 %v1730
      %v1744 = vunpack.c.l.b16 %v1731
      %v1745 = vunpack.c.l.b16 %v1732
      %v1746 = vunpack.c.l.b16 %v1733
      %v1747 = vpack.c.b16 %v1744, %v1743
      %v1748 = vpack.c.b16 %v1746, %v1745
      %v1752 = vsel %vm1393, %v1735, 0
      %1754 = vmatpush.bf16.msra.mxu0 0
      %1755 = vmatpush.bf16.msra.mxu0 0
      %1756 = vmatpush.bf16.msra.mxu0 0
      %1757 = vmatpush.bf16.msra.mxu0 0
      %1758 = vmatpush.bf16.msra.mxu0 0
      %1759 = vmatpush.bf16.msra.mxu0 0
      %1760 = vmatpush.bf16.msra.mxu0 %v1748
      %1761 = vmatpush.bf16.msra.mxu0 %v1747
      %1762 = vmatmul.bf16.gmra.mxu0 %v1752
      %v1763 = vpop.f32.mrf.mxu0
      %v1764 = vadd.f32 %v1737, %v1763
      %v1765 = vpop.f32.mrf.mxu0
      %1766 = vdwg.mxu0
      %v1767 = vmax.f32 %v1764, 0.0
      %v1768 = vld [vmem:[%s33] sm:$0xf]
      %v1769 = vld [vmem:[%s33 + $0x4] sm:$0xf]
      %v1770 = vld [vmem:[%s33 + $0x8] sm:$0xf]
      %v1771 = vld [vmem:[%s33 + $0xc] sm:$0xf]
      %v1772 = vld [vmem:[%s33 + $0x10] sm:$0xf]
      %v1773 = vld [vmem:[%s33 + $0x14] sm:$0xf]
      %v1774 = vld [vmem:[%s33 + $0x18] sm:$0xf]
      %v1775 = vld [vmem:[%s33 + $0x1c] sm:$0xf]
      %v1776 = vld [vmem:[%s35] sm:$0x1]
      %v1777 = vpack.c.bf16 %v1767, %v1767
      %v1779 = vperm.slane %v1776, 0
      %v1789 = vunpack.c.l.b16 %v1768
      %v1790 = vunpack.c.l.b16 %v1769
      %v1791 = vunpack.c.l.b16 %v1770
      %v1792 = vunpack.c.l.b16 %v1771
      %v1793 = vunpack.c.l.b16 %v1772
      %v1794 = vunpack.c.l.b16 %v1773
      %v1795 = vunpack.c.l.b16 %v1774
      %v1796 = vunpack.c.l.b16 %v1775
      %v1797 = vpack.c.b16 %v1790, %v1789
      %v1798 = vpack.c.b16 %v1792, %v1791
      %v1799 = vpack.c.b16 %v1794, %v1793
      %v1800 = vpack.c.b16 %v1796, %v1795
      %vm1805 = vcmask 523264
      %v1807 = vsel %vm1805, %v1777, 0
      %1809 = vmatpush.bf16.msra.mxu0 0
      %1810 = vmatpush.bf16.msra.mxu0 0
      %1811 = vmatpush.bf16.msra.mxu0 0
      %1812 = vmatpush.bf16.msra.mxu0 0
      %1813 = vmatpush.bf16.msra.mxu0 %v1800
      %1814 = vmatpush.bf16.msra.mxu0 %v1799
      %1815 = vmatpush.bf16.msra.mxu0 %v1798
      %1816 = vmatpush.bf16.msra.mxu0 %v1797
      %1817 = vmatmul.bf16.gmra.mxu0 %v1807
      %v1818 = vpop.f32.mrf.mxu0
      %v1819 = vadd.f32 %v1779, %v1818
      %v1820 = vpop.f32.mrf.mxu0
      %1821 = vdwg.mxu0
      %v1822 = vadd.f32 %v1729, %v1819
      %v1823 = vld [vmem:[%s37] sm:$0x1]
      %v1824 = vld [vmem:[%s39] sm:$0x1]
      %v1825 = vsel %vm1393, %v1822, 0.0
      %1826 = vadd.xlane.f32.xlu0 %v1825
      %v1827 = vpop.xlane.xlu0 %1826
      %v1828 = vmul.f32 %v1827, %v1702
      %v1829 = vsub.f32 %v1822, %v1828
      %v1830 = vmul.f32 %v1829, %v1829
      %v1831 = vsel %vm1393, %v1830, 0.0
      %1832 = vadd.xlane.f32.xlu0 %v1831
      %v1833 = vpop.xlane.xlu0 %1832
      %v1834 = vmul.f32 %v1833, %v1702
      %v1835 = vadd.f32 %v1834, 1e-05
      %v1836 = vrsqrt.pop %v1835
      %v1837 = vmul.f32 %v1836, %v1835
      %v1838 = vmul.f32 %v1837, %v1836
      %v1839 = vmul.f32 0.5, %v1838
      %v1840 = vsub.f32 1.5, %v1839
      %v1841 = vmul.f32 %v1836, %v1840
      %vm1842 = vweird.f32 %v1835
      %vm1843 = vweird.f32 %v1836
      %vm1844 = vmor %vm1842, %vm1843
      %v1845 = vsel %vm1844, %v1836, %v1841
      %v1846 = vmul.f32 %v1829, %v1845
      %v1848 = vperm.slane %v1823, 0
      %v1850 = vmul.f32 %v1846, %v1848
      %v1852 = vperm.slane %v1824, 0
      %v1854 = vadd.f32 %v1850, %v1852
      %v1855 = vld [vmem:[%s41] sm:$0xf]
      %v1856 = vld [vmem:[%s41 + $0x4] sm:$0xf]
      %v1857 = vld [vmem:[%s41 + $0x8] sm:$0xf]
      %v1858 = vld [vmem:[%s41 + $0xc] sm:$0xf]
      %v1859 = vld [vmem:[%s43] sm:$0x1]
      %v1860 = vpack.c.bf16 %v1371, %v1371
      %v1862 = vperm.slane %v1859, 0
      %v1868 = vunpack.c.l.b16 %v1855
      %v1869 = vunpack.c.l.b16 %v1856
      %v1870 = vunpack.c.l.b16 %v1857
      %v1871 = vunpack.c.l.b16 %v1858
      %v1872 = vpack.c.b16 %v1869, %v1868
      %v1873 = vpack.c.b16 %v1871, %v1870
      %v1877 = vsel %vm1393, %v1860, 0
      %1879 = vmatpush.bf16.msra.mxu0 0
      %1880 = vmatpush.bf16.msra.mxu0 0
      %1881 = vmatpush.bf16.msra.mxu0 0
      %1882 = vmatpush.bf16.msra.mxu0 0
      %1883 = vmatpush.bf16.msra.mxu0 0
      %1884 = vmatpush.bf16.msra.mxu0 0
      %1885 = vmatpush.bf16.msra.mxu0 %v1873
      %1886 = vmatpush.bf16.msra.mxu0 %v1872
      %1887 = vmatmul.bf16.gmra.mxu0 %v1877
      %v1888 = vpop.f32.mrf.mxu0
      %v1889 = vadd.f32 %v1862, %v1888
      %v1890 = vpop.f32.mrf.mxu0
      %1891 = vdwg.mxu0
      %v1892 = vpack.c.bf16 %v1889, %v1889
      %1894 = vrot.lane.b32.xlu0 %v1892, 96
      %v1895 = vpop.permute.xlu0 %1894
      %v1897 = vsel %vm1414, %v1892, 0
      %v1900 = vsel %vm1414, %v1895, 0
      %1902 = vmatpush.bf16.xpose.msra.mxu0 0
      %1903 = vmatpush.bf16.xpose.msra.mxu0 0
      %1904 = vmatpush.bf16.xpose.msra.mxu0 0
      %1905 = vmatpush.bf16.xpose.msra.mxu0 0
      %1906 = vmatpush.bf16.xpose.msra.mxu0 0
      %1907 = vmatpush.bf16.xpose.msra.mxu0 0
      %1908 = vmatpush.bf16.xpose.msra.mxu0 0
      %1909 = vmatpush.bf16.xpose.msra.mxu0 %v1900
      %1910 = vmatmul.bf16.gmra.mxu0 %v1897
      %v1911 = vpop.f32.mrf.mxu0
      %v1912 = vadd.f32 0.0, %v1911
      %v1913 = vpop.f32.mrf.mxu0
      %1914 = vdwg.mxu0
      %v1915 = vsel %vm1414, %v1912, -inf
      %1916 = vmax.xlane.f32.xlu0 %v1915
      %v1917 = vpop.xlane.xlu0 %1916
      %v1918 = vsub.f32 %v1912, %v1917
      %v1919 = vmul.f32 %v1918, 1.442695
      %v1920 = vpow.pop %v1919
      %v1921 = vsel %vm1414, %v1920, 0.0
      %1922 = vadd.xlane.f32.xlu0 %v1921
      %v1923 = vpop.xlane.xlu0 %1922
      %v1924 = vrcp.pop %v1923
      %v1925 = vmul.f32 %v1920, %v1924
      %v1926 = vpack.c.bf16 %v1925, %v1925
      %1927 = vrot.lane.b32.xlu0 %v1892, 64
      %v1928 = vpop.permute.xlu0 %1927
      %v1930 = vsel %vm1414, %v1926, 0
      %v1933 = vsel %vm1451, %v1928, 0
      %1935 = vmatpush.bf16.msra.mxu0 0
      %1936 = vmatpush.bf16.msra.mxu0 0
      %1937 = vmatpush.bf16.msra.mxu0 0
      %1938 = vmatpush.bf16.msra.mxu0 0
      %1939 = vmatpush.bf16.msra.mxu0 0
      %1940 = vmatpush.bf16.msra.mxu0 0
      %1941 = vmatpush.bf16.msra.mxu0 0
      %1942 = vmatpush.bf16.msra.mxu0 %v1933
      %1943 = vmatmul.bf16.gmra.mxu0 %v1930
      %v1944 = vpop.f32.mrf.mxu0
      %v1945 = vadd.f32 0.0, %v1944
      %v1946 = vpop.f32.mrf.mxu0
      %1947 = vdwg.mxu0
      %1948 = vrot.lane.b32.xlu0 %v1892, 120
      %v1949 = vpop.permute.xlu0 %1948
      %1950 = vrot.lane.b32.xlu0 %v1892, 88
      %v1951 = vpop.permute.xlu0 %1950
      %v1953 = vsel %vm1414, %v1949, 0
      %v1956 = vsel %vm1414, %v1951, 0
      %1958 = vmatpush.bf16.xpose.msra.mxu0 0
      %1959 = vmatpush.bf16.xpose.msra.mxu0 0
      %1960 = vmatpush.bf16.xpose.msra.mxu0 0
      %1961 = vmatpush.bf16.xpose.msra.mxu0 0
      %1962 = vmatpush.bf16.xpose.msra.mxu0 0
      %1963 = vmatpush.bf16.xpose.msra.mxu0 0
      %1964 = vmatpush.bf16.xpose.msra.mxu0 0
      %1965 = vmatpush.bf16.xpose.msra.mxu0 %v1956
      %1966 = vmatmul.bf16.gmra.mxu0 %v1953
      %v1967 = vpop.f32.mrf.mxu0
      %v1968 = vadd.f32 0.0, %v1967
      %v1969 = vpop.f32.mrf.mxu0
      %1970 = vdwg.mxu0
      %v1971 = vsel %vm1414, %v1968, -inf
      %1972 = vmax.xlane.f32.xlu0 %v1971
      %v1973 = vpop.xlane.xlu0 %1972
      %v1974 = vsub.f32 %v1968, %v1973
      %v1975 = vmul.f32 %v1974, 1.442695
      %v1976 = vpow.pop %v1975
      %v1977 = vsel %vm1414, %v1976, 0.0
      %1978 = vadd.xlane.f32.xlu0 %v1977
      %v1979 = vpop.xlane.xlu0 %1978
      %v1980 = vrcp.pop %v1979
      %v1981 = vmul.f32 %v1976, %v1980
      %v1982 = vpack.c.bf16 %v1981, %v1981
      %1983 = vrot.lane.b32.xlu0 %v1892, 56
      %v1984 = vpop.permute.xlu0 %1983
      %v1986 = vsel %vm1414, %v1982, 0
      %v1989 = vsel %vm1451, %v1984, 0
      %1991 = vmatpush.bf16.msra.mxu0 0
      %1992 = vmatpush.bf16.msra.mxu0 0
      %1993 = vmatpush.bf16.msra.mxu0 0
      %1994 = vmatpush.bf16.msra.mxu0 0
      %1995 = vmatpush.bf16.msra.mxu0 0
      %1996 = vmatpush.bf16.msra.mxu0 0
      %1997 = vmatpush.bf16.msra.mxu0 0
      %1998 = vmatpush.bf16.msra.mxu0 %v1989
      %1999 = vmatmul.bf16.gmra.mxu0 %v1986
      %v2000 = vpop.f32.mrf.mxu0
      %v2001 = vadd.f32 0.0, %v2000
      %v2002 = vpop.f32.mrf.mxu0
      %2003 = vdwg.mxu0
      %2004 = vrot.lane.b32.xlu0 %v1892, 112
      %v2005 = vpop.permute.xlu0 %2004
      %2006 = vrot.lane.b32.xlu0 %v1892, 80
      %v2007 = vpop.permute.xlu0 %2006
      %v2009 = vsel %vm1414, %v2005, 0
      %v2012 = vsel %vm1414, %v2007, 0
      %2014 = vmatpush.bf16.xpose.msra.mxu0 0
      %2015 = vmatpush.bf16.xpose.msra.mxu0 0
      %2016 = vmatpush.bf16.xpose.msra.mxu0 0
      %2017 = vmatpush.bf16.xpose.msra.mxu0 0
      %2018 = vmatpush.bf16.xpose.msra.mxu0 0
      %2019 = vmatpush.bf16.xpose.msra.mxu0 0
      %2020 = vmatpush.bf16.xpose.msra.mxu0 0
      %2021 = vmatpush.bf16.xpose.msra.mxu0 %v2012
      %2022 = vmatmul.bf16.gmra.mxu0 %v2009
      %v2023 = vpop.f32.mrf.mxu0
      %v2024 = vadd.f32 0.0, %v2023
      %v2025 = vpop.f32.mrf.mxu0
      %2026 = vdwg.mxu0
      %v2027 = vsel %vm1414, %v2024, -inf
      %2028 = vmax.xlane.f32.xlu0 %v2027
      %v2029 = vpop.xlane.xlu0 %2028
      %v2030 = vsub.f32 %v2024, %v2029
      %v2031 = vmul.f32 %v2030, 1.442695
      %v2032 = vpow.pop %v2031
      %v2033 = vsel %vm1414, %v2032, 0.0
      %2034 = vadd.xlane.f32.xlu0 %v2033
      %v2035 = vpop.xlane.xlu0 %2034
      %v2036 = vrcp.pop %v2035
      %v2037 = vmul.f32 %v2032, %v2036
      %v2038 = vpack.c.bf16 %v2037, %v2037
      %2039 = vrot.lane.b32.xlu0 %v1892, 48
      %v2040 = vpop.permute.xlu0 %2039
      %v2042 = vsel %vm1414, %v2038, 0
      %v2045 = vsel %vm1451, %v2040, 0
      %2047 = vmatpush.bf16.msra.mxu0 0
      %2048 = vmatpush.bf16.msra.mxu0 0
      %2049 = vmatpush.bf16.msra.mxu0 0
      %2050 = vmatpush.bf16.msra.mxu0 0
      %2051 = vmatpush.bf16.msra.mxu0 0
      %2052 = vmatpush.bf16.msra.mxu0 0
      %2053 = vmatpush.bf16.msra.mxu0 0
      %2054 = vmatpush.bf16.msra.mxu0 %v2045
      %2055 = vmatmul.bf16.gmra.mxu0 %v2042
      %v2056 = vpop.f32.mrf.mxu0
      %v2057 = vadd.f32 0.0, %v2056
      %v2058 = vpop.f32.mrf.mxu0
      %2059 = vdwg.mxu0
      %2060 = vrot.lane.b32.xlu0 %v1892, 104
      %v2061 = vpop.permute.xlu0 %2060
      %2062 = vrot.lane.b32.xlu0 %v1892, 72
      %v2063 = vpop.permute.xlu0 %2062
      %v2065 = vsel %vm1414, %v2061, 0
      %v2068 = vsel %vm1414, %v2063, 0
      %2070 = vmatpush.bf16.xpose.msra.mxu0 0
      %2071 = vmatpush.bf16.xpose.msra.mxu0 0
      %2072 = vmatpush.bf16.xpose.msra.mxu0 0
      %2073 = vmatpush.bf16.xpose.msra.mxu0 0
      %2074 = vmatpush.bf16.xpose.msra.mxu0 0
      %2075 = vmatpush.bf16.xpose.msra.mxu0 0
      %2076 = vmatpush.bf16.xpose.msra.mxu0 0
      %2077 = vmatpush.bf16.xpose.msra.mxu0 %v2068
      %2078 = vmatmul.bf16.gmra.mxu0 %v2065
      %v2079 = vpop.f32.mrf.mxu0
      %v2080 = vadd.f32 0.0, %v2079
      %v2081 = vpop.f32.mrf.mxu0
      %2082 = vdwg.mxu0
      %v2083 = vsel %vm1414, %v2080, -inf
      %2084 = vmax.xlane.f32.xlu0 %v2083
      %v2085 = vpop.xlane.xlu0 %2084
      %v2086 = vsub.f32 %v2080, %v2085
      %v2087 = vmul.f32 %v2086, 1.442695
      %v2088 = vpow.pop %v2087
      %v2089 = vsel %vm1414, %v2088, 0.0
      %2090 = vadd.xlane.f32.xlu0 %v2089
      %v2091 = vpop.xlane.xlu0 %2090
      %v2092 = vrcp.pop %v2091
      %v2093 = vmul.f32 %v2088, %v2092
      %v2094 = vpack.c.bf16 %v2093, %v2093
      %2095 = vrot.lane.b32.xlu0 %v1892, 40
      %v2096 = vpop.permute.xlu0 %2095
      %v2098 = vsel %vm1414, %v2094, 0
      %v2101 = vsel %vm1451, %v2096, 0
      %2103 = vmatpush.bf16.msra.mxu0 0
      %2104 = vmatpush.bf16.msra.mxu0 0
      %2105 = vmatpush.bf16.msra.mxu0 0
      %2106 = vmatpush.bf16.msra.mxu0 0
      %2107 = vmatpush.bf16.msra.mxu0 0
      %2108 = vmatpush.bf16.msra.mxu0 0
      %2109 = vmatpush.bf16.msra.mxu0 0
      %2110 = vmatpush.bf16.msra.mxu0 %v2101
      %2111 = vmatmul.bf16.gmra.mxu0 %v2098
      %v2112 = vpop.f32.mrf.mxu0
      %v2113 = vadd.f32 0.0, %v2112
      %v2114 = vpop.f32.mrf.mxu0
      %2115 = vdwg.mxu0
      %2117 = vrot.lane.b32.xlu0 %v2001, 8
      %v2118 = vpop.permute.xlu0 %2117
      %2121 = vrot.lane.b32.xlu0 %v2057, 16
      %v2122 = vpop.permute.xlu0 %2121
      %2125 = vrot.lane.b32.xlu0 %v2113, 24
      %v2126 = vpop.permute.xlu0 %2125
      %v2128 = vsel %vm1414, %v1945, %v2118
      %v2129 = vsel %vm1649, %v2128, %v2122
      %v2130 = vsel %vm1651, %v2129, %v2126
      %v2131 = vld [vmem:[%s45] sm:$0xf]
      %v2132 = vld [vmem:[%s45 + $0x4] sm:$0xf]
      %v2133 = vld [vmem:[%s45 + $0x8] sm:$0xf]
      %v2134 = vld [vmem:[%s45 + $0xc] sm:$0xf]
      %v2135 = vld [vmem:[%s47] sm:$0x1]
      %v2136 = vpack.c.bf16 %v2130, %v2130
      %v2138 = vperm.slane %v2135, 0
      %v2144 = vunpack.c.l.b16 %v2131
      %v2145 = vunpack.c.l.b16 %v2132
      %v2146 = vunpack.c.l.b16 %v2133
      %v2147 = vunpack.c.l.b16 %v2134
      %v2148 = vpack.c.b16 %v2145, %v2144
      %v2149 = vpack.c.b16 %v2147, %v2146
      %v2153 = vsel %vm1393, %v2136, 0
      %2155 = vmatpush.bf16.msra.mxu0 0
      %2156 = vmatpush.bf16.msra.mxu0 0
      %2157 = vmatpush.bf16.msra.mxu0 0
      %2158 = vmatpush.bf16.msra.mxu0 0
      %2159 = vmatpush.bf16.msra.mxu0 0
      %2160 = vmatpush.bf16.msra.mxu0 0
      %2161 = vmatpush.bf16.msra.mxu0 %v2149
      %2162 = vmatpush.bf16.msra.mxu0 %v2148
      %2163 = vmatmul.bf16.gmra.mxu0 %v2153
      %v2164 = vpop.f32.mrf.mxu0
      %v2165 = vadd.f32 %v2138, %v2164
      %v2166 = vpop.f32.mrf.mxu0
      %2167 = vdwg.mxu0
      %v2168 = vadd.f32 %v1371, %v2165
      %v2169 = vld [vmem:[%s49] sm:$0x1]
      %v2170 = vld [vmem:[%s51] sm:$0x1]
      %v2171 = vsel %vm1393, %v2168, 0.0
      %2172 = vadd.xlane.f32.xlu0 %v2171
      %v2173 = vpop.xlane.xlu0 %2172
      %v2174 = vmul.f32 %v2173, %v1702
      %v2175 = vsub.f32 %v2168, %v2174
      %v2176 = vmul.f32 %v2175, %v2175
      %v2177 = vsel %vm1393, %v2176, 0.0
      %2178 = vadd.xlane.f32.xlu0 %v2177
      %v2179 = vpop.xlane.xlu0 %2178
      %v2180 = vmul.f32 %v2179, %v1702
      %v2181 = vadd.f32 %v2180, 1e-05
      %v2182 = vrsqrt.pop %v2181
      %v2183 = vmul.f32 %v2182, %v2181
      %v2184 = vmul.f32 %v2183, %v2182
      %v2185 = vmul.f32 0.5, %v2184
      %v2186 = vsub.f32 1.5, %v2185
      %v2187 = vmul.f32 %v2182, %v2186
      %vm2188 = vweird.f32 %v2181
      %vm2189 = vweird.f32 %v2182
      %vm2190 = vmor %vm2188, %vm2189
      %v2191 = vsel %vm2190, %v2182, %v2187
      %v2192 = vmul.f32 %v2175, %v2191
      %v2194 = vperm.slane %v2169, 0
      %v2196 = vmul.f32 %v2192, %v2194
      %v2198 = vperm.slane %v2170, 0
      %v2200 = vadd.f32 %v2196, %v2198
      %v2201 = vld [vmem:[%s53] sm:$0xf]
      %v2202 = vld [vmem:[%s53 + $0x4] sm:$0xf]
      %v2203 = vld [vmem:[%s53 + $0x8] sm:$0xf]
      %v2204 = vld [vmem:[%s53 + $0xc] sm:$0xf]
      %v2205 = vld [vmem:[%s55] sm:$0x1]
      %v2206 = vpack.c.bf16 %v2200, %v2200
      %v2208 = vperm.slane %v2205, 0
      %v2214 = vunpack.c.l.b16 %v2201
      %v2215 = vunpack.c.l.b16 %v2202
      %v2216 = vunpack.c.l.b16 %v2203
      %v2217 = vunpack.c.l.b16 %v2204
      %v2218 = vpack.c.b16 %v2215, %v2214
      %v2219 = vpack.c.b16 %v2217, %v2216
      %v2223 = vsel %vm1393, %v2206, 0
      %2225 = vmatpush.bf16.msra.mxu0 0
      %2226 = vmatpush.bf16.msra.mxu0 0
      %2227 = vmatpush.bf16.msra.mxu0 0
      %2228 = vmatpush.bf16.msra.mxu0 0
      %2229 = vmatpush.bf16.msra.mxu0 0
      %2230 = vmatpush.bf16.msra.mxu0 0
      %2231 = vmatpush.bf16.msra.mxu0 %v2219
      %2232 = vmatpush.bf16.msra.mxu0 %v2218
      %2233 = vmatmul.bf16.gmra.mxu0 %v2223
      %v2234 = vpop.f32.mrf.mxu0
      %v2235 = vadd.f32 %v2208, %v2234
      %v2236 = vpop.f32.mrf.mxu0
      %2237 = vdwg.mxu0
      %v2238 = vld [vmem:[%s57] sm:$0xf]
      %v2239 = vld [vmem:[%s57 + $0x4] sm:$0xf]
      %v2240 = vld [vmem:[%s57 + $0x8] sm:$0xf]
      %v2241 = vld [vmem:[%s57 + $0xc] sm:$0xf]
      %v2242 = vld [vmem:[%s59] sm:$0x1]
      %v2243 = vpack.c.bf16 %v1854, %v1854
      %v2245 = vperm.slane %v2242, 0
      %v2251 = vunpack.c.l.b16 %v2238
      %v2252 = vunpack.c.l.b16 %v2239
      %v2253 = vunpack.c.l.b16 %v2240
      %v2254 = vunpack.c.l.b16 %v2241
      %v2255 = vpack.c.b16 %v2252, %v2251
      %v2256 = vpack.c.b16 %v2254, %v2253
      %v2260 = vsel %vm1393, %v2243, 0
      %2262 = vmatpush.bf16.msra.mxu0 0
      %2263 = vmatpush.bf16.msra.mxu0 0
      %2264 = vmatpush.bf16.msra.mxu0 0
      %2265 = vmatpush.bf16.msra.mxu0 0
      %2266 = vmatpush.bf16.msra.mxu0 0
      %2267 = vmatpush.bf16.msra.mxu0 0
      %2268 = vmatpush.bf16.msra.mxu0 %v2256
      %2269 = vmatpush.bf16.msra.mxu0 %v2255
      %2270 = vmatmul.bf16.gmra.mxu0 %v2260
      %v2271 = vpop.f32.mrf.mxu0
      %v2272 = vadd.f32 %v2245, %v2271
      %v2273 = vpop.f32.mrf.mxu0
      %2274 = vdwg.mxu0
      %v2275 = vpack.c.bf16 %v2235, %v2235
      %v2276 = vpack.c.bf16 %v2272, %v2272
      %v2278 = vsel %vm1414, %v2275, 0
      %v2281 = vsel %vm1414, %v2276, 0
      %2283 = vmatpush.bf16.xpose.msra.mxu0 0
      %2284 = vmatpush.bf16.xpose.msra.mxu0 0
      %2285 = vmatpush.bf16.xpose.msra.mxu0 0
      %2286 = vmatpush.bf16.xpose.msra.mxu0 0
      %2287 = vmatpush.bf16.xpose.msra.mxu0 0
      %2288 = vmatpush.bf16.xpose.msra.mxu0 0
      %2289 = vmatpush.bf16.xpose.msra.mxu0 0
      %2290 = vmatpush.bf16.xpose.msra.mxu0 %v2281
      %2291 = vmatmul.bf16.gmra.mxu0 %v2278
      %v2292 = vpop.f32.mrf.mxu0
      %v2293 = vadd.f32 0.0, %v2292
      %v2294 = vpop.f32.mrf.mxu0
      %2295 = vdwg.mxu0
      %v2296 = vsel %vm1414, %v2293, -inf
      %2297 = vmax.xlane.f32.xlu0 %v2296
      %v2298 = vpop.xlane.xlu0 %2297
      %v2299 = vsub.f32 %v2293, %v2298
      %v2300 = vmul.f32 %v2299, 1.442695
      %v2301 = vpow.pop %v2300
      %v2302 = vsel %vm1414, %v2301, 0.0
      %2303 = vadd.xlane.f32.xlu0 %v2302
      %v2304 = vpop.xlane.xlu0 %2303
      %v2305 = vrcp.pop %v2304
      %v2306 = vmul.f32 %v2301, %v2305
      %v2307 = vpack.c.bf16 %v2306, %v2306
      %2309 = vrot.lane.b32.xlu0 %v2276, 96
      %v2310 = vpop.permute.xlu0 %2309
      %v2312 = vsel %vm1414, %v2307, 0
      %v2315 = vsel %vm1451, %v2310, 0
      %2317 = vmatpush.bf16.msra.mxu0 0
      %2318 = vmatpush.bf16.msra.mxu0 0
      %2319 = vmatpush.bf16.msra.mxu0 0
      %2320 = vmatpush.bf16.msra.mxu0 0
      %2321 = vmatpush.bf16.msra.mxu0 0
      %2322 = vmatpush.bf16.msra.mxu0 0
      %2323 = vmatpush.bf16.msra.mxu0 0
      %2324 = vmatpush.bf16.msra.mxu0 %v2315
      %2325 = vmatmul.bf16.gmra.mxu0 %v2312
      %v2326 = vpop.f32.mrf.mxu0
      %v2327 = vadd.f32 0.0, %v2326
      %v2328 = vpop.f32.mrf.mxu0
      %2329 = vdwg.mxu0
      %2331 = vrot.lane.b32.xlu0 %v2275, 120
      %v2332 = vpop.permute.xlu0 %2331
      %2333 = vrot.lane.b32.xlu0 %v2276, 120
      %v2334 = vpop.permute.xlu0 %2333
      %v2336 = vsel %vm1414, %v2332, 0
      %v2339 = vsel %vm1414, %v2334, 0
      %2341 = vmatpush.bf16.xpose.msra.mxu0 0
      %2342 = vmatpush.bf16.xpose.msra.mxu0 0
      %2343 = vmatpush.bf16.xpose.msra.mxu0 0
      %2344 = vmatpush.bf16.xpose.msra.mxu0 0
      %2345 = vmatpush.bf16.xpose.msra.mxu0 0
      %2346 = vmatpush.bf16.xpose.msra.mxu0 0
      %2347 = vmatpush.bf16.xpose.msra.mxu0 0
      %2348 = vmatpush.bf16.xpose.msra.mxu0 %v2339
      %2349 = vmatmul.bf16.gmra.mxu0 %v2336
      %v2350 = vpop.f32.mrf.mxu0
      %v2351 = vadd.f32 0.0, %v2350
      %v2352 = vpop.f32.mrf.mxu0
      %2353 = vdwg.mxu0
      %v2354 = vsel %vm1414, %v2351, -inf
      %2355 = vmax.xlane.f32.xlu0 %v2354
      %v2356 = vpop.xlane.xlu0 %2355
      %v2357 = vsub.f32 %v2351, %v2356
      %v2358 = vmul.f32 %v2357, 1.442695
      %v2359 = vpow.pop %v2358
      %v2360 = vsel %vm1414, %v2359, 0.0
      %2361 = vadd.xlane.f32.xlu0 %v2360
      %v2362 = vpop.xlane.xlu0 %2361
      %v2363 = vrcp.pop %v2362
      %v2364 = vmul.f32 %v2359, %v2363
      %v2365 = vpack.c.bf16 %v2364, %v2364
      %2366 = vrot.lane.b32.xlu0 %v2276, 88
      %v2367 = vpop.permute.xlu0 %2366
      %v2369 = vsel %vm1414, %v2365, 0
      %v2372 = vsel %vm1451, %v2367, 0
      %2374 = vmatpush.bf16.msra.mxu0 0
      %2375 = vmatpush.bf16.msra.mxu0 0
      %2376 = vmatpush.bf16.msra.mxu0 0
      %2377 = vmatpush.bf16.msra.mxu0 0
      %2378 = vmatpush.bf16.msra.mxu0 0
      %2379 = vmatpush.bf16.msra.mxu0 0
      %2380 = vmatpush.bf16.msra.mxu0 0
      %2381 = vmatpush.bf16.msra.mxu0 %v2372
      %2382 = vmatmul.bf16.gmra.mxu0 %v2369
      %v2383 = vpop.f32.mrf.mxu0
      %v2384 = vadd.f32 0.0, %v2383
      %v2385 = vpop.f32.mrf.mxu0
      %2386 = vdwg.mxu0
      %2387 = vrot.lane.b32.xlu0 %v2275, 112
      %v2388 = vpop.permute.xlu0 %2387
      %2389 = vrot.lane.b32.xlu0 %v2276, 112
      %v2390 = vpop.permute.xlu0 %2389
      %v2392 = vsel %vm1414, %v2388, 0
      %v2395 = vsel %vm1414, %v2390, 0
      %2397 = vmatpush.bf16.xpose.msra.mxu0 0
      %2398 = vmatpush.bf16.xpose.msra.mxu0 0
      %2399 = vmatpush.bf16.xpose.msra.mxu0 0
      %2400 = vmatpush.bf16.xpose.msra.mxu0 0
      %2401 = vmatpush.bf16.xpose.msra.mxu0 0
      %2402 = vmatpush.bf16.xpose.msra.mxu0 0
      %2403 = vmatpush.bf16.xpose.msra.mxu0 0
      %2404 = vmatpush.bf16.xpose.msra.mxu0 %v2395
      %2405 = vmatmul.bf16.gmra.mxu0 %v2392
      %v2406 = vpop.f32.mrf.mxu0
      %v2407 = vadd.f32 0.0, %v2406
      %v2408 = vpop.f32.mrf.mxu0
      %2409 = vdwg.mxu0
      %v2410 = vsel %vm1414, %v2407, -inf
      %2411 = vmax.xlane.f32.xlu0 %v2410
      %v2412 = vpop.xlane.xlu0 %2411
      %v2413 = vsub.f32 %v2407, %v2412
      %v2414 = vmul.f32 %v2413, 1.442695
      %v2415 = vpow.pop %v2414
      %v2416 = vsel %vm1414, %v2415, 0.0
      %2417 = vadd.xlane.f32.xlu0 %v2416
      %v2418 = vpop.xlane.xlu0 %2417
      %v2419 = vrcp.pop %v2418
      %v2420 = vmul.f32 %v2415, %v2419
      %v2421 = vpack.c.bf16 %v2420, %v2420
      %2422 = vrot.lane.b32.xlu0 %v2276, 80
      %v2423 = vpop.permute.xlu0 %2422
      %v2425 = vsel %vm1414, %v2421, 0
      %v2428 = vsel %vm1451, %v2423, 0
      %2430 = vmatpush.bf16.msra.mxu0 0
      %2431 = vmatpush.bf16.msra.mxu0 0
      %2432 = vmatpush.bf16.msra.mxu0 0
      %2433 = vmatpush.bf16.msra.mxu0 0
      %2434 = vmatpush.bf16.msra.mxu0 0
      %2435 = vmatpush.bf16.msra.mxu0 0
      %2436 = vmatpush.bf16.msra.mxu0 0
      %2437 = vmatpush.bf16.msra.mxu0 %v2428
      %2438 = vmatmul.bf16.gmra.mxu0 %v2425
      %v2439 = vpop.f32.mrf.mxu0
      %v2440 = vadd.f32 0.0, %v2439
      %v2441 = vpop.f32.mrf.mxu0
      %2442 = vdwg.mxu0
      %2443 = vrot.lane.b32.xlu0 %v2275, 104
      %v2444 = vpop.permute.xlu0 %2443
      %2445 = vrot.lane.b32.xlu0 %v2276, 104
      %v2446 = vpop.permute.xlu0 %2445
      %v2448 = vsel %vm1414, %v2444, 0
      %v2451 = vsel %vm1414, %v2446, 0
      %2453 = vmatpush.bf16.xpose.msra.mxu0 0
      %2454 = vmatpush.bf16.xpose.msra.mxu0 0
      %2455 = vmatpush.bf16.xpose.msra.mxu0 0
      %2456 = vmatpush.bf16.xpose.msra.mxu0 0
      %2457 = vmatpush.bf16.xpose.msra.mxu0 0
      %2458 = vmatpush.bf16.xpose.msra.mxu0 0
      %2459 = vmatpush.bf16.xpose.msra.mxu0 0
      %2460 = vmatpush.bf16.xpose.msra.mxu0 %v2451
      %2461 = vmatmul.bf16.gmra.mxu0 %v2448
      %v2462 = vpop.f32.mrf.mxu0
      %v2463 = vadd.f32 0.0, %v2462
      %v2464 = vpop.f32.mrf.mxu0
      %2465 = vdwg.mxu0
      %v2466 = vsel %vm1414, %v2463, -inf
      %2467 = vmax.xlane.f32.xlu0 %v2466
      %v2468 = vpop.xlane.xlu0 %2467
      %v2469 = vsub.f32 %v2463, %v2468
      %v2470 = vmul.f32 %v2469, 1.442695
      %v2471 = vpow.pop %v2470
      %v2472 = vsel %vm1414, %v2471, 0.0
      %2473 = vadd.xlane.f32.xlu0 %v2472
      %v2474 = vpop.xlane.xlu0 %2473
      %v2475 = vrcp.pop %v2474
      %v2476 = vmul.f32 %v2471, %v2475
      %v2477 = vpack.c.bf16 %v2476, %v2476
      %2478 = vrot.lane.b32.xlu0 %v2276, 72
      %v2479 = vpop.permute.xlu0 %2478
      %v2481 = vsel %vm1414, %v2477, 0
      %v2484 = vsel %vm1451, %v2479, 0
      %2486 = vmatpush.bf16.msra.mxu0 0
      %2487 = vmatpush.bf16.msra.mxu0 0
      %2488 = vmatpush.bf16.msra.mxu0 0
      %2489 = vmatpush.bf16.msra.mxu0 0
      %2490 = vmatpush.bf16.msra.mxu0 0
      %2491 = vmatpush.bf16.msra.mxu0 0
      %2492 = vmatpush.bf16.msra.mxu0 0
      %2493 = vmatpush.bf16.msra.mxu0 %v2484
      %2494 = vmatmul.bf16.gmra.mxu0 %v2481
      %v2495 = vpop.f32.mrf.mxu0
      %v2496 = vadd.f32 0.0, %v2495
      %v2497 = vpop.f32.mrf.mxu0
      %2498 = vdwg.mxu0
      %2500 = vrot.lane.b32.xlu0 %v2384, 8
      %v2501 = vpop.permute.xlu0 %2500
      %2504 = vrot.lane.b32.xlu0 %v2440, 16
      %v2505 = vpop.permute.xlu0 %2504
      %2508 = vrot.lane.b32.xlu0 %v2496, 24
      %v2509 = vpop.permute.xlu0 %2508
      %v2511 = vsel %vm1414, %v2327, %v2501
      %v2512 = vsel %vm1649, %v2511, %v2505
      %v2513 = vsel %vm1651, %v2512, %v2509
      %v2514 = vld [vmem:[%s61] sm:$0xf]
      %v2515 = vld [vmem:[%s61 + $0x4] sm:$0xf]
      %v2516 = vld [vmem:[%s61 + $0x8] sm:$0xf]
      %v2517 = vld [vmem:[%s61 + $0xc] sm:$0xf]
      %v2518 = vld [vmem:[%s63] sm:$0x1]
      %v2519 = vpack.c.bf16 %v2513, %v2513
      %v2521 = vperm.slane %v2518, 0
      %v2527 = vunpack.c.l.b16 %v2514
      %v2528 = vunpack.c.l.b16 %v2515
      %v2529 = vunpack.c.l.b16 %v2516
      %v2530 = vunpack.c.l.b16 %v2517
      %v2531 = vpack.c.b16 %v2528, %v2527
      %v2532 = vpack.c.b16 %v2530, %v2529
      %v2536 = vsel %vm1393, %v2519, 0
      %2538 = vmatpush.bf16.msra.mxu0 0
      %2539 = vmatpush.bf16.msra.mxu0 0
      %2540 = vmatpush.bf16.msra.mxu0 0
      %2541 = vmatpush.bf16.msra.mxu0 0
      %2542 = vmatpush.bf16.msra.mxu0 0
      %2543 = vmatpush.bf16.msra.mxu0 0
      %2544 = vmatpush.bf16.msra.mxu0 %v2532
      %2545 = vmatpush.bf16.msra.mxu0 %v2531
      %2546 = vmatmul.bf16.gmra.mxu0 %v2536
      %v2547 = vpop.f32.mrf.mxu0
      %v2548 = vadd.f32 %v2521, %v2547
      %v2549 = vpop.f32.mrf.mxu0
      %2550 = vdwg.mxu0
      %v2551 = vadd.f32 %v2200, %v2548
      %v2552 = vld [vmem:[%s65] sm:$0x1]
      %v2553 = vld [vmem:[%s67] sm:$0x1]
      %v2554 = vsel %vm1393, %v2551, 0.0
      %2555 = vadd.xlane.f32.xlu0 %v2554
      %v2556 = vpop.xlane.xlu0 %2555
      %v2557 = vmul.f32 %v2556, %v1702
      %v2558 = vsub.f32 %v2551, %v2557
      %v2559 = vmul.f32 %v2558, %v2558
      %v2560 = vsel %vm1393, %v2559, 0.0
      %2561 = vadd.xlane.f32.xlu0 %v2560
      %v2562 = vpop.xlane.xlu0 %2561
      %v2563 = vmul.f32 %v2562, %v1702
      %v2564 = vadd.f32 %v2563, 1e-05
      %v2565 = vrsqrt.pop %v2564
      %v2566 = vmul.f32 %v2565, %v2564
      %v2567 = vmul.f32 %v2566, %v2565
      %v2568 = vmul.f32 0.5, %v2567
      %v2569 = vsub.f32 1.5, %v2568
      %v2570 = vmul.f32 %v2565, %v2569
      %vm2571 = vweird.f32 %v2564
      %vm2572 = vweird.f32 %v2565
      %vm2573 = vmor %vm2571, %vm2572
      %v2574 = vsel %vm2573, %v2565, %v2570
      %v2575 = vmul.f32 %v2558, %v2574
      %v2577 = vperm.slane %v2552, 0
      %v2579 = vmul.f32 %v2575, %v2577
      %v2581 = vperm.slane %v2553, 0
      %v2583 = vadd.f32 %v2579, %v2581
      %v2584 = vld [vmem:[%s69] sm:$0xf]
      %v2585 = vld [vmem:[%s69 + $0x4] sm:$0xf]
      %v2586 = vld [vmem:[%s69 + $0x8] sm:$0xf]
      %v2587 = vld [vmem:[%s69 + $0xc] sm:$0xf]
      %v2588 = vld [vmem:[%s71] sm:$0x1]
      %v2589 = vpack.c.bf16 %v2583, %v2583
      %v2591 = vperm.slane %v2588, 0
      %v2597 = vunpack.c.l.b16 %v2584
      %v2598 = vunpack.c.l.b16 %v2585
      %v2599 = vunpack.c.l.b16 %v2586
      %v2600 = vunpack.c.l.b16 %v2587
      %v2601 = vpack.c.b16 %v2598, %v2597
      %v2602 = vpack.c.b16 %v2600, %v2599
      %v2606 = vsel %vm1393, %v2589, 0
      %2608 = vmatpush.bf16.msra.mxu0 0
      %2609 = vmatpush.bf16.msra.mxu0 0
      %2610 = vmatpush.bf16.msra.mxu0 0
      %2611 = vmatpush.bf16.msra.mxu0 0
      %2612 = vmatpush.bf16.msra.mxu0 0
      %2613 = vmatpush.bf16.msra.mxu0 0
      %2614 = vmatpush.bf16.msra.mxu0 %v2602
      %2615 = vmatpush.bf16.msra.mxu0 %v2601
      %2616 = vmatmul.bf16.gmra.mxu0 %v2606
      %v2617 = vpop.f32.mrf.mxu0
      %v2618 = vadd.f32 %v2591, %v2617
      %v2619 = vpop.f32.mrf.mxu0
      %2620 = vdwg.mxu0
      %v2621 = vmax.f32 %v2618, 0.0
      %v2622 = vld [vmem:[%s73] sm:$0xf]
      %v2623 = vld [vmem:[%s73 + $0x4] sm:$0xf]
      %v2624 = vld [vmem:[%s73 + $0x8] sm:$0xf]
      %v2625 = vld [vmem:[%s73 + $0xc] sm:$0xf]
      %v2626 = vld [vmem:[%s73 + $0x10] sm:$0xf]
      %v2627 = vld [vmem:[%s73 + $0x14] sm:$0xf]
      %v2628 = vld [vmem:[%s73 + $0x18] sm:$0xf]
      %v2629 = vld [vmem:[%s73 + $0x1c] sm:$0xf]
      %v2630 = vld [vmem:[%s75] sm:$0x1]
      %v2631 = vpack.c.bf16 %v2621, %v2621
      %v2633 = vperm.slane %v2630, 0
      %v2643 = vunpack.c.l.b16 %v2622
      %v2644 = vunpack.c.l.b16 %v2623
      %v2645 = vunpack.c.l.b16 %v2624
      %v2646 = vunpack.c.l.b16 %v2625
      %v2647 = vunpack.c.l.b16 %v2626
      %v2648 = vunpack.c.l.b16 %v2627
      %v2649 = vunpack.c.l.b16 %v2628
      %v2650 = vunpack.c.l.b16 %v2629
      %v2651 = vpack.c.b16 %v2644, %v2643
      %v2652 = vpack.c.b16 %v2646, %v2645
      %v2653 = vpack.c.b16 %v2648, %v2647
      %v2654 = vpack.c.b16 %v2650, %v2649
      %v2660 = vsel %vm1805, %v2631, 0
      %2662 = vmatpush.bf16.msra.mxu0 0
      %2663 = vmatpush.bf16.msra.mxu0 0
      %2664 = vmatpush.bf16.msra.mxu0 0
      %2665 = vmatpush.bf16.msra.mxu0 0
      %2666 = vmatpush.bf16.msra.mxu0 %v2654
      %2667 = vmatpush.bf16.msra.mxu0 %v2653
      %2668 = vmatpush.bf16.msra.mxu0 %v2652
      %2669 = vmatpush.bf16.msra.mxu0 %v2651
      %2670 = vmatmul.bf16.gmra.mxu0 %v2660
      %v2671 = vpop.f32.mrf.mxu0
      %v2672 = vadd.f32 %v2633, %v2671
      %v2673 = vpop.f32.mrf.mxu0
      %2674 = vdwg.mxu0
      %v2675 = vadd.f32 %v2583, %v2672
      %v2676 = vld [vmem:[%s77] sm:$0x1]
      %v2677 = vld [vmem:[%s79] sm:$0x1]
      %v2678 = vsel %vm1393, %v2675, 0.0
      %2679 = vadd.xlane.f32.xlu0 %v2678
      %v2680 = vpop.xlane.xlu0 %2679
      %v2681 = vmul.f32 %v2680, %v1702
      %v2682 = vsub.f32 %v2675, %v2681
      %v2683 = vmul.f32 %v2682, %v2682
      %v2684 = vsel %vm1393, %v2683, 0.0
      %2685 = vadd.xlane.f32.xlu0 %v2684
      %v2686 = vpop.xlane.xlu0 %2685
      %v2687 = vmul.f32 %v2686, %v1702
      %v2688 = vadd.f32 %v2687, 1e-05
      %v2689 = vrsqrt.pop %v2688
      %v2690 = vmul.f32 %v2689, %v2688
      %v2691 = vmul.f32 %v2690, %v2689
      %v2692 = vmul.f32 0.5, %v2691
      %v2693 = vsub.f32 1.5, %v2692
      %v2694 = vmul.f32 %v2689, %v2693
      %vm2695 = vweird.f32 %v2688
      %vm2696 = vweird.f32 %v2689
      %vm2697 = vmor %vm2695, %vm2696
      %v2698 = vsel %vm2697, %v2689, %v2694
      %v2699 = vmul.f32 %v2682, %v2698
      %v2701 = vperm.slane %v2676, 0
      %v2703 = vmul.f32 %v2699, %v2701
      %v2705 = vperm.slane %v2677, 0
      %v2707 = vadd.f32 %v2703, %v2705
      %v2708 = vld [vmem:[%s81] sm:$0xf]
      %v2709 = vld [vmem:[%s81 + $0x4] sm:$0xf]
      %v2710 = vld [vmem:[%s81 + $0x8] sm:$0xf]
      %v2711 = vld [vmem:[%s81 + $0xc] sm:$0xf]
      %v2712 = vld [vmem:[%s83] sm:$0x1]
      %v2713 = vpack.c.bf16 %v2707, %v2707
      %v2715 = vperm.slane %v2712, 0
      %v2721 = vunpack.c.l.b16 %v2708
      %v2722 = vunpack.c.l.b16 %v2709
      %v2723 = vunpack.c.l.b16 %v2710
      %v2724 = vunpack.c.l.b16 %v2711
      %v2725 = vpack.c.b16 %v2722, %v2721
      %v2726 = vpack.c.b16 %v2724, %v2723
      %v2730 = vsel %vm1393, %v2713, 0
      %2732 = vmatpush.bf16.msra.mxu0 0
      %2733 = vmatpush.bf16.msra.mxu0 0
      %2734 = vmatpush.bf16.msra.mxu0 0
      %2735 = vmatpush.bf16.msra.mxu0 0
      %2736 = vmatpush.bf16.msra.mxu0 0
      %2737 = vmatpush.bf16.msra.mxu0 0
      %2738 = vmatpush.bf16.msra.mxu0 %v2726
      %2739 = vmatpush.bf16.msra.mxu0 %v2725
      %2740 = vmatmul.bf16.gmra.mxu0 %v2730
      %v2741 = vpop.f32.mrf.mxu0
      %v2742 = vadd.f32 %v2715, %v2741
      %v2743 = vpop.f32.mrf.mxu0
      %2744 = vdwg.mxu0
      %2745 = vst [vmem:[%s1312] sm:$0xff] %v2742
      %p2746 = scmp.lt.s32.totalorder %s96, 1
      %s2747 = scalar_select %p2746, %s96, 1
      %s2748 = smul.addr %s2747, 8
      %s2749 = scalar_lea.vmem %s85, %s2748
      // Predicated region
      $region189: #{motion_prediction_forward.1} parent=187 // pred_check
        %p2750 = pneg %p1016
      $region190: #{motion_prediction_forward.1} parent=187 // pred_check_branch
        %2752 = sbr.rel (%p2750) target = $region192
      $region191: #{motion_prediction_forward.1} parent=187 // pred_region
        _
      $region192: #{motion_prediction_forward.1} parent=187 // pred_fallthru
        _
    $region188: #{motion_prediction_forward.1} parent=5 // pred_fallthru
      _
    %p2753 = scmp.le.s32.totalorder 2, %s91
    // Predicated region
    $region193: #{motion_prediction_forward.1} parent=5 // pred_check
      %p2754 = pneg %p2753
    $region194: #{motion_prediction_forward.1} parent=5 // pred_check_branch
      %2756 = sbr.rel (%p2754) target = $region196
    $region195: #{motion_prediction_forward.1} parent=5 // pred_region
      %s2757 = ssub.s32 %s91, 2
      // Predicated region
      $region197: #{motion_prediction_forward.1} parent=195 // pred_check
        %p2758 = pneg %p1022
      $region198: #{motion_prediction_forward.1} parent=195 // pred_check_branch
        %2760 = sbr.rel (%p2758) target = $region200
      $region199: #{motion_prediction_forward.1} parent=195 // pred_region
        %p2761 = scmp.lt.s32.totalorder %s97, 1
        %s2762 = scalar_select %p2761, %s97, 1
        %s2763 = smul.addr %s2762, 8
        %s2764 = scalar_lea.vmem %s85, %s2763
      $region200: #{motion_prediction_forward.1} parent=195 // pred_fallthru
        _
    $region196: #{motion_prediction_forward.1} parent=5 // pred_fallthru
      _
  $region6: #{motion_prediction_forward.1} parent=0 // loop_footer
    %s95 = sadd.s32 1, %s91
  $region7: #{motion_prediction_forward.1} parent=0 // loop_footer_branch
    %90 = sbr.rel target = $region3
  $region8: #{motion_prediction_forward.1} parent=0 // loop_exit
    _

</llo_original>
